<compile_context>
chip_gen: v7x
topology: tpu7x:2x2x1
jax: 0.10.0
libtpu: 0.0.40
codegen_flags: <defaults>
</compile_context>

<pallas_src>
import functools

import jax
import jax.numpy as jnp
from jax.experimental import pallas as pl
from jax.experimental.pallas import tpu as pltpu


def _round_up(x, m):
    return ((x + m - 1) // m) * m


# ------------------------------ Pallas kernel --------------------------------

def _seg_loss_kernel(preds_ref, tgt_ref, w_ref, cls_ref, ce_ref,
                     *, ignore_index, hw, mask_tail):
    """One (batch, pixel-chunk, pixel-tile) program; accumulates over tiles.

    preds_ref : (1, C, TN) logits in their native dtype (upcast in-kernel)
    tgt_ref   : (1, 1, TN) int16 labels
    w_ref     : (C, 1)     f32 CE class weights (ones when weight=None)
    cls_ref   : (1, 3, C, 1) f32 accumulator: [intersection, softmax-sum, onehot-sum]
    ce_ref    : (1, 1, 2)    f32 accumulator: [sum(w * nll), sum(w)]
    """
    j = pl.program_id(2)

    @pl.when(j == 0)
    def _():
        cls_ref[...] = jnp.zeros_like(cls_ref)
        ce_ref[...] = jnp.zeros_like(ce_ref)

    x = preds_ref[0].astype(jnp.float32)               # (C, TN)
    t = tgt_ref[0].astype(jnp.int32)                   # (1, TN)
    w = w_ref[...]                                     # (C, 1)

    valid = t != ignore_index                          # (1, TN) bool
    if mask_tail:
        # Ragged last tile: lanes beyond HW carry garbage.  Fold a lane mask
        # into `valid` and sanitize the logits before exp so no NaN/Inf leaks.
        tile = pl.program_id(1) * pl.num_programs(2) + j
        lane = jax.lax.broadcasted_iota(jnp.int32, t.shape, 1)
        inb = (tile * t.shape[-1] + lane) < hw
        valid = jnp.logical_and(valid, inb)
        x = jnp.where(inb, x, 0.0)
    valid = valid.astype(jnp.float32)                  # (1, TN)

    tc = jnp.maximum(t, 0)                             # targets.clamp(0)
    cls = jax.lax.broadcasted_iota(jnp.int32, x.shape, 0)
    om = (cls == tc).astype(jnp.float32) * valid       # masked one-hot (C, TN)

    # Softmax / log-sum-exp along the class (sublane) axis.
    m = jnp.max(x, axis=0, keepdims=True)              # (1, TN)
    e = jnp.exp(x - m)                                  # (C, TN)
    s = jnp.sum(e, axis=0, keepdims=True)               # (1, TN)
    rv = valid * pl.reciprocal(s, approx=True)           # (1, TN)
    pm = e * rv                                          # masked softmax (C, TN)
    lse = m + jnp.log(s)                                  # (1, TN)

    # Cross entropy: w[target] * (lse - x[target]) over valid pixels.
    picked = jnp.sum(x * om, axis=0, keepdims=True)      # (1, TN)
    wpix = jnp.sum(om * w, axis=0, keepdims=True)        # (1, TN)
    ce_tile = jnp.sum((lse - picked) * wpix, axis=1, keepdims=True)   # (1, 1)
    cnt_tile = jnp.sum(wpix, axis=1, keepdims=True)                   # (1, 1)
    ce_ref[0] += jnp.concatenate([ce_tile, cnt_tile], axis=1)         # (1, 2)

    # Dice per-class partial sums (mask already folded into pm / om).
    cls_ref[0, 0] += jnp.sum(pm * om, axis=1, keepdims=True)          # (C, 1)
    cls_ref[0, 1] += jnp.sum(pm, axis=1, keepdims=True)
    cls_ref[0, 2] += jnp.sum(om, axis=1, keepdims=True)


# ------------------------------ loss wrapper ---------------------------------

def segmentation_loss(preds, targets, weight=None, *, ignore_index=255,
                      smooth=1.0, tile_pixels=8192):
    """CE(ignore_index=255) + DiceLoss(ignore_index=255, smooth=1.0).

    preds   : (B, C, H, W) float logits (f32 or bf16; streamed in native dtype)
    targets : (B, H, W)    int labels (255 = ignore)
    weight  : optional (C,) per-class CE weights (None -> unweighted)
    """
    B, C, H, W = preds.shape
    HW = H * W
    x = preds.reshape(B, C, HW)                         # native dtype, no copy
    t = targets.reshape(B, 1, HW).astype(jnp.int16)     # labels <= 255
    w = (jnp.ones((C, 1), jnp.float32) if weight is None
         else jnp.asarray(weight, jnp.float32).reshape(C, 1))

    # Lane-dense pixel tile (multiple of 128).  Sized so the double-buffered
    # input tile plus ~6 live f32 (C, TN) temporaries stay well under the
    # default scoped-VMEM limit on every generation (incl. v7x's 64 MiB VMEM).
    itemsize = jnp.dtype(preds.dtype).itemsize
    bytes_per_px = C * (2 * itemsize + 6 * 4) + 64
    vmem_budget = 24 * 1024 * 1024
    tn_cap = max(128, (vmem_budget // bytes_per_px) // 128 * 128)
    TN = int(min(tile_pixels, tn_cap, _round_up(HW, 128)))

    num_tiles = int(pl.cdiv(HW, TN))
    # Split the pixel tiles into P parallel chunks when B == 1 so both v7x
    # TensorCores get work (no-op on single-TC v5e / v6e).
    P = 2 if (B == 1 and num_tiles % 2 == 0) else 1
    J = num_tiles // P
    mask_tail = (HW % TN) != 0

    cls_out = jax.ShapeDtypeStruct((B * P, 3, C, 1), jnp.float32)
    ce_out = jax.ShapeDtypeStruct((B * P, 1, 2), jnp.float32)

    cls_sums, ce_sums = pl.pallas_call(
        functools.partial(_seg_loss_kernel, ignore_index=ignore_index,
                          hw=HW, mask_tail=mask_tail),
        out_shape=(cls_out, ce_out),
        grid=(B, P, J),
        in_specs=[
            pl.BlockSpec((1, C, TN), lambda b, p, j: (b, 0, p * J + j)),
            pl.BlockSpec((1, 1, TN), lambda b, p, j: (b, 0, p * J + j)),
            pl.BlockSpec((C, 1), lambda b, p, j: (0, 0)),
        ],
        out_specs=(
            pl.BlockSpec((1, 3, C, 1), lambda b, p, j: (b * P + p, 0, 0, 0)),
            pl.BlockSpec((1, 1, 2), lambda b, p, j: (b * P + p, 0, 0)),
        ),
        compiler_params=pltpu.CompilerParams(
            dimension_semantics=("parallel", "parallel", "arbitrary")),
    )(x, t, w)

    # Tiny final reduction (3*C + 2 floats per (batch, chunk)) in plain JAX.
    cls_sums = jnp.sum(cls_sums, axis=0)                # (3, C, 1)
    inter = cls_sums[0, :, 0]
    union = cls_sums[1, :, 0] + cls_sums[2, :, 0]
    dice = (2.0 * inter + smooth) / (union + smooth)
    dice_loss = 1.0 - jnp.mean(dice)

    ce_sums = jnp.sum(ce_sums, axis=(0, 1))             # (2,)
    # Note: if every pixel is ignore_index this divides by zero (NaN), which
    # matches nn.CrossEntropyLoss(ignore_index=...) behavior.
    ce = ce_sums[0] / ce_sums[1]
    return ce + dice_loss


# --------------------------- pure-JAX reference ------------------------------

def _reference_loss(preds, targets, weight=None, ignore_index=255, smooth=1.0):
    """Plain-jnp replica of the PyTorch SegmentationLoss forward."""
    B, C, H, W = preds.shape
    x = preds.astype(jnp.float32)
    t = targets.astype(jnp.int32)
    valid = (t != ignore_index).astype(jnp.float32)                # (B,H,W)

    # CrossEntropyLoss(ignore_index, reduction='mean')
    m = jnp.max(x, axis=1, keepdims=True)
    lse = (m + jnp.log(jnp.sum(jnp.exp(x - m), axis=1, keepdims=True)))[:, 0]
    tc = jnp.clip(t, 0, C - 1)
    picked = jnp.take_along_axis(x, tc[:, None], axis=1)[:, 0]
    wvec = (jnp.ones((C,), jnp.float32) if weight is None
            else jnp.asarray(weight, jnp.float32))
    wpix = wvec[tc] * valid
    ce = jnp.sum((lse - picked) * wpix) / jnp.sum(wpix)

    # DiceLoss
    p = jax.nn.softmax(x, axis=1) * valid[:, None]
    onehot = jax.nn.one_hot(jnp.maximum(t, 0), C, axis=1,
                            dtype=jnp.float32) * valid[:, None]
    inter = jnp.sum(p * onehot, axis=(0, 2, 3))
    union = jnp.sum(p, axis=(0, 2, 3)) + jnp.sum(onehot, axis=(0, 2, 3))
    dice = (2.0 * inter + smooth) / (union + smooth)
    return ce + (1.0 - jnp.mean(dice))


# ---------------------------------- main --------------------------------------

if __name__ == "__main__":
    B, C, H, W = 2, 21, 64, 64
    key = jax.random.PRNGKey(0)
    kp, kl, km = jax.random.split(key, 3)
    preds = jax.random.normal(kp, (B, C, H, W), jnp.float32)
    labels = jax.random.randint(kl, (B, H, W), 0, C, dtype=jnp.int32)
    ignore = jax.random.uniform(km, (B, H, W)) < 0.1          # some 255 pixels
    targets = jnp.where(ignore, 255, labels).astype(jnp.int32)

    loss_fn = jax.jit(segmentation_loss)
    loss = jax.block_until_ready(loss_fn(preds, targets))

    ref = jax.block_until_ready(_reference_loss(preds, targets))
    assert loss.shape == (), loss.shape
    assert bool(jnp.isfinite(loss)), loss
    assert abs(float(loss) - float(ref)) < 1e-3, (float(loss), float(ref))
    print("KERNEL_OK")
</pallas_src>

<mosaic_0001>
module attributes {stable_mosaic.version = 11 : i64} {
  func.func @_seg_loss_kernel(%arg0: i32, %arg1: i32, %arg2: i32, %arg3: memref<1x21x4096xf32, #tpu.memory_space<vmem>>, %arg4: memref<1x1x4096xi16, #tpu.memory_space<vmem>>, %arg5: memref<21x1xf32, #tpu.memory_space<vmem>>, %arg6: memref<1x3x21x1xf32, #tpu.memory_space<vmem>>, %arg7: memref<1x1x2xf32, #tpu.memory_space<vmem>>) attributes {dimension_semantics = [#tpu.dimension_semantics<parallel>, #tpu.dimension_semantics<parallel>, #tpu.dimension_semantics<arbitrary>], iteration_bounds = array<i64: 2, 1, 1>, scalar_prefetch = 0 : i64, scratch_operands = 0 : i64, tpu.core_type = #tpu.core_type<tc>, window_params = [{transform_indices = @transform_0, window_bounds = array<i64: 1, 21, 4096>}, {transform_indices = @transform_1, window_bounds = array<i64: 1, 1, 4096>}, {pipeline_mode = #tpu.pipeline_mode<synchronous>, transform_indices = @transform_2, window_bounds = array<i64: 21, 1>}, {transform_indices = @transform_3, window_bounds = array<i64: 1, 3, 21, 1>}, {transform_indices = @transform_4, window_bounds = array<i64: 1, 1, 2>}]} {
    %c0_i32 = arith.constant 0 : i32
    %0 = arith.cmpi eq, %arg2, %c0_i32 : i32
    %1 = arith.extui %0 : i1 to i32
    %c0_i32_0 = arith.constant 0 : i32
    %2 = arith.cmpi ne, %1, %c0_i32_0 : i32
    scf.if %2 {
      %cst_45 = arith.constant 0.000000e+00 : f32
      %80 = vector.broadcast %cst_45 : f32 to vector<1x3x21x1xf32>
      %c0_46 = arith.constant 0 : index
      %c0_47 = arith.constant 0 : index
      %c0_48 = arith.constant 0 : index
      %c0_49 = arith.constant 0 : index
      %81 = vector.load %arg6[%c0_46, %c0_47, %c0_48, %c0_49] : memref<1x3x21x1xf32, #tpu.memory_space<vmem>>, vector<1x3x21x1xf32>
      tpu.vector_store %arg6[%c0_46, %c0_47, %c0_48, %c0_49], %80 {strides = array<i32>} : memref<1x3x21x1xf32, #tpu.memory_space<vmem>>, vector<1x3x21x1xf32>,
      %cst_50 = arith.constant 0.000000e+00 : f32
      %82 = vector.broadcast %cst_50 : f32 to vector<1x1x2xf32>
      %c0_51 = arith.constant 0 : index
      %c0_52 = arith.constant 0 : index
      %c0_53 = arith.constant 0 : index
      %83 = vector.load %arg7[%c0_51, %c0_52, %c0_53] : memref<1x1x2xf32, #tpu.memory_space<vmem>>, vector<1x1x2xf32>
      tpu.vector_store %arg7[%c0_51, %c0_52, %c0_53], %82 {strides = array<i32>} : memref<1x1x2xf32, #tpu.memory_space<vmem>>, vector<1x1x2xf32>,
    } else {
    }
    %c0 = arith.constant 0 : index
    %c0_1 = arith.constant 0 : index
    %c0_2 = arith.constant 0 : index
    %3 = vector.load %arg3[%c0, %c0_1, %c0_2] : memref<1x21x4096xf32, #tpu.memory_space<vmem>>, vector<1x21x4096xf32>
    %4 = vector.shape_cast %3 : vector<1x21x4096xf32> to vector<21x4096xf32>
    %c0_3 = arith.constant 0 : index
    %c0_4 = arith.constant 0 : index
    %c0_5 = arith.constant 0 : index
    %5 = vector.load %arg4[%c0_3, %c0_4, %c0_5] : memref<1x1x4096xi16, #tpu.memory_space<vmem>>, vector<1x1x4096xi16>
    %6 = vector.shape_cast %5 : vector<1x1x4096xi16> to vector<1x4096xi16>
    %7 = arith.extsi %6 : vector<1x4096xi16> to vector<1x4096xi32>
    %c0_6 = arith.constant 0 : index
    %c0_7 = arith.constant 0 : index
    %8 = vector.load %arg5[%c0_6, %c0_7] : memref<21x1xf32, #tpu.memory_space<vmem>>, vector<21x1xf32>
    %c255_i32 = arith.constant 255 : i32
    %9 = vector.broadcast %c255_i32 : i32 to vector<1x4096xi32>
    %10 = arith.cmpi ne, %7, %9 : vector<1x4096xi32>
    %11 = arith.extui %10 : vector<1x4096xi1> to vector<1x4096xi32>
    %12 = arith.sitofp %11 : vector<1x4096xi32> to vector<1x4096xf32>
    %c0_i32_8 = arith.constant 0 : i32
    %13 = vector.broadcast %c0_i32_8 : i32 to vector<1x4096xi32>
    %14 = arith.maxsi %7, %13 : vector<1x4096xi32>
    %15 = tpu.iota {dimensions = array<i32: 0>} : vector<21x4096xi32>
    %16 = vector.broadcast %14 : vector<1x4096xi32> to vector<21x4096xi32>
    %17 = arith.cmpi eq, %15, %16 : vector<21x4096xi32>
    %18 = arith.extui %17 : vector<21x4096xi1> to vector<21x4096xi32>
    %19 = arith.sitofp %18 : vector<21x4096xi32> to vector<21x4096xf32>
    %20 = vector.broadcast %12 : vector<1x4096xf32> to vector<21x4096xf32>
    %21 = arith.mulf %19, %20 : vector<21x4096xf32>
    %cst = arith.constant dense<0xFF800000> : vector<4096xf32>
    %22 = vector.multi_reduction <maximumf>, %4, %cst [0] : vector<21x4096xf32> to vector<4096xf32>
    %23 = vector.shape_cast %22 : vector<4096xf32> to vector<1x4096xf32>
    %24 = vector.broadcast %23 : vector<1x4096xf32> to vector<21x4096xf32>
    %25 = arith.subf %4, %24 : vector<21x4096xf32>
    %26 = math.exp %25 : vector<21x4096xf32>
    %cst_9 = arith.constant dense<0.000000e+00> : vector<4096xf32>
    %27 = vector.multi_reduction <add>, %26, %cst_9 [0] : vector<21x4096xf32> to vector<4096xf32>
    %28 = vector.shape_cast %27 : vector<4096xf32> to vector<1x4096xf32>
    %29 = tpu.reciprocal %28 {approx = true} : vector<1x4096xf32> -> vector<1x4096xf32>
    %30 = arith.mulf %12, %29 : vector<1x4096xf32>
    %31 = vector.broadcast %30 : vector<1x4096xf32> to vector<21x4096xf32>
    %32 = arith.mulf %26, %31 : vector<21x4096xf32>
    %33 = math.log %28 : vector<1x4096xf32>
    %34 = arith.addf %23, %33 : vector<1x4096xf32>
    %35 = arith.mulf %4, %21 : vector<21x4096xf32>
    %cst_10 = arith.constant dense<0.000000e+00> : vector<4096xf32>
    %36 = vector.multi_reduction <add>, %35, %cst_10 [0] : vector<21x4096xf32> to vector<4096xf32>
    %37 = vector.shape_cast %36 : vector<4096xf32> to vector<1x4096xf32>
    %38 = vector.broadcast %8 : vector<21x1xf32> to vector<21x4096xf32>
    %39 = arith.mulf %21, %38 : vector<21x4096xf32>
    %cst_11 = arith.constant dense<0.000000e+00> : vector<4096xf32>
    %40 = vector.multi_reduction <add>, %39, %cst_11 [0] : vector<21x4096xf32> to vector<4096xf32>
    %41 = vector.shape_cast %40 : vector<4096xf32> to vector<1x4096xf32>
    %42 = arith.subf %34, %37 : vector<1x4096xf32>
    %43 = arith.mulf %42, %41 : vector<1x4096xf32>
    %cst_12 = arith.constant dense<0.000000e+00> : vector<1xf32>
    %44 = vector.multi_reduction <add>, %43, %cst_12 [1] : vector<1x4096xf32> to vector<1xf32>
    %45 = vector.shape_cast %44 : vector<1xf32> to vector<1x1xf32>
    %cst_13 = arith.constant dense<0.000000e+00> : vector<1xf32>
    %46 = vector.multi_reduction <add>, %41, %cst_13 [1] : vector<1x4096xf32> to vector<1xf32>
    %47 = vector.shape_cast %46 : vector<1xf32> to vector<1x1xf32>
    %c0_14 = arith.constant 0 : index
    %c0_15 = arith.constant 0 : index
    %c0_16 = arith.constant 0 : index
    %48 = vector.load %arg7[%c0_14, %c0_15, %c0_16] : memref<1x1x2xf32, #tpu.memory_space<vmem>>, vector<1x1x2xf32>
    %49 = vector.shape_cast %48 : vector<1x1x2xf32> to vector<1x2xf32>
    %50 = tpu.concatenate %45, %47 in 1 : vector<1x1xf32>, vector<1x1xf32> -> vector<1x2xf32>
    %51 = arith.addf %49, %50 : vector<1x2xf32>
    %c0_17 = arith.constant 0 : index
    %c0_18 = arith.constant 0 : index
    %c0_19 = arith.constant 0 : index
    %52 = vector.load %arg7[%c0_17, %c0_18, %c0_19] : memref<1x1x2xf32, #tpu.memory_space<vmem>>, vector<1x1x2xf32>
    %53 = vector.shape_cast %52 : vector<1x1x2xf32> to vector<1x2xf32>
    %54 = vector.shape_cast %51 : vector<1x2xf32> to vector<1x1x2xf32>
    tpu.vector_store %arg7[%c0_17, %c0_18, %c0_19], %54 {strides = array<i32>} : memref<1x1x2xf32, #tpu.memory_space<vmem>>, vector<1x1x2xf32>,
    %c0_20 = arith.constant 0 : index
    %c0_21 = arith.constant 0 : index
    %c0_22 = arith.constant 0 : index
    %c0_23 = arith.constant 0 : index
    %55 = vector.load %arg6[%c0_20, %c0_21, %c0_22, %c0_23] : memref<1x3x21x1xf32, #tpu.memory_space<vmem>>, vector<1x1x21x1xf32>
    %56 = vector.shape_cast %55 : vector<1x1x21x1xf32> to vector<21x1xf32>
    %57 = arith.mulf %32, %21 : vector<21x4096xf32>
    %cst_24 = arith.constant dense<0.000000e+00> : vector<21xf32>
    %58 = vector.multi_reduction <add>, %57, %cst_24 [1] : vector<21x4096xf32> to vector<21xf32>
    %59 = vector.shape_cast %58 : vector<21xf32> to vector<21x1xf32>
    %60 = arith.addf %56, %59 : vector<21x1xf32>
    %c0_25 = arith.constant 0 : index
    %c0_26 = arith.constant 0 : index
    %c0_27 = arith.constant 0 : index
    %c0_28 = arith.constant 0 : index
    %61 = vector.load %arg6[%c0_25, %c0_26, %c0_27, %c0_28] : memref<1x3x21x1xf32, #tpu.memory_space<vmem>>, vector<1x1x21x1xf32>
    %62 = vector.shape_cast %61 : vector<1x1x21x1xf32> to vector<21x1xf32>
    %63 = vector.shape_cast %60 : vector<21x1xf32> to vector<1x1x21x1xf32>
    tpu.vector_store %arg6[%c0_25, %c0_26, %c0_27, %c0_28], %63 {strides = array<i32>} : memref<1x3x21x1xf32, #tpu.memory_space<vmem>>, vector<1x1x21x1xf32>,
    %c0_29 = arith.constant 0 : index
    %c1 = arith.constant 1 : index
    %c0_30 = arith.constant 0 : index
    %c0_31 = arith.constant 0 : index
    %64 = vector.load %arg6[%c0_29, %c1, %c0_30, %c0_31] : memref<1x3x21x1xf32, #tpu.memory_space<vmem>>, vector<1x1x21x1xf32>
    %65 = vector.shape_cast %64 : vector<1x1x21x1xf32> to vector<21x1xf32>
    %cst_32 = arith.constant dense<0.000000e+00> : vector<21xf32>
    %66 = vector.multi_reduction <add>, %32, %cst_32 [1] : vector<21x4096xf32> to vector<21xf32>
    %67 = vector.shape_cast %66 : vector<21xf32> to vector<21x1xf32>
    %68 = arith.addf %65, %67 : vector<21x1xf32>
    %c0_33 = arith.constant 0 : index
    %c1_34 = arith.constant 1 : index
    %c0_35 = arith.constant 0 : index
    %c0_36 = arith.constant 0 : index
    %69 = vector.load %arg6[%c0_33, %c1_34, %c0_35, %c0_36] : memref<1x3x21x1xf32, #tpu.memory_space<vmem>>, vector<1x1x21x1xf32>
    %70 = vector.shape_cast %69 : vector<1x1x21x1xf32> to vector<21x1xf32>
    %71 = vector.shape_cast %68 : vector<21x1xf32> to vector<1x1x21x1xf32>
    tpu.vector_store %arg6[%c0_33, %c1_34, %c0_35, %c0_36], %71 {strides = array<i32>} : memref<1x3x21x1xf32, #tpu.memory_space<vmem>>, vector<1x1x21x1xf32>,
    %c0_37 = arith.constant 0 : index
    %c2 = arith.constant 2 : index
    %c0_38 = arith.constant 0 : index
    %c0_39 = arith.constant 0 : index
    %72 = vector.load %arg6[%c0_37, %c2, %c0_38, %c0_39] : memref<1x3x21x1xf32, #tpu.memory_space<vmem>>, vector<1x1x21x1xf32>
    %73 = vector.shape_cast %72 : vector<1x1x21x1xf32> to vector<21x1xf32>
    %cst_40 = arith.constant dense<0.000000e+00> : vector<21xf32>
    %74 = vector.multi_reduction <add>, %21, %cst_40 [1] : vector<21x4096xf32> to vector<21xf32>
    %75 = vector.shape_cast %74 : vector<21xf32> to vector<21x1xf32>
    %76 = arith.addf %73, %75 : vector<21x1xf32>
    %c0_41 = arith.constant 0 : index
    %c2_42 = arith.constant 2 : index
    %c0_43 = arith.constant 0 : index
    %c0_44 = arith.constant 0 : index
    %77 = vector.load %arg6[%c0_41, %c2_42, %c0_43, %c0_44] : memref<1x3x21x1xf32, #tpu.memory_space<vmem>>, vector<1x1x21x1xf32>
    %78 = vector.shape_cast %77 : vector<1x1x21x1xf32> to vector<21x1xf32>
    %79 = vector.shape_cast %76 : vector<21x1xf32> to vector<1x1x21x1xf32>
    tpu.vector_store %arg6[%c0_41, %c2_42, %c0_43, %c0_44], %79 {strides = array<i32>} : memref<1x3x21x1xf32, #tpu.memory_space<vmem>>, vector<1x1x21x1xf32>,
    return
  }
  func.func @transform_0(%arg0: i32, %arg1: i32, %arg2: i32) -> (i32, i32, i32) {
    %c1_i32 = arith.constant 1 : i32
    %0 = arith.muli %arg1, %c1_i32 : i32
    %1 = arith.addi %0, %arg2 : i32
    %c0_i32 = arith.constant 0 : i32
    %c0_i32_0 = arith.constant 0 : i32
    return %arg0, %c0_i32, %1 : i32, i32, i32
  }
  func.func @transform_1(%arg0: i32, %arg1: i32, %arg2: i32) -> (i32, i32, i32) {
    %c1_i32 = arith.constant 1 : i32
    %0 = arith.muli %arg1, %c1_i32 : i32
    %1 = arith.addi %0, %arg2 : i32
    %c0_i32 = arith.constant 0 : i32
    %c0_i32_0 = arith.constant 0 : i32
    return %arg0, %c0_i32, %1 : i32, i32, i32
  }
  func.func @transform_2(%arg0: i32, %arg1: i32, %arg2: i32) -> (i32, i32) {
    %c0_i32 = arith.constant 0 : i32
    %c0_i32_0 = arith.constant 0 : i32
    %c0_i32_1 = arith.constant 0 : i32
    return %c0_i32, %c0_i32_0 : i32, i32
  }
  func.func @transform_3(%arg0: i32, %arg1: i32, %arg2: i32) -> (i32, i32, i32, i32) {
    %c1_i32 = arith.constant 1 : i32
    %0 = arith.muli %arg0, %c1_i32 : i32
    %1 = arith.addi %0, %arg1 : i32
    %c0_i32 = arith.constant 0 : i32
    %c0_i32_0 = arith.constant 0 : i32
    %c0_i32_1 = arith.constant 0 : i32
    %c0_i32_2 = arith.constant 0 : i32
    return %1, %c0_i32, %c0_i32_0, %c0_i32_1 : i32, i32, i32, i32
  }
  func.func @transform_4(%arg0: i32, %arg1: i32, %arg2: i32) -> (i32, i32, i32) {
    %c1_i32 = arith.constant 1 : i32
    %0 = arith.muli %arg0, %c1_i32 : i32
    %1 = arith.addi %0, %arg1 : i32
    %c0_i32 = arith.constant 0 : i32
    %c0_i32_0 = arith.constant 0 : i32
    %c0_i32_1 = arith.constant 0 : i32
    return %1, %c0_i32, %c0_i32_0 : i32, i32, i32
  }
}

</mosaic_0001>

<llo_original>
// kernel: segmentation_loss.1
$region0: #{segmentation_loss.1}
  #allocation0 [shape = 'u32[]', space=smem, size = 0x4, offset = 0x4, fixed_abs, tag = 'smem constant byte address 0x4 - core index']
  #allocation1 [shape = 'u32[144,128]{1,0:T(1,128)}', space=vmem, size = 0x12000, scoped, tag = 'internal scratch']
  %s0 = inlined_call_operand.vmem [shape: f32[2,21,4096], index: 0, kind: input, shape index: {}]
  %s1 = inlined_call_operand.vmem [shape: s16[2,1,4096], index: 1, kind: input, shape index: {}]
  %s2 = inlined_call_operand.vmem [shape: f32[21,1], index: 2, kind: input, shape index: {}]
  %s3 = inlined_call_operand.vmem [shape: f32[2,3,21,1], index: 3, kind: output, shape index: {0}]
  %s4 = inlined_call_operand.vmem [shape: f32[2,1,2], index: 4, kind: output, shape index: {1}]
  %5 = xla_tuple %s3, %s4
  %s6 = sld [smem:[#allocation0]]
  $region57: #{segmentation_loss.1} parent=0
    _
  %s8 = ssub.s32 1, %s6
  %s9 = scalar_select 0, %s8, %s6
  loop: start=0, step=1, limit=4
  $region2: #{segmentation_loss.1} parent=0 // loop_pre_header
    _
  $region3: #{segmentation_loss.1} parent=0 // loop_header
    %s11 = sphi 0, %s15
    %p12 = scmp.ge.s32.totalorder %s11, 4
    %s18 = sphi 0, %s37
    %s19 = sphi 0, %s33
    %s20 = sphi 0, %s29
    %s21 = sphi 0, %s18
    %s22 = sphi 0, %s19
    %s23 = sphi 0, %s20
    %s24 = sphi 0, %s21
    %s25 = sphi 0, %s22
    %s26 = sphi 0, %s23
    %s44 = sphi 0, %s46
    %s47 = sphi 0, %s44
    %s48 = sphi 0, %s47
    %s64 = sphi 0, %s48
    %s74 = sphi 0, %s76
    %s77 = sphi 0, %s74
    %s78 = sphi 0, %s77
    %s94 = sphi 0, %s78
    %s98 = sphi 0, %s98
    %s100 = sphi 0, %s98
    %s101 = sphi 0, %s100
    %s115 = sphi 0, %s101
    %s123 = sphi 0, %s125
    %s126 = sphi 0, %s123
    %s127 = sphi 0, %s126
    %s143 = sphi 0, %s127
    %s151 = sphi 0, %s153
    %s154 = sphi 0, %s151
    %s155 = sphi 0, %s154
    %s171 = sphi 0, %s155
  $region4: #{segmentation_loss.1} parent=0 // loop_header_branch
    %14 = sbr.rel (%p12) target = $region8
  $region5: #{segmentation_loss.1} parent=0 // loop_body
    %s16 = ssub.s32 %s11, 1
    %s17 = ssub.s32 %s11, 2
    %s27 = sadd.s32 1, %s20
    %p28 = scmp.ge.s32.totalorder %s27, 1
    %s29 = scalar_select %p28, 0, %s27
    %s30 = sadd.s32 1, %s19
    %s31 = scalar_select %p28, %s30, %s19
    %p32 = scmp.ge.s32.totalorder %s31, 1
    %s33 = scalar_select %p32, 0, %s31
    %s34 = sadd.s32 1, %s18
    %s35 = scalar_select %p32, %s34, %s18
    %p36 = scmp.ge.s32.totalorder %s35, 2
    %s37 = scalar_select %p36, 0, %s35
    %s38 = sadd.s32 %s19, %s20
    %s39 = sadd.s32 %s33, %s29
    %s40 = ssub.s32 %s18, %s37
    %s41 = ssub.s32 %s38, %s39
    %s42 = sor.u32 %s40, %s41
    %p43 = scmp.eq.s32.totalorder %s42, 0
    %s45 = sadd.s32 %s44, 1
    %s46 = scalar_select %p43, %s44, %s45
    %p49 = pneg %p43
    %p50 = scmp.eq.s32.totalorder %s11, 1
    %p51 = por %p49, %p50
    %p52 = scmp.ne.s32.totalorder %s44, %s47
    %p53 = scmp.eq.s32.totalorder %s11, 0
    %p54 = por %p52, %p53
    %p55 = scmp.ne.s32.totalorder %s44, %s47
    %p56 = scmp.eq.s32.totalorder %s16, 1
    %p57 = por %p55, %p56
    %p58 = scmp.ne.s32.totalorder %s47, %s48
    %p59 = scmp.eq.s32.totalorder %s16, 0
    %p60 = por %p58, %p59
    %p61 = scmp.ne.s32.totalorder %s47, %s48
    %p62 = scmp.eq.s32.totalorder %s17, 1
    %p63 = por %p61, %p62
    %p65 = scmp.ne.s32.totalorder %s48, %s64
    %p66 = scmp.eq.s32.totalorder %s17, 0
    %p67 = por %p65, %p66
    %s68 = sadd.s32 %s19, %s20
    %s69 = sadd.s32 %s33, %s29
    %s70 = ssub.s32 %s18, %s37
    %s71 = ssub.s32 %s68, %s69
    %s72 = sor.u32 %s70, %s71
    %p73 = scmp.eq.s32.totalorder %s72, 0
    %s75 = sadd.s32 %s74, 1
    %s76 = scalar_select %p73, %s74, %s75
    %p79 = pneg %p73
    %p80 = scmp.eq.s32.totalorder %s11, 1
    %p81 = por %p79, %p80
    %p82 = scmp.ne.s32.totalorder %s74, %s77
    %p83 = scmp.eq.s32.totalorder %s11, 0
    %p84 = por %p82, %p83
    %p85 = scmp.ne.s32.totalorder %s74, %s77
    %p86 = scmp.eq.s32.totalorder %s16, 1
    %p87 = por %p85, %p86
    %p88 = scmp.ne.s32.totalorder %s77, %s78
    %p89 = scmp.eq.s32.totalorder %s16, 0
    %p90 = por %p88, %p89
    %p91 = scmp.ne.s32.totalorder %s77, %s78
    %p92 = scmp.eq.s32.totalorder %s17, 1
    %p93 = por %p91, %p92
    %p95 = scmp.ne.s32.totalorder %s78, %s94
    %p96 = scmp.eq.s32.totalorder %s17, 0
    %p97 = por %p95, %p96
    %s99 = sadd.s32 %s98, 1
    %p102 = scmp.eq.s32.totalorder %s11, 1
    %p103 = scmp.ne.s32.totalorder %s98, %s100
    %p104 = scmp.eq.s32.totalorder %s11, 0
    %p105 = por %p103, %p104
    %p106 = scmp.ne.s32.totalorder %s98, %s100
    %p107 = scmp.eq.s32.totalorder %s16, 1
    %p108 = por %p106, %p107
    %p109 = scmp.ne.s32.totalorder %s100, %s101
    %p110 = scmp.eq.s32.totalorder %s16, 0
    %p111 = por %p109, %p110
    %p112 = scmp.ne.s32.totalorder %s100, %s101
    %p113 = scmp.eq.s32.totalorder %s17, 1
    %p114 = por %p112, %p113
    %p116 = scmp.ne.s32.totalorder %s101, %s115
    %p117 = scmp.eq.s32.totalorder %s17, 0
    %p118 = por %p116, %p117
    %s119 = sadd.s32 %s18, %s19
    %s120 = sadd.s32 %s37, %s33
    %s121 = ssub.s32 %s119, %s120
    %p122 = scmp.eq.s32.totalorder %s121, 0
    %s124 = sadd.s32 %s123, 1
    %s125 = scalar_select %p122, %s123, %s124
    %p128 = pneg %p122
    %p129 = scmp.eq.s32.totalorder %s11, 1
    %p130 = por %p128, %p129
    %p131 = scmp.ne.s32.totalorder %s123, %s126
    %p132 = scmp.eq.s32.totalorder %s11, 0
    %p133 = por %p131, %p132
    %p134 = scmp.ne.s32.totalorder %s123, %s126
    %p135 = scmp.eq.s32.totalorder %s16, 1
    %p136 = por %p134, %p135
    %p137 = scmp.ne.s32.totalorder %s126, %s127
    %p138 = scmp.eq.s32.totalorder %s16, 0
    %p139 = por %p137, %p138
    %p140 = scmp.ne.s32.totalorder %s126, %s127
    %p141 = scmp.eq.s32.totalorder %s17, 1
    %p142 = por %p140, %p141
    %p144 = scmp.ne.s32.totalorder %s127, %s143
    %p145 = scmp.eq.s32.totalorder %s17, 0
    %p146 = por %p144, %p145
    %s147 = sadd.s32 %s18, %s19
    %s148 = sadd.s32 %s37, %s33
    %s149 = ssub.s32 %s147, %s148
    %p150 = scmp.eq.s32.totalorder %s149, 0
    %s152 = sadd.s32 %s151, 1
    %s153 = scalar_select %p150, %s151, %s152
    %p156 = pneg %p150
    %p157 = scmp.eq.s32.totalorder %s11, 1
    %p158 = por %p156, %p157
    %p159 = scmp.ne.s32.totalorder %s151, %s154
    %p160 = scmp.eq.s32.totalorder %s11, 0
    %p161 = por %p159, %p160
    %p162 = scmp.ne.s32.totalorder %s151, %s154
    %p163 = scmp.eq.s32.totalorder %s16, 1
    %p164 = por %p162, %p163
    %p165 = scmp.ne.s32.totalorder %s154, %s155
    %p166 = scmp.eq.s32.totalorder %s16, 0
    %p167 = por %p165, %p166
    %p168 = scmp.ne.s32.totalorder %s154, %s155
    %p169 = scmp.eq.s32.totalorder %s17, 1
    %p170 = por %p168, %p169
    %p172 = scmp.ne.s32.totalorder %s155, %s171
    %p173 = scmp.eq.s32.totalorder %s17, 0
    %p174 = por %p172, %p173
    %p175 = scmp.le.s32.totalorder 1, %s11
    %p176 = scmp.lt.s32.totalorder %s11, 3
    %p177 = pnand %p175, %p176
    %p178 = pneg %p177
    // Predicated region
    $region9: #{segmentation_loss.1} parent=5 // pred_check
      _
    $region10: #{segmentation_loss.1} parent=5 // pred_check_branch
      %180 = sbr.rel (%p177) target = $region12
    $region11: #{segmentation_loss.1} parent=5 // pred_region
      %s181 = ssub.s32 %s11, 1
      // Predicated region
      $region13: #{segmentation_loss.1} parent=11 // pred_check
        %p182 = pneg %p111
      $region14: #{segmentation_loss.1} parent=11 // pred_check_branch
        %184 = sbr.rel (%p182) target = $region16
      $region15: #{segmentation_loss.1} parent=11 // pred_region
        _
      $region16: #{segmentation_loss.1} parent=11 // pred_fallthru
        _
    $region12: #{segmentation_loss.1} parent=5 // pred_fallthru
      _
    %p185 = scmp.lt.s32.totalorder %s11, 2
    // Predicated region
    $region17: #{segmentation_loss.1} parent=5 // pred_check
      %p186 = pneg %p185
    $region18: #{segmentation_loss.1} parent=5 // pred_check_branch
      %188 = sbr.rel (%p186) target = $region20
    $region19: #{segmentation_loss.1} parent=5 // pred_region
      // Predicated region
      $region21: #{segmentation_loss.1} parent=19 // pred_check
        %p189 = pneg %p54
      $region22: #{segmentation_loss.1} parent=19 // pred_check_branch
        %191 = sbr.rel (%p189) target = $region24
      $region23: #{segmentation_loss.1} parent=19 // pred_region
        %s192 = sadd.s32 %s19, %s20
        %s193 = smul.u32 32, %s192
        %p194 = scmp.lt.s32.totalorder %s18, 1
        %s195 = scalar_select %p194, %s18, 1
        %p196 = scmp.lt.s32.totalorder %s193, 31
        %s197 = scalar_select %p196, %s193, 31
        %s198 = smul.addr %s195, 96
        %s199 = sadd.s32 %s197, %s198
        %s200 = smul.addr %s199, 8
        %s201 = scalar_lea.vmem %s0, %s200
        %s202 = sadd.s32 %s19, %s20
        %s203 = smul.u32 32, %s202
      $region24: #{segmentation_loss.1} parent=19 // pred_fallthru
        _
      // Predicated region
      $region25: #{segmentation_loss.1} parent=19 // pred_check
        %p204 = pneg %p84
      $region26: #{segmentation_loss.1} parent=19 // pred_check_branch
        %206 = sbr.rel (%p204) target = $region28
      $region27: #{segmentation_loss.1} parent=19 // pred_region
        %s207 = sadd.s32 %s19, %s20
        %s208 = smul.u32 32, %s207
        %p209 = scmp.lt.s32.totalorder %s18, 1
        %s210 = scalar_select %p209, %s18, 1
        %p211 = scmp.lt.s32.totalorder %s208, 31
        %s212 = scalar_select %p211, %s208, 31
        %s213 = smul.addr %s210, 32
        %s214 = sadd.s32 %s212, %s213
        %s215 = scalar_lea.vmem %s1, %s214
        %s216 = sadd.s32 %s19, %s20
        %s217 = smul.u32 32, %s216
      $region28: #{segmentation_loss.1} parent=19 // pred_fallthru
        _
    $region20: #{segmentation_loss.1} parent=5 // pred_fallthru
      _
    %p218 = scmp.le.s32.totalorder 1, %s11
    %p219 = scmp.lt.s32.totalorder %s11, 3
    %p220 = pnand %p218, %p219
    %p221 = pneg %p220
    // Predicated region
    $region29: #{segmentation_loss.1} parent=5 // pred_check
      _
    $region30: #{segmentation_loss.1} parent=5 // pred_check_branch
      %223 = sbr.rel (%p220) target = $region32
    $region31: #{segmentation_loss.1} parent=5 // pred_region
      %s224 = ssub.s32 %s11, 1
      %s225 = sadd.s32 %s22, %s23
      %s226 = smul.u32 32, %s225
      %p227 = scmp.lt.s32.totalorder %s21, 1
      %s228 = scalar_select %p227, %s21, 1
      %p229 = scmp.lt.s32.totalorder %s226, 31
      %s230 = scalar_select %p229, %s226, 31
      %s231 = smul.addr %s228, 96
      %s232 = sadd.s32 %s230, %s231
      %s233 = smul.addr %s232, 8
      %s234 = scalar_lea.vmem %s0, %s233
      %p235 = pneg %p60
      %p236 = pneg %p57
      %s237 = sadd.s32 %s22, %s23
      %s238 = smul.u32 32, %s237
      %p239 = scmp.lt.s32.totalorder %s21, 1
      %s240 = scalar_select %p239, %s21, 1
      %p241 = scmp.lt.s32.totalorder %s238, 31
      %s242 = scalar_select %p241, %s238, 31
      %s243 = smul.addr %s240, 32
      %s244 = sadd.s32 %s242, %s243
      %s245 = scalar_lea.vmem %s1, %s244
      %p246 = pneg %p90
      %p247 = pneg %p87
      %p248 = pneg %p111
      %p249 = pneg %p108
      %p250 = pneg %p139
      %p251 = pneg %p136
      %s252 = sadd.s32 %s21, %s22
      %p253 = scmp.lt.s32.totalorder %s252, 1
      %s254 = scalar_select %p253, %s252, 1
      %s255 = smul.addr %s254, 9
      %s256 = smul.addr %s255, 8
      %s257 = scalar_lea.vmem %s3, %s256
      %p258 = pneg %p167
      %p259 = pneg %p164
      %s260 = sadd.s32 %s21, %s22
      %p261 = scmp.lt.s32.totalorder %s260, 1
      %s262 = scalar_select %p261, %s260, 1
      %s263 = scalar_lea.vmem %s4, %s262
      %s264 = sadd.s32 %s22, %s23
      %s265 = smul.u32 32, %s264
      %p266 = scmp.lt.s32.totalorder %s21, 1
      %s267 = scalar_select %p266, %s21, 1
      %p268 = scmp.lt.s32.totalorder %s265, 31
      %s269 = scalar_select %p268, %s265, 31
      %s270 = smul.addr %s267, 96
      %s271 = sadd.s32 %s269, %s270
      %s272 = smul.addr %s271, 8
      %s273 = scalar_lea.vmem %s0, %s272
      %s274 = sadd.s32 %s22, %s23
      %s275 = smul.u32 32, %s274
      %s276 = sadd.s32 %s22, %s23
      %s277 = smul.u32 32, %s276
      %p278 = scmp.lt.s32.totalorder %s21, 1
      %s279 = scalar_select %p278, %s21, 1
      %p280 = scmp.lt.s32.totalorder %s277, 31
      %s281 = scalar_select %p280, %s277, 31
      %s282 = smul.addr %s279, 32
      %s283 = sadd.s32 %s281, %s282
      %s284 = scalar_lea.vmem %s1, %s283
      %s285 = sadd.s32 %s22, %s23
      %s286 = smul.u32 32, %s285
      %s287 = sadd.s32 %s21, %s22
      %p288 = scmp.lt.s32.totalorder %s287, 1
      %s289 = scalar_select %p288, %s287, 1
      %s290 = smul.addr %s289, 9
      %s291 = smul.addr %s290, 8
      %s292 = scalar_lea.vmem %s3, %s291
      %s293 = sadd.s32 %s21, %s22
      %s294 = sadd.s32 %s21, %s22
      %p295 = scmp.lt.s32.totalorder %s294, 1
      %s296 = scalar_select %p295, %s294, 1
      %s297 = scalar_lea.vmem %s4, %s296
      %s298 = sadd.s32 %s21, %s22
      %p299 = scmp.eq.s32.totalorder %s23, 0
      // Predicated region
      $region33: #{segmentation_loss.1} parent=31 // pred_check
        %p300 = pneg %p299
      $region34: #{segmentation_loss.1} parent=31 // pred_check_branch
        %302 = sbr.rel (%p300) target = $region36
      $region35: #{segmentation_loss.1} parent=31 // pred_region
        %vm303 = vcmask 7168
        %304 = vst.msk [vmem:[%s292] sm:$0xff] %vm303, 0.0
        %305 = vst.msk [vmem:[%s292 + $0x8] sm:$0xff] %vm303, 0.0
        %vm306 = vcmask 4096
        %307 = vst.msk [vmem:[%s292 + $0x10] sm:$0x1f] %vm306, 0.0
        %308 = vst.msk [vmem:[%s292 + $0x18] sm:$0xff] %vm303, 0.0
        %309 = vst.msk [vmem:[%s292 + $0x20] sm:$0xff] %vm303, 0.0
        %310 = vst.msk [vmem:[%s292 + $0x28] sm:$0x1f] %vm306, 0.0
        %311 = vst.msk [vmem:[%s292 + $0x30] sm:$0xff] %vm303, 0.0
        %312 = vst.msk [vmem:[%s292 + $0x38] sm:$0xff] %vm303, 0.0
        %313 = vst.msk [vmem:[%s292 + $0x40] sm:$0x1f] %vm306, 0.0
        %vm314 = vcmask 8192
        %315 = vst.msk [vmem:[%s297] sm:$0x1] %vm314, 0.0
      $region36: #{segmentation_loss.1} parent=31 // pred_fallthru
        _
      %v316 = vld [vmem:[%s273] sm:$0xff]
      %v317 = vld [vmem:[%s273 + $0x8] sm:$0xff]
      %v318 = vld [vmem:[%s273 + $0x10] sm:$0xff]
      %v319 = vld [vmem:[%s273 + $0x18] sm:$0xff]
      %v320 = vld [vmem:[%s273 + $0x20] sm:$0xff]
      %v321 = vld [vmem:[%s273 + $0x28] sm:$0xff]
      %v322 = vld [vmem:[%s273 + $0x30] sm:$0xff]
      %v323 = vld [vmem:[%s273 + $0x38] sm:$0xff]
      %v324 = vld [vmem:[%s273 + $0x40] sm:$0xff]
      %v325 = vld [vmem:[%s273 + $0x48] sm:$0xff]
      %v326 = vld [vmem:[%s273 + $0x50] sm:$0xff]
      %v327 = vld [vmem:[%s273 + $0x58] sm:$0xff]
      %v328 = vld [vmem:[%s273 + $0x60] sm:$0xff]
      %v329 = vld [vmem:[%s273 + $0x68] sm:$0xff]
      %v330 = vld [vmem:[%s273 + $0x70] sm:$0xff]
      %v331 = vld [vmem:[%s273 + $0x78] sm:$0xff]
      %v332 = vld [vmem:[%s273 + $0x80] sm:$0xff]
      %v333 = vld [vmem:[%s273 + $0x88] sm:$0xff]
      %v334 = vld [vmem:[%s273 + $0x90] sm:$0xff]
      %v335 = vld [vmem:[%s273 + $0x98] sm:$0xff]
      %v336 = vld [vmem:[%s273 + $0xa0] sm:$0xff]
      %v337 = vld [vmem:[%s273 + $0xa8] sm:$0xff]
      %v338 = vld [vmem:[%s273 + $0xb0] sm:$0xff]
      %v339 = vld [vmem:[%s273 + $0xb8] sm:$0xff]
      %v340 = vld [vmem:[%s273 + $0xc0] sm:$0xff]
      %v341 = vld [vmem:[%s273 + $0xc8] sm:$0xff]
      %v342 = vld [vmem:[%s273 + $0xd0] sm:$0xff]
      %v343 = vld [vmem:[%s273 + $0xd8] sm:$0xff]
      %v344 = vld [vmem:[%s273 + $0xe0] sm:$0xff]
      %v345 = vld [vmem:[%s273 + $0xe8] sm:$0xff]
      %v346 = vld [vmem:[%s273 + $0xf0] sm:$0xff]
      %v347 = vld [vmem:[%s273 + $0xf8] sm:$0xff]
      %v348 = vld [vmem:[%s273 + $0x100] sm:$0xff]
      %v349 = vld [vmem:[%s273 + $0x108] sm:$0xff]
      %v350 = vld [vmem:[%s273 + $0x110] sm:$0xff]
      %v351 = vld [vmem:[%s273 + $0x118] sm:$0xff]
      %v352 = vld [vmem:[%s273 + $0x120] sm:$0xff]
      %v353 = vld [vmem:[%s273 + $0x128] sm:$0xff]
      %v354 = vld [vmem:[%s273 + $0x130] sm:$0xff]
      %v355 = vld [vmem:[%s273 + $0x138] sm:$0xff]
      %v356 = vld [vmem:[%s273 + $0x140] sm:$0xff]
      %v357 = vld [vmem:[%s273 + $0x148] sm:$0xff]
      %v358 = vld [vmem:[%s273 + $0x150] sm:$0xff]
      %v359 = vld [vmem:[%s273 + $0x158] sm:$0xff]
      %v360 = vld [vmem:[%s273 + $0x160] sm:$0xff]
      %v361 = vld [vmem:[%s273 + $0x168] sm:$0xff]
      %v362 = vld [vmem:[%s273 + $0x170] sm:$0xff]
      %v363 = vld [vmem:[%s273 + $0x178] sm:$0xff]
      %v364 = vld [vmem:[%s273 + $0x180] sm:$0xff]
      %v365 = vld [vmem:[%s273 + $0x188] sm:$0xff]
      %v366 = vld [vmem:[%s273 + $0x190] sm:$0xff]
      %v367 = vld [vmem:[%s273 + $0x198] sm:$0xff]
      %v368 = vld [vmem:[%s273 + $0x1a0] sm:$0xff]
      %v369 = vld [vmem:[%s273 + $0x1a8] sm:$0xff]
      %v370 = vld [vmem:[%s273 + $0x1b0] sm:$0xff]
      %v371 = vld [vmem:[%s273 + $0x1b8] sm:$0xff]
      %v372 = vld [vmem:[%s273 + $0x1c0] sm:$0xff]
      %v373 = vld [vmem:[%s273 + $0x1c8] sm:$0xff]
      %v374 = vld [vmem:[%s273 + $0x1d0] sm:$0xff]
      %v375 = vld [vmem:[%s273 + $0x1d8] sm:$0xff]
      %v376 = vld [vmem:[%s273 + $0x1e0] sm:$0xff]
      %v377 = vld [vmem:[%s273 + $0x1e8] sm:$0xff]
      %v378 = vld [vmem:[%s273 + $0x1f0] sm:$0xff]
      %v379 = vld [vmem:[%s273 + $0x1f8] sm:$0xff]
      %v380 = vld [vmem:[%s273 + $0x200] sm:$0x1f]
      %v381 = vld [vmem:[%s273 + $0x208] sm:$0x1f]
      %v382 = vld [vmem:[%s273 + $0x210] sm:$0x1f]
      %v383 = vld [vmem:[%s273 + $0x218] sm:$0x1f]
      %v384 = vld [vmem:[%s273 + $0x220] sm:$0x1f]
      %v385 = vld [vmem:[%s273 + $0x228] sm:$0x1f]
      %v386 = vld [vmem:[%s273 + $0x230] sm:$0x1f]
      %v387 = vld [vmem:[%s273 + $0x238] sm:$0x1f]
      %v388 = vld [vmem:[%s273 + $0x240] sm:$0x1f]
      %v389 = vld [vmem:[%s273 + $0x248] sm:$0x1f]
      %v390 = vld [vmem:[%s273 + $0x250] sm:$0x1f]
      %v391 = vld [vmem:[%s273 + $0x258] sm:$0x1f]
      %v392 = vld [vmem:[%s273 + $0x260] sm:$0x1f]
      %v393 = vld [vmem:[%s273 + $0x268] sm:$0x1f]
      %v394 = vld [vmem:[%s273 + $0x270] sm:$0x1f]
      %v395 = vld [vmem:[%s273 + $0x278] sm:$0x1f]
      %v396 = vld [vmem:[%s273 + $0x280] sm:$0x1f]
      %v397 = vld [vmem:[%s273 + $0x288] sm:$0x1f]
      %v398 = vld [vmem:[%s273 + $0x290] sm:$0x1f]
      %v399 = vld [vmem:[%s273 + $0x298] sm:$0x1f]
      %v400 = vld [vmem:[%s273 + $0x2a0] sm:$0x1f]
      %v401 = vld [vmem:[%s273 + $0x2a8] sm:$0x1f]
      %v402 = vld [vmem:[%s273 + $0x2b0] sm:$0x1f]
      %v403 = vld [vmem:[%s273 + $0x2b8] sm:$0x1f]
      %v404 = vld [vmem:[%s273 + $0x2c0] sm:$0x1f]
      %v405 = vld [vmem:[%s273 + $0x2c8] sm:$0x1f]
      %v406 = vld [vmem:[%s273 + $0x2d0] sm:$0x1f]
      %v407 = vld [vmem:[%s273 + $0x2d8] sm:$0x1f]
      %v408 = vld [vmem:[%s273 + $0x2e0] sm:$0x1f]
      %v409 = vld [vmem:[%s273 + $0x2e8] sm:$0x1f]
      %v410 = vld [vmem:[%s273 + $0x2f0] sm:$0x1f]
      %v411 = vld [vmem:[%s273 + $0x2f8] sm:$0x1f]
      %v412 = vld [vmem:[%s284] sm:$0xff]
      %v413 = vld [vmem:[%s284 + $0x8] sm:$0xff]
      %v414 = vld [vmem:[%s284 + $0x10] sm:$0xff]
      %v415 = vld [vmem:[%s284 + $0x18] sm:$0xff]
      %v416 = vunpack.c.l.b16 %v412
      %v417 = vunpack.c.h.b16 %v412
      %v418 = vunpack.c.l.b16 %v413
      %v419 = vunpack.c.h.b16 %v413
      %v420 = vunpack.c.l.b16 %v414
      %v421 = vunpack.c.h.b16 %v414
      %v422 = vunpack.c.l.b16 %v415
      %v423 = vunpack.c.h.b16 %v415
      %v424 = vld [vmem:[%s2] sm:$0xff]
      %v425 = vld [vmem:[%s2 + $0x8] sm:$0xff]
      %v426 = vld [vmem:[%s2 + $0x10] sm:$0x1f]
      %vm427 = vcmp.ne.s32.totalorder %v416, 255
      %vm428 = vcmp.ne.s32.totalorder %v417, 255
      %vm429 = vcmp.ne.s32.totalorder %v418, 255
      %vm430 = vcmp.ne.s32.totalorder %v419, 255
      %vm431 = vcmp.ne.s32.totalorder %v420, 255
      %vm432 = vcmp.ne.s32.totalorder %v421, 255
      %vm433 = vcmp.ne.s32.totalorder %v422, 255
      %vm434 = vcmp.ne.s32.totalorder %v423, 255
      %v435 = vsel %vm427, 1, 0
      %v436 = vsel %vm428, 1, 0
      %v437 = vsel %vm429, 1, 0
      %v438 = vsel %vm430, 1, 0
      %v439 = vsel %vm431, 1, 0
      %v440 = vsel %vm432, 1, 0
      %v441 = vsel %vm433, 1, 0
      %v442 = vsel %vm434, 1, 0
      %v443 = vcvt.s32.f32 %v435
      %v444 = vcvt.s32.f32 %v436
      %v445 = vcvt.s32.f32 %v437
      %v446 = vcvt.s32.f32 %v438
      %v447 = vcvt.s32.f32 %v439
      %v448 = vcvt.s32.f32 %v440
      %v449 = vcvt.s32.f32 %v441
      %v450 = vcvt.s32.f32 %v442
      %vm451 = vcmp.gt.s32.totalorder %v416, 0
      %v452 = vsel %vm451, %v416, 0
      %vm453 = vcmp.gt.s32.totalorder %v417, 0
      %v454 = vsel %vm453, %v417, 0
      %vm455 = vcmp.gt.s32.totalorder %v418, 0
      %v456 = vsel %vm455, %v418, 0
      %vm457 = vcmp.gt.s32.totalorder %v419, 0
      %v458 = vsel %vm457, %v419, 0
      %vm459 = vcmp.gt.s32.totalorder %v420, 0
      %v460 = vsel %vm459, %v420, 0
      %vm461 = vcmp.gt.s32.totalorder %v421, 0
      %v462 = vsel %vm461, %v421, 0
      %vm463 = vcmp.gt.s32.totalorder %v422, 0
      %v464 = vsel %vm463, %v422, 0
      %vm465 = vcmp.gt.s32.totalorder %v423, 0
      %v466 = vsel %vm465, %v423, 0
      %v467 = vlaneseq
      %v468 = vshrl.u32 %v467, 7
      %v469 = vadd.s32 %v468, 8
      %v470 = vadd.s32 %v468, 16
      %v471 = vlaneseq
      %v472 = vshrl.u32 %v471, 7
      %v473 = vsub.s32 0, %v472
      %v474 = vrot.slane %v452, %v473
      %v475 = vlaneseq
      %v476 = vshrl.u32 %v475, 7
      %v477 = vsub.s32 2, %v476
      %v478 = vrot.slane %v452, %v477
      %v479 = vlaneseq
      %v480 = vshrl.u32 %v479, 7
      %v481 = vsub.s32 4, %v480
      %v482 = vrot.slane %v452, %v481
      %v483 = vlaneseq
      %v484 = vshrl.u32 %v483, 7
      %v485 = vsub.s32 6, %v484
      %v486 = vrot.slane %v452, %v485
      %v487 = vlaneseq
      %v488 = vshrl.u32 %v487, 7
      %v489 = vsub.s32 0, %v488
      %v490 = vrot.slane %v454, %v489
      %v491 = vlaneseq
      %v492 = vshrl.u32 %v491, 7
      %v493 = vsub.s32 2, %v492
      %v494 = vrot.slane %v454, %v493
      %v495 = vlaneseq
      %v496 = vshrl.u32 %v495, 7
      %v497 = vsub.s32 4, %v496
      %v498 = vrot.slane %v454, %v497
      %v499 = vlaneseq
      %v500 = vshrl.u32 %v499, 7
      %v501 = vsub.s32 6, %v500
      %v502 = vrot.slane %v454, %v501
      %v503 = vlaneseq
      %v504 = vshrl.u32 %v503, 7
      %v505 = vsub.s32 0, %v504
      %v506 = vrot.slane %v456, %v505
      %v507 = vlaneseq
      %v508 = vshrl.u32 %v507, 7
      %v509 = vsub.s32 2, %v508
      %v510 = vrot.slane %v456, %v509
      %v511 = vlaneseq
      %v512 = vshrl.u32 %v511, 7
      %v513 = vsub.s32 4, %v512
      %v514 = vrot.slane %v456, %v513
      %v515 = vlaneseq
      %v516 = vshrl.u32 %v515, 7
      %v517 = vsub.s32 6, %v516
      %v518 = vrot.slane %v456, %v517
      %v519 = vlaneseq
      %v520 = vshrl.u32 %v519, 7
      %v521 = vsub.s32 0, %v520
      %v522 = vrot.slane %v458, %v521
      %v523 = vlaneseq
      %v524 = vshrl.u32 %v523, 7
      %v525 = vsub.s32 2, %v524
      %v526 = vrot.slane %v458, %v525
      %v527 = vlaneseq
      %v528 = vshrl.u32 %v527, 7
      %v529 = vsub.s32 4, %v528
      %v530 = vrot.slane %v458, %v529
      %v531 = vlaneseq
      %v532 = vshrl.u32 %v531, 7
      %v533 = vsub.s32 6, %v532
      %v534 = vrot.slane %v458, %v533
      %v535 = vlaneseq
      %v536 = vshrl.u32 %v535, 7
      %v537 = vsub.s32 0, %v536
      %v538 = vrot.slane %v460, %v537
      %v539 = vlaneseq
      %v540 = vshrl.u32 %v539, 7
      %v541 = vsub.s32 2, %v540
      %v542 = vrot.slane %v460, %v541
      %v543 = vlaneseq
      %v544 = vshrl.u32 %v543, 7
      %v545 = vsub.s32 4, %v544
      %v546 = vrot.slane %v460, %v545
      %v547 = vlaneseq
      %v548 = vshrl.u32 %v547, 7
      %v549 = vsub.s32 6, %v548
      %v550 = vrot.slane %v460, %v549
      %v551 = vlaneseq
      %v552 = vshrl.u32 %v551, 7
      %v553 = vsub.s32 0, %v552
      %v554 = vrot.slane %v462, %v553
      %v555 = vlaneseq
      %v556 = vshrl.u32 %v555, 7
      %v557 = vsub.s32 2, %v556
      %v558 = vrot.slane %v462, %v557
      %v559 = vlaneseq
      %v560 = vshrl.u32 %v559, 7
      %v561 = vsub.s32 4, %v560
      %v562 = vrot.slane %v462, %v561
      %v563 = vlaneseq
      %v564 = vshrl.u32 %v563, 7
      %v565 = vsub.s32 6, %v564
      %v566 = vrot.slane %v462, %v565
      %v567 = vlaneseq
      %v568 = vshrl.u32 %v567, 7
      %v569 = vsub.s32 0, %v568
      %v570 = vrot.slane %v464, %v569
      %v571 = vlaneseq
      %v572 = vshrl.u32 %v571, 7
      %v573 = vsub.s32 2, %v572
      %v574 = vrot.slane %v464, %v573
      %v575 = vlaneseq
      %v576 = vshrl.u32 %v575, 7
      %v577 = vsub.s32 4, %v576
      %v578 = vrot.slane %v464, %v577
      %v579 = vlaneseq
      %v580 = vshrl.u32 %v579, 7
      %v581 = vsub.s32 6, %v580
      %v582 = vrot.slane %v464, %v581
      %v583 = vlaneseq
      %v584 = vshrl.u32 %v583, 7
      %v585 = vsub.s32 0, %v584
      %v586 = vrot.slane %v466, %v585
      %v587 = vlaneseq
      %v588 = vshrl.u32 %v587, 7
      %v589 = vsub.s32 2, %v588
      %v590 = vrot.slane %v466, %v589
      %v591 = vlaneseq
      %v592 = vshrl.u32 %v591, 7
      %v593 = vsub.s32 4, %v592
      %v594 = vrot.slane %v466, %v593
      %v595 = vlaneseq
      %v596 = vshrl.u32 %v595, 7
      %v597 = vsub.s32 6, %v596
      %v598 = vrot.slane %v466, %v597
      %v599 = vlaneseq
      %v600 = vshrl.u32 %v599, 7
      %v601 = vsub.s32 0, %v600
      %v602 = vrot.slane %v474, %v601
      %v603 = vlaneseq
      %v604 = vshrl.u32 %v603, 7
      %v605 = vsub.s32 0, %v604
      %v606 = vrot.slane %v478, %v605
      %v607 = vlaneseq
      %v608 = vshrl.u32 %v607, 7
      %v609 = vsub.s32 0, %v608
      %v610 = vrot.slane %v482, %v609
      %v611 = vlaneseq
      %v612 = vshrl.u32 %v611, 7
      %v613 = vsub.s32 0, %v612
      %v614 = vrot.slane %v486, %v613
      %v615 = vlaneseq
      %v616 = vshrl.u32 %v615, 7
      %v617 = vsub.s32 0, %v616
      %v618 = vrot.slane %v490, %v617
      %v619 = vlaneseq
      %v620 = vshrl.u32 %v619, 7
      %v621 = vsub.s32 0, %v620
      %v622 = vrot.slane %v494, %v621
      %v623 = vlaneseq
      %v624 = vshrl.u32 %v623, 7
      %v625 = vsub.s32 0, %v624
      %v626 = vrot.slane %v498, %v625
      %v627 = vlaneseq
      %v628 = vshrl.u32 %v627, 7
      %v629 = vsub.s32 0, %v628
      %v630 = vrot.slane %v502, %v629
      %v631 = vlaneseq
      %v632 = vshrl.u32 %v631, 7
      %v633 = vsub.s32 0, %v632
      %v634 = vrot.slane %v506, %v633
      %v635 = vlaneseq
      %v636 = vshrl.u32 %v635, 7
      %v637 = vsub.s32 0, %v636
      %v638 = vrot.slane %v510, %v637
      %v639 = vlaneseq
      %v640 = vshrl.u32 %v639, 7
      %v641 = vsub.s32 0, %v640
      %v642 = vrot.slane %v514, %v641
      %v643 = vlaneseq
      %v644 = vshrl.u32 %v643, 7
      %v645 = vsub.s32 0, %v644
      %v646 = vrot.slane %v518, %v645
      %v647 = vlaneseq
      %v648 = vshrl.u32 %v647, 7
      %v649 = vsub.s32 0, %v648
      %v650 = vrot.slane %v522, %v649
      %v651 = vlaneseq
      %v652 = vshrl.u32 %v651, 7
      %v653 = vsub.s32 0, %v652
      %v654 = vrot.slane %v526, %v653
      %v655 = vlaneseq
      %v656 = vshrl.u32 %v655, 7
      %v657 = vsub.s32 0, %v656
      %v658 = vrot.slane %v530, %v657
      %v659 = vlaneseq
      %v660 = vshrl.u32 %v659, 7
      %v661 = vsub.s32 0, %v660
      %v662 = vrot.slane %v534, %v661
      %v663 = vlaneseq
      %v664 = vshrl.u32 %v663, 7
      %v665 = vsub.s32 0, %v664
      %v666 = vrot.slane %v538, %v665
      %v667 = vlaneseq
      %v668 = vshrl.u32 %v667, 7
      %v669 = vsub.s32 0, %v668
      %v670 = vrot.slane %v542, %v669
      %v671 = vlaneseq
      %v672 = vshrl.u32 %v671, 7
      %v673 = vsub.s32 0, %v672
      %v674 = vrot.slane %v546, %v673
      %v675 = vlaneseq
      %v676 = vshrl.u32 %v675, 7
      %v677 = vsub.s32 0, %v676
      %v678 = vrot.slane %v550, %v677
      %v679 = vlaneseq
      %v680 = vshrl.u32 %v679, 7
      %v681 = vsub.s32 0, %v680
      %v682 = vrot.slane %v554, %v681
      %v683 = vlaneseq
      %v684 = vshrl.u32 %v683, 7
      %v685 = vsub.s32 0, %v684
      %v686 = vrot.slane %v558, %v685
      %v687 = vlaneseq
      %v688 = vshrl.u32 %v687, 7
      %v689 = vsub.s32 0, %v688
      %v690 = vrot.slane %v562, %v689
      %v691 = vlaneseq
      %v692 = vshrl.u32 %v691, 7
      %v693 = vsub.s32 0, %v692
      %v694 = vrot.slane %v566, %v693
      %v695 = vlaneseq
      %v696 = vshrl.u32 %v695, 7
      %v697 = vsub.s32 0, %v696
      %v698 = vrot.slane %v570, %v697
      %v699 = vlaneseq
      %v700 = vshrl.u32 %v699, 7
      %v701 = vsub.s32 0, %v700
      %v702 = vrot.slane %v574, %v701
      %v703 = vlaneseq
      %v704 = vshrl.u32 %v703, 7
      %v705 = vsub.s32 0, %v704
      %v706 = vrot.slane %v578, %v705
      %v707 = vlaneseq
      %v708 = vshrl.u32 %v707, 7
      %v709 = vsub.s32 0, %v708
      %v710 = vrot.slane %v582, %v709
      %v711 = vlaneseq
      %v712 = vshrl.u32 %v711, 7
      %v713 = vsub.s32 0, %v712
      %v714 = vrot.slane %v586, %v713
      %v715 = vlaneseq
      %v716 = vshrl.u32 %v715, 7
      %v717 = vsub.s32 0, %v716
      %v718 = vrot.slane %v590, %v717
      %v719 = vlaneseq
      %v720 = vshrl.u32 %v719, 7
      %v721 = vsub.s32 0, %v720
      %v722 = vrot.slane %v594, %v721
      %v723 = vlaneseq
      %v724 = vshrl.u32 %v723, 7
      %v725 = vsub.s32 0, %v724
      %v726 = vrot.slane %v598, %v725
      %vm727 = vcmp.eq.s32.totalorder %v468, %v602
      %vm728 = vcmp.eq.s32.totalorder %v468, %v606
      %vm729 = vcmp.eq.s32.totalorder %v468, %v610
      %vm730 = vcmp.eq.s32.totalorder %v468, %v614
      %vm731 = vcmp.eq.s32.totalorder %v468, %v618
      %vm732 = vcmp.eq.s32.totalorder %v468, %v622
      %vm733 = vcmp.eq.s32.totalorder %v468, %v626
      %vm734 = vcmp.eq.s32.totalorder %v468, %v630
      %vm735 = vcmp.eq.s32.totalorder %v468, %v634
      %vm736 = vcmp.eq.s32.totalorder %v468, %v638
      %vm737 = vcmp.eq.s32.totalorder %v468, %v642
      %vm738 = vcmp.eq.s32.totalorder %v468, %v646
      %vm739 = vcmp.eq.s32.totalorder %v468, %v650
      %vm740 = vcmp.eq.s32.totalorder %v468, %v654
      %vm741 = vcmp.eq.s32.totalorder %v468, %v658
      %vm742 = vcmp.eq.s32.totalorder %v468, %v662
      %vm743 = vcmp.eq.s32.totalorder %v468, %v666
      %vm744 = vcmp.eq.s32.totalorder %v468, %v670
      %vm745 = vcmp.eq.s32.totalorder %v468, %v674
      %vm746 = vcmp.eq.s32.totalorder %v468, %v678
      %vm747 = vcmp.eq.s32.totalorder %v468, %v682
      %vm748 = vcmp.eq.s32.totalorder %v468, %v686
      %vm749 = vcmp.eq.s32.totalorder %v468, %v690
      %vm750 = vcmp.eq.s32.totalorder %v468, %v694
      %vm751 = vcmp.eq.s32.totalorder %v468, %v698
      %vm752 = vcmp.eq.s32.totalorder %v468, %v702
      %vm753 = vcmp.eq.s32.totalorder %v468, %v706
      %vm754 = vcmp.eq.s32.totalorder %v468, %v710
      %vm755 = vcmp.eq.s32.totalorder %v468, %v714
      %vm756 = vcmp.eq.s32.totalorder %v468, %v718
      %vm757 = vcmp.eq.s32.totalorder %v468, %v722
      %vm758 = vcmp.eq.s32.totalorder %v468, %v726
      %vm759 = vcmp.eq.s32.totalorder %v469, %v602
      %vm760 = vcmp.eq.s32.totalorder %v469, %v606
      %vm761 = vcmp.eq.s32.totalorder %v469, %v610
      %vm762 = vcmp.eq.s32.totalorder %v469, %v614
      %vm763 = vcmp.eq.s32.totalorder %v469, %v618
      %vm764 = vcmp.eq.s32.totalorder %v469, %v622
      %vm765 = vcmp.eq.s32.totalorder %v469, %v626
      %vm766 = vcmp.eq.s32.totalorder %v469, %v630
      %vm767 = vcmp.eq.s32.totalorder %v469, %v634
      %vm768 = vcmp.eq.s32.totalorder %v469, %v638
      %vm769 = vcmp.eq.s32.totalorder %v469, %v642
      %vm770 = vcmp.eq.s32.totalorder %v469, %v646
      %vm771 = vcmp.eq.s32.totalorder %v469, %v650
      %vm772 = vcmp.eq.s32.totalorder %v469, %v654
      %vm773 = vcmp.eq.s32.totalorder %v469, %v658
      %vm774 = vcmp.eq.s32.totalorder %v469, %v662
      %vm775 = vcmp.eq.s32.totalorder %v469, %v666
      %vm776 = vcmp.eq.s32.totalorder %v469, %v670
      %vm777 = vcmp.eq.s32.totalorder %v469, %v674
      %vm778 = vcmp.eq.s32.totalorder %v469, %v678
      %vm779 = vcmp.eq.s32.totalorder %v469, %v682
      %vm780 = vcmp.eq.s32.totalorder %v469, %v686
      %vm781 = vcmp.eq.s32.totalorder %v469, %v690
      %vm782 = vcmp.eq.s32.totalorder %v469, %v694
      %vm783 = vcmp.eq.s32.totalorder %v469, %v698
      %vm784 = vcmp.eq.s32.totalorder %v469, %v702
      %vm785 = vcmp.eq.s32.totalorder %v469, %v706
      %vm786 = vcmp.eq.s32.totalorder %v469, %v710
      %vm787 = vcmp.eq.s32.totalorder %v469, %v714
      %vm788 = vcmp.eq.s32.totalorder %v469, %v718
      %vm789 = vcmp.eq.s32.totalorder %v469, %v722
      %vm790 = vcmp.eq.s32.totalorder %v469, %v726
      %vm791 = vcmp.eq.s32.totalorder %v470, %v602
      %vm792 = vcmp.eq.s32.totalorder %v470, %v606
      %vm793 = vcmp.eq.s32.totalorder %v470, %v610
      %vm794 = vcmp.eq.s32.totalorder %v470, %v614
      %vm795 = vcmp.eq.s32.totalorder %v470, %v618
      %vm796 = vcmp.eq.s32.totalorder %v470, %v622
      %vm797 = vcmp.eq.s32.totalorder %v470, %v626
      %vm798 = vcmp.eq.s32.totalorder %v470, %v630
      %vm799 = vcmp.eq.s32.totalorder %v470, %v634
      %vm800 = vcmp.eq.s32.totalorder %v470, %v638
      %vm801 = vcmp.eq.s32.totalorder %v470, %v642
      %vm802 = vcmp.eq.s32.totalorder %v470, %v646
      %vm803 = vcmp.eq.s32.totalorder %v470, %v650
      %vm804 = vcmp.eq.s32.totalorder %v470, %v654
      %vm805 = vcmp.eq.s32.totalorder %v470, %v658
      %vm806 = vcmp.eq.s32.totalorder %v470, %v662
      %vm807 = vcmp.eq.s32.totalorder %v470, %v666
      %vm808 = vcmp.eq.s32.totalorder %v470, %v670
      %vm809 = vcmp.eq.s32.totalorder %v470, %v674
      %vm810 = vcmp.eq.s32.totalorder %v470, %v678
      %vm811 = vcmp.eq.s32.totalorder %v470, %v682
      %vm812 = vcmp.eq.s32.totalorder %v470, %v686
      %vm813 = vcmp.eq.s32.totalorder %v470, %v690
      %vm814 = vcmp.eq.s32.totalorder %v470, %v694
      %vm815 = vcmp.eq.s32.totalorder %v470, %v698
      %vm816 = vcmp.eq.s32.totalorder %v470, %v702
      %vm817 = vcmp.eq.s32.totalorder %v470, %v706
      %vm818 = vcmp.eq.s32.totalorder %v470, %v710
      %vm819 = vcmp.eq.s32.totalorder %v470, %v714
      %vm820 = vcmp.eq.s32.totalorder %v470, %v718
      %vm821 = vcmp.eq.s32.totalorder %v470, %v722
      %vm822 = vcmp.eq.s32.totalorder %v470, %v726
      %v823 = vsel %vm727, 1, 0
      %v824 = vsel %vm728, 1, 0
      %v825 = vsel %vm729, 1, 0
      %v826 = vsel %vm730, 1, 0
      %v827 = vsel %vm731, 1, 0
      %v828 = vsel %vm732, 1, 0
      %v829 = vsel %vm733, 1, 0
      %v830 = vsel %vm734, 1, 0
      %v831 = vsel %vm735, 1, 0
      %v832 = vsel %vm736, 1, 0
      %v833 = vsel %vm737, 1, 0
      %v834 = vsel %vm738, 1, 0
      %v835 = vsel %vm739, 1, 0
      %v836 = vsel %vm740, 1, 0
      %v837 = vsel %vm741, 1, 0
      %v838 = vsel %vm742, 1, 0
      %v839 = vsel %vm743, 1, 0
      %v840 = vsel %vm744, 1, 0
      %v841 = vsel %vm745, 1, 0
      %v842 = vsel %vm746, 1, 0
      %v843 = vsel %vm747, 1, 0
      %v844 = vsel %vm748, 1, 0
      %v845 = vsel %vm749, 1, 0
      %v846 = vsel %vm750, 1, 0
      %v847 = vsel %vm751, 1, 0
      %v848 = vsel %vm752, 1, 0
      %v849 = vsel %vm753, 1, 0
      %v850 = vsel %vm754, 1, 0
      %v851 = vsel %vm755, 1, 0
      %v852 = vsel %vm756, 1, 0
      %v853 = vsel %vm757, 1, 0
      %v854 = vsel %vm758, 1, 0
      %v855 = vsel %vm759, 1, 0
      %v856 = vsel %vm760, 1, 0
      %v857 = vsel %vm761, 1, 0
      %v858 = vsel %vm762, 1, 0
      %v859 = vsel %vm763, 1, 0
      %v860 = vsel %vm764, 1, 0
      %v861 = vsel %vm765, 1, 0
      %v862 = vsel %vm766, 1, 0
      %v863 = vsel %vm767, 1, 0
      %v864 = vsel %vm768, 1, 0
      %v865 = vsel %vm769, 1, 0
      %v866 = vsel %vm770, 1, 0
      %v867 = vsel %vm771, 1, 0
      %v868 = vsel %vm772, 1, 0
      %v869 = vsel %vm773, 1, 0
      %v870 = vsel %vm774, 1, 0
      %v871 = vsel %vm775, 1, 0
      %v872 = vsel %vm776, 1, 0
      %v873 = vsel %vm777, 1, 0
      %v874 = vsel %vm778, 1, 0
      %v875 = vsel %vm779, 1, 0
      %v876 = vsel %vm780, 1, 0
      %v877 = vsel %vm781, 1, 0
      %v878 = vsel %vm782, 1, 0
      %v879 = vsel %vm783, 1, 0
      %v880 = vsel %vm784, 1, 0
      %v881 = vsel %vm785, 1, 0
      %v882 = vsel %vm786, 1, 0
      %v883 = vsel %vm787, 1, 0
      %v884 = vsel %vm788, 1, 0
      %v885 = vsel %vm789, 1, 0
      %v886 = vsel %vm790, 1, 0
      %v887 = vsel %vm791, 1, 0
      %v888 = vsel %vm792, 1, 0
      %v889 = vsel %vm793, 1, 0
      %v890 = vsel %vm794, 1, 0
      %v891 = vsel %vm795, 1, 0
      %v892 = vsel %vm796, 1, 0
      %v893 = vsel %vm797, 1, 0
      %v894 = vsel %vm798, 1, 0
      %v895 = vsel %vm799, 1, 0
      %v896 = vsel %vm800, 1, 0
      %v897 = vsel %vm801, 1, 0
      %v898 = vsel %vm802, 1, 0
      %v899 = vsel %vm803, 1, 0
      %v900 = vsel %vm804, 1, 0
      %v901 = vsel %vm805, 1, 0
      %v902 = vsel %vm806, 1, 0
      %v903 = vsel %vm807, 1, 0
      %v904 = vsel %vm808, 1, 0
      %v905 = vsel %vm809, 1, 0
      %v906 = vsel %vm810, 1, 0
      %v907 = vsel %vm811, 1, 0
      %v908 = vsel %vm812, 1, 0
      %v909 = vsel %vm813, 1, 0
      %v910 = vsel %vm814, 1, 0
      %v911 = vsel %vm815, 1, 0
      %v912 = vsel %vm816, 1, 0
      %v913 = vsel %vm817, 1, 0
      %v914 = vsel %vm818, 1, 0
      %v915 = vsel %vm819, 1, 0
      %v916 = vsel %vm820, 1, 0
      %v917 = vsel %vm821, 1, 0
      %v918 = vsel %vm822, 1, 0
      %v919 = vcvt.s32.f32 %v823
      %v920 = vcvt.s32.f32 %v824
      %v921 = vcvt.s32.f32 %v825
      %v922 = vcvt.s32.f32 %v826
      %v923 = vcvt.s32.f32 %v827
      %v924 = vcvt.s32.f32 %v828
      %v925 = vcvt.s32.f32 %v829
      %v926 = vcvt.s32.f32 %v830
      %v927 = vcvt.s32.f32 %v831
      %v928 = vcvt.s32.f32 %v832
      %v929 = vcvt.s32.f32 %v833
      %v930 = vcvt.s32.f32 %v834
      %v931 = vcvt.s32.f32 %v835
      %v932 = vcvt.s32.f32 %v836
      %v933 = vcvt.s32.f32 %v837
      %v934 = vcvt.s32.f32 %v838
      %v935 = vcvt.s32.f32 %v839
      %v936 = vcvt.s32.f32 %v840
      %v937 = vcvt.s32.f32 %v841
      %v938 = vcvt.s32.f32 %v842
      %v939 = vcvt.s32.f32 %v843
      %v940 = vcvt.s32.f32 %v844
      %v941 = vcvt.s32.f32 %v845
      %v942 = vcvt.s32.f32 %v846
      %v943 = vcvt.s32.f32 %v847
      %v944 = vcvt.s32.f32 %v848
      %v945 = vcvt.s32.f32 %v849
      %v946 = vcvt.s32.f32 %v850
      %v947 = vcvt.s32.f32 %v851
      %v948 = vcvt.s32.f32 %v852
      %v949 = vcvt.s32.f32 %v853
      %v950 = vcvt.s32.f32 %v854
      %v951 = vcvt.s32.f32 %v855
      %v952 = vcvt.s32.f32 %v856
      %v953 = vcvt.s32.f32 %v857
      %v954 = vcvt.s32.f32 %v858
      %v955 = vcvt.s32.f32 %v859
      %v956 = vcvt.s32.f32 %v860
      %v957 = vcvt.s32.f32 %v861
      %v958 = vcvt.s32.f32 %v862
      %v959 = vcvt.s32.f32 %v863
      %v960 = vcvt.s32.f32 %v864
      %v961 = vcvt.s32.f32 %v865
      %v962 = vcvt.s32.f32 %v866
      %v963 = vcvt.s32.f32 %v867
      %v964 = vcvt.s32.f32 %v868
      %v965 = vcvt.s32.f32 %v869
      %v966 = vcvt.s32.f32 %v870
      %v967 = vcvt.s32.f32 %v871
      %v968 = vcvt.s32.f32 %v872
      %v969 = vcvt.s32.f32 %v873
      %v970 = vcvt.s32.f32 %v874
      %v971 = vcvt.s32.f32 %v875
      %v972 = vcvt.s32.f32 %v876
      %v973 = vcvt.s32.f32 %v877
      %v974 = vcvt.s32.f32 %v878
      %v975 = vcvt.s32.f32 %v879
      %v976 = vcvt.s32.f32 %v880
      %v977 = vcvt.s32.f32 %v881
      %v978 = vcvt.s32.f32 %v882
      %v979 = vcvt.s32.f32 %v883
      %v980 = vcvt.s32.f32 %v884
      %v981 = vcvt.s32.f32 %v885
      %v982 = vcvt.s32.f32 %v886
      %v983 = vcvt.s32.f32 %v887
      %v984 = vcvt.s32.f32 %v888
      %v985 = vcvt.s32.f32 %v889
      %v986 = vcvt.s32.f32 %v890
      %v987 = vcvt.s32.f32 %v891
      %v988 = vcvt.s32.f32 %v892
      %v989 = vcvt.s32.f32 %v893
      %v990 = vcvt.s32.f32 %v894
      %v991 = vcvt.s32.f32 %v895
      %v992 = vcvt.s32.f32 %v896
      %v993 = vcvt.s32.f32 %v897
      %v994 = vcvt.s32.f32 %v898
      %v995 = vcvt.s32.f32 %v899
      %v996 = vcvt.s32.f32 %v900
      %v997 = vcvt.s32.f32 %v901
      %v998 = vcvt.s32.f32 %v902
      %v999 = vcvt.s32.f32 %v903
      %v1000 = vcvt.s32.f32 %v904
      %v1001 = vcvt.s32.f32 %v905
      %v1002 = vcvt.s32.f32 %v906
      %v1003 = vcvt.s32.f32 %v907
      %v1004 = vcvt.s32.f32 %v908
      %v1005 = vcvt.s32.f32 %v909
      %v1006 = vcvt.s32.f32 %v910
      %v1007 = vcvt.s32.f32 %v911
      %v1008 = vcvt.s32.f32 %v912
      %v1009 = vcvt.s32.f32 %v913
      %v1010 = vcvt.s32.f32 %v914
      %v1011 = vcvt.s32.f32 %v915
      %v1012 = vcvt.s32.f32 %v916
      %v1013 = vcvt.s32.f32 %v917
      %v1014 = vcvt.s32.f32 %v918
      %v1023 = vlaneseq
      %v1024 = vshrl.u32 %v1023, 7
      %v1025 = vsub.s32 0, %v1024
      %v1026 = vrot.slane %v443, %v1025
      %v1027 = vlaneseq
      %v1028 = vshrl.u32 %v1027, 7
      %v1029 = vsub.s32 2, %v1028
      %v1030 = vrot.slane %v443, %v1029
      %v1031 = vlaneseq
      %v1032 = vshrl.u32 %v1031, 7
      %v1033 = vsub.s32 4, %v1032
      %v1034 = vrot.slane %v443, %v1033
      %v1035 = vlaneseq
      %v1036 = vshrl.u32 %v1035, 7
      %v1037 = vsub.s32 6, %v1036
      %v1038 = vrot.slane %v443, %v1037
      %v1039 = vlaneseq
      %v1040 = vshrl.u32 %v1039, 7
      %v1041 = vsub.s32 0, %v1040
      %v1042 = vrot.slane %v444, %v1041
      %v1043 = vlaneseq
      %v1044 = vshrl.u32 %v1043, 7
      %v1045 = vsub.s32 2, %v1044
      %v1046 = vrot.slane %v444, %v1045
      %v1047 = vlaneseq
      %v1048 = vshrl.u32 %v1047, 7
      %v1049 = vsub.s32 4, %v1048
      %v1050 = vrot.slane %v444, %v1049
      %v1051 = vlaneseq
      %v1052 = vshrl.u32 %v1051, 7
      %v1053 = vsub.s32 6, %v1052
      %v1054 = vrot.slane %v444, %v1053
      %v1055 = vlaneseq
      %v1056 = vshrl.u32 %v1055, 7
      %v1057 = vsub.s32 0, %v1056
      %v1058 = vrot.slane %v445, %v1057
      %v1059 = vlaneseq
      %v1060 = vshrl.u32 %v1059, 7
      %v1061 = vsub.s32 2, %v1060
      %v1062 = vrot.slane %v445, %v1061
      %v1063 = vlaneseq
      %v1064 = vshrl.u32 %v1063, 7
      %v1065 = vsub.s32 4, %v1064
      %v1066 = vrot.slane %v445, %v1065
      %v1067 = vlaneseq
      %v1068 = vshrl.u32 %v1067, 7
      %v1069 = vsub.s32 6, %v1068
      %v1070 = vrot.slane %v445, %v1069
      %v1071 = vlaneseq
      %v1072 = vshrl.u32 %v1071, 7
      %v1073 = vsub.s32 0, %v1072
      %v1074 = vrot.slane %v446, %v1073
      %v1075 = vlaneseq
      %v1076 = vshrl.u32 %v1075, 7
      %v1077 = vsub.s32 2, %v1076
      %v1078 = vrot.slane %v446, %v1077
      %v1079 = vlaneseq
      %v1080 = vshrl.u32 %v1079, 7
      %v1081 = vsub.s32 4, %v1080
      %v1082 = vrot.slane %v446, %v1081
      %v1083 = vlaneseq
      %v1084 = vshrl.u32 %v1083, 7
      %v1085 = vsub.s32 6, %v1084
      %v1086 = vrot.slane %v446, %v1085
      %v1087 = vlaneseq
      %v1088 = vshrl.u32 %v1087, 7
      %v1089 = vsub.s32 0, %v1088
      %v1090 = vrot.slane %v447, %v1089
      %v1091 = vlaneseq
      %v1092 = vshrl.u32 %v1091, 7
      %v1093 = vsub.s32 2, %v1092
      %v1094 = vrot.slane %v447, %v1093
      %v1095 = vlaneseq
      %v1096 = vshrl.u32 %v1095, 7
      %v1097 = vsub.s32 4, %v1096
      %v1098 = vrot.slane %v447, %v1097
      %v1099 = vlaneseq
      %v1100 = vshrl.u32 %v1099, 7
      %v1101 = vsub.s32 6, %v1100
      %v1102 = vrot.slane %v447, %v1101
      %v1103 = vlaneseq
      %v1104 = vshrl.u32 %v1103, 7
      %v1105 = vsub.s32 0, %v1104
      %v1106 = vrot.slane %v448, %v1105
      %v1107 = vlaneseq
      %v1108 = vshrl.u32 %v1107, 7
      %v1109 = vsub.s32 2, %v1108
      %v1110 = vrot.slane %v448, %v1109
      %v1111 = vlaneseq
      %v1112 = vshrl.u32 %v1111, 7
      %v1113 = vsub.s32 4, %v1112
      %v1114 = vrot.slane %v448, %v1113
      %v1115 = vlaneseq
      %v1116 = vshrl.u32 %v1115, 7
      %v1117 = vsub.s32 6, %v1116
      %v1118 = vrot.slane %v448, %v1117
      %v1119 = vlaneseq
      %v1120 = vshrl.u32 %v1119, 7
      %v1121 = vsub.s32 0, %v1120
      %v1122 = vrot.slane %v449, %v1121
      %v1123 = vlaneseq
      %v1124 = vshrl.u32 %v1123, 7
      %v1125 = vsub.s32 2, %v1124
      %v1126 = vrot.slane %v449, %v1125
      %v1127 = vlaneseq
      %v1128 = vshrl.u32 %v1127, 7
      %v1129 = vsub.s32 4, %v1128
      %v1130 = vrot.slane %v449, %v1129
      %v1131 = vlaneseq
      %v1132 = vshrl.u32 %v1131, 7
      %v1133 = vsub.s32 6, %v1132
      %v1134 = vrot.slane %v449, %v1133
      %v1135 = vlaneseq
      %v1136 = vshrl.u32 %v1135, 7
      %v1137 = vsub.s32 0, %v1136
      %v1138 = vrot.slane %v450, %v1137
      %v1139 = vlaneseq
      %v1140 = vshrl.u32 %v1139, 7
      %v1141 = vsub.s32 2, %v1140
      %v1142 = vrot.slane %v450, %v1141
      %v1143 = vlaneseq
      %v1144 = vshrl.u32 %v1143, 7
      %v1145 = vsub.s32 4, %v1144
      %v1146 = vrot.slane %v450, %v1145
      %v1147 = vlaneseq
      %v1148 = vshrl.u32 %v1147, 7
      %v1149 = vsub.s32 6, %v1148
      %v1150 = vrot.slane %v450, %v1149
      %v1183 = vlaneseq
      %v1184 = vshrl.u32 %v1183, 7
      %v1185 = vsub.s32 0, %v1184
      %v1186 = vrot.slane %v1026, %v1185
      %v1187 = vlaneseq
      %v1188 = vshrl.u32 %v1187, 7
      %v1189 = vsub.s32 0, %v1188
      %v1190 = vrot.slane %v1030, %v1189
      %v1191 = vlaneseq
      %v1192 = vshrl.u32 %v1191, 7
      %v1193 = vsub.s32 0, %v1192
      %v1194 = vrot.slane %v1034, %v1193
      %v1195 = vlaneseq
      %v1196 = vshrl.u32 %v1195, 7
      %v1197 = vsub.s32 0, %v1196
      %v1198 = vrot.slane %v1038, %v1197
      %v1199 = vlaneseq
      %v1200 = vshrl.u32 %v1199, 7
      %v1201 = vsub.s32 0, %v1200
      %v1202 = vrot.slane %v1042, %v1201
      %v1203 = vlaneseq
      %v1204 = vshrl.u32 %v1203, 7
      %v1205 = vsub.s32 0, %v1204
      %v1206 = vrot.slane %v1046, %v1205
      %v1207 = vlaneseq
      %v1208 = vshrl.u32 %v1207, 7
      %v1209 = vsub.s32 0, %v1208
      %v1210 = vrot.slane %v1050, %v1209
      %v1211 = vlaneseq
      %v1212 = vshrl.u32 %v1211, 7
      %v1213 = vsub.s32 0, %v1212
      %v1214 = vrot.slane %v1054, %v1213
      %v1215 = vlaneseq
      %v1216 = vshrl.u32 %v1215, 7
      %v1217 = vsub.s32 0, %v1216
      %v1218 = vrot.slane %v1058, %v1217
      %v1219 = vlaneseq
      %v1220 = vshrl.u32 %v1219, 7
      %v1221 = vsub.s32 0, %v1220
      %v1222 = vrot.slane %v1062, %v1221
      %v1223 = vlaneseq
      %v1224 = vshrl.u32 %v1223, 7
      %v1225 = vsub.s32 0, %v1224
      %v1226 = vrot.slane %v1066, %v1225
      %v1227 = vlaneseq
      %v1228 = vshrl.u32 %v1227, 7
      %v1229 = vsub.s32 0, %v1228
      %v1230 = vrot.slane %v1070, %v1229
      %v1231 = vlaneseq
      %v1232 = vshrl.u32 %v1231, 7
      %v1233 = vsub.s32 0, %v1232
      %v1234 = vrot.slane %v1074, %v1233
      %v1235 = vlaneseq
      %v1236 = vshrl.u32 %v1235, 7
      %v1237 = vsub.s32 0, %v1236
      %v1238 = vrot.slane %v1078, %v1237
      %v1239 = vlaneseq
      %v1240 = vshrl.u32 %v1239, 7
      %v1241 = vsub.s32 0, %v1240
      %v1242 = vrot.slane %v1082, %v1241
      %v1243 = vlaneseq
      %v1244 = vshrl.u32 %v1243, 7
      %v1245 = vsub.s32 0, %v1244
      %v1246 = vrot.slane %v1086, %v1245
      %v1247 = vlaneseq
      %v1248 = vshrl.u32 %v1247, 7
      %v1249 = vsub.s32 0, %v1248
      %v1250 = vrot.slane %v1090, %v1249
      %v1251 = vlaneseq
      %v1252 = vshrl.u32 %v1251, 7
      %v1253 = vsub.s32 0, %v1252
      %v1254 = vrot.slane %v1094, %v1253
      %v1255 = vlaneseq
      %v1256 = vshrl.u32 %v1255, 7
      %v1257 = vsub.s32 0, %v1256
      %v1258 = vrot.slane %v1098, %v1257
      %v1259 = vlaneseq
      %v1260 = vshrl.u32 %v1259, 7
      %v1261 = vsub.s32 0, %v1260
      %v1262 = vrot.slane %v1102, %v1261
      %v1263 = vlaneseq
      %v1264 = vshrl.u32 %v1263, 7
      %v1265 = vsub.s32 0, %v1264
      %v1266 = vrot.slane %v1106, %v1265
      %v1267 = vlaneseq
      %v1268 = vshrl.u32 %v1267, 7
      %v1269 = vsub.s32 0, %v1268
      %v1270 = vrot.slane %v1110, %v1269
      %v1271 = vlaneseq
      %v1272 = vshrl.u32 %v1271, 7
      %v1273 = vsub.s32 0, %v1272
      %v1274 = vrot.slane %v1114, %v1273
      %v1275 = vlaneseq
      %v1276 = vshrl.u32 %v1275, 7
      %v1277 = vsub.s32 0, %v1276
      %v1278 = vrot.slane %v1118, %v1277
      %v1279 = vlaneseq
      %v1280 = vshrl.u32 %v1279, 7
      %v1281 = vsub.s32 0, %v1280
      %v1282 = vrot.slane %v1122, %v1281
      %v1283 = vlaneseq
      %v1284 = vshrl.u32 %v1283, 7
      %v1285 = vsub.s32 0, %v1284
      %v1286 = vrot.slane %v1126, %v1285
      %v1287 = vlaneseq
      %v1288 = vshrl.u32 %v1287, 7
      %v1289 = vsub.s32 0, %v1288
      %v1290 = vrot.slane %v1130, %v1289
      %v1291 = vlaneseq
      %v1292 = vshrl.u32 %v1291, 7
      %v1293 = vsub.s32 0, %v1292
      %v1294 = vrot.slane %v1134, %v1293
      %v1295 = vlaneseq
      %v1296 = vshrl.u32 %v1295, 7
      %v1297 = vsub.s32 0, %v1296
      %v1298 = vrot.slane %v1138, %v1297
      %v1299 = vlaneseq
      %v1300 = vshrl.u32 %v1299, 7
      %v1301 = vsub.s32 0, %v1300
      %v1302 = vrot.slane %v1142, %v1301
      %v1303 = vlaneseq
      %v1304 = vshrl.u32 %v1303, 7
      %v1305 = vsub.s32 0, %v1304
      %v1306 = vrot.slane %v1146, %v1305
      %v1307 = vlaneseq
      %v1308 = vshrl.u32 %v1307, 7
      %v1309 = vsub.s32 0, %v1308
      %v1310 = vrot.slane %v1150, %v1309
      %v1311 = vmul.f32 %v919, %v1186
      %v1312 = vmul.f32 %v920, %v1190
      %v1313 = vmul.f32 %v921, %v1194
      %v1314 = vmul.f32 %v922, %v1198
      %v1315 = vmul.f32 %v923, %v1202
      %v1316 = vmul.f32 %v924, %v1206
      %v1317 = vmul.f32 %v925, %v1210
      %v1318 = vmul.f32 %v926, %v1214
      %v1319 = vmul.f32 %v927, %v1218
      %v1320 = vmul.f32 %v928, %v1222
      %v1321 = vmul.f32 %v929, %v1226
      %v1322 = vmul.f32 %v930, %v1230
      %v1323 = vmul.f32 %v931, %v1234
      %v1324 = vmul.f32 %v932, %v1238
      %v1325 = vmul.f32 %v933, %v1242
      %v1326 = vmul.f32 %v934, %v1246
      %v1327 = vmul.f32 %v935, %v1250
      %v1328 = vmul.f32 %v936, %v1254
      %v1329 = vmul.f32 %v937, %v1258
      %v1330 = vmul.f32 %v938, %v1262
      %v1331 = vmul.f32 %v939, %v1266
      %v1332 = vmul.f32 %v940, %v1270
      %v1333 = vmul.f32 %v941, %v1274
      %v1334 = vmul.f32 %v942, %v1278
      %v1335 = vmul.f32 %v943, %v1282
      %v1336 = vmul.f32 %v944, %v1286
      %v1337 = vmul.f32 %v945, %v1290
      %v1338 = vmul.f32 %v946, %v1294
      %v1339 = vmul.f32 %v947, %v1298
      %v1340 = vmul.f32 %v948, %v1302
      %v1341 = vmul.f32 %v949, %v1306
      %v1342 = vmul.f32 %v950, %v1310
      %v1343 = vmul.f32 %v951, %v1186
      %v1344 = vmul.f32 %v952, %v1190
      %v1345 = vmul.f32 %v953, %v1194
      %v1346 = vmul.f32 %v954, %v1198
      %v1347 = vmul.f32 %v955, %v1202
      %v1348 = vmul.f32 %v956, %v1206
      %v1349 = vmul.f32 %v957, %v1210
      %v1350 = vmul.f32 %v958, %v1214
      %v1351 = vmul.f32 %v959, %v1218
      %v1352 = vmul.f32 %v960, %v1222
      %v1353 = vmul.f32 %v961, %v1226
      %v1354 = vmul.f32 %v962, %v1230
      %v1355 = vmul.f32 %v963, %v1234
      %v1356 = vmul.f32 %v964, %v1238
      %v1357 = vmul.f32 %v965, %v1242
      %v1358 = vmul.f32 %v966, %v1246
      %v1359 = vmul.f32 %v967, %v1250
      %v1360 = vmul.f32 %v968, %v1254
      %v1361 = vmul.f32 %v969, %v1258
      %v1362 = vmul.f32 %v970, %v1262
      %v1363 = vmul.f32 %v971, %v1266
      %v1364 = vmul.f32 %v972, %v1270
      %v1365 = vmul.f32 %v973, %v1274
      %v1366 = vmul.f32 %v974, %v1278
      %v1367 = vmul.f32 %v975, %v1282
      %v1368 = vmul.f32 %v976, %v1286
      %v1369 = vmul.f32 %v977, %v1290
      %v1370 = vmul.f32 %v978, %v1294
      %v1371 = vmul.f32 %v979, %v1298
      %v1372 = vmul.f32 %v980, %v1302
      %v1373 = vmul.f32 %v981, %v1306
      %v1374 = vmul.f32 %v982, %v1310
      %v1375 = vmul.f32 %v983, %v1186
      %v1376 = vmul.f32 %v984, %v1190
      %v1377 = vmul.f32 %v985, %v1194
      %v1378 = vmul.f32 %v986, %v1198
      %v1379 = vmul.f32 %v987, %v1202
      %v1380 = vmul.f32 %v988, %v1206
      %v1381 = vmul.f32 %v989, %v1210
      %v1382 = vmul.f32 %v990, %v1214
      %v1383 = vmul.f32 %v991, %v1218
      %v1384 = vmul.f32 %v992, %v1222
      %v1385 = vmul.f32 %v993, %v1226
      %v1386 = vmul.f32 %v994, %v1230
      %v1387 = vmul.f32 %v995, %v1234
      %v1388 = vmul.f32 %v996, %v1238
      %v1389 = vmul.f32 %v997, %v1242
      %v1390 = vmul.f32 %v998, %v1246
      %v1391 = vmul.f32 %v999, %v1250
      %v1392 = vmul.f32 %v1000, %v1254
      %v1393 = vmul.f32 %v1001, %v1258
      %v1394 = vmul.f32 %v1002, %v1262
      %v1395 = vmul.f32 %v1003, %v1266
      %v1396 = vmul.f32 %v1004, %v1270
      %v1397 = vmul.f32 %v1005, %v1274
      %v1398 = vmul.f32 %v1006, %v1278
      %v1399 = vmul.f32 %v1007, %v1282
      %v1400 = vmul.f32 %v1008, %v1286
      %v1401 = vmul.f32 %v1009, %v1290
      %v1402 = vmul.f32 %v1010, %v1294
      %v1403 = vmul.f32 %v1011, %v1298
      %v1404 = vmul.f32 %v1012, %v1302
      %v1405 = vmul.f32 %v1013, %v1306
      %v1406 = vmul.f32 %v1014, %v1310
      %v1407 = vmax.f32 %v316, %v348
      %vm1408 = vcmask 1044480
      %v1409 = vsel %vm1408, %v380, -inf
      %v1410 = vmax.f32 %v1407, %v1409
      %v1411 = vrot.slane %v1410, 4
      %v1412 = vmax.f32 %v1410, %v1411
      %v1413 = vrot.slane %v1412, 2
      %v1414 = vmax.f32 %v1412, %v1413
      %v1415 = vrot.slane %v1414, 1
      %v1416 = vmax.f32 %v1414, %v1415
      %v1417 = vmax.f32 %v317, %v349
      %v1418 = vsel %vm1408, %v381, -inf
      %v1419 = vmax.f32 %v1417, %v1418
      %v1420 = vrot.slane %v1419, 4
      %v1421 = vmax.f32 %v1419, %v1420
      %v1422 = vrot.slane %v1421, 2
      %v1423 = vmax.f32 %v1421, %v1422
      %v1424 = vrot.slane %v1423, 1
      %v1425 = vmax.f32 %v1423, %v1424
      %v1426 = vmax.f32 %v318, %v350
      %v1427 = vsel %vm1408, %v382, -inf
      %v1428 = vmax.f32 %v1426, %v1427
      %v1429 = vrot.slane %v1428, 4
      %v1430 = vmax.f32 %v1428, %v1429
      %v1431 = vrot.slane %v1430, 2
      %v1432 = vmax.f32 %v1430, %v1431
      %v1433 = vrot.slane %v1432, 1
      %v1434 = vmax.f32 %v1432, %v1433
      %v1435 = vmax.f32 %v319, %v351
      %v1436 = vsel %vm1408, %v383, -inf
      %v1437 = vmax.f32 %v1435, %v1436
      %v1438 = vrot.slane %v1437, 4
      %v1439 = vmax.f32 %v1437, %v1438
      %v1440 = vrot.slane %v1439, 2
      %v1441 = vmax.f32 %v1439, %v1440
      %v1442 = vrot.slane %v1441, 1
      %v1443 = vmax.f32 %v1441, %v1442
      %v1444 = vmax.f32 %v320, %v352
      %v1445 = vsel %vm1408, %v384, -inf
      %v1446 = vmax.f32 %v1444, %v1445
      %v1447 = vrot.slane %v1446, 4
      %v1448 = vmax.f32 %v1446, %v1447
      %v1449 = vrot.slane %v1448, 2
      %v1450 = vmax.f32 %v1448, %v1449
      %v1451 = vrot.slane %v1450, 1
      %v1452 = vmax.f32 %v1450, %v1451
      %v1453 = vmax.f32 %v321, %v353
      %v1454 = vsel %vm1408, %v385, -inf
      %v1455 = vmax.f32 %v1453, %v1454
      %v1456 = vrot.slane %v1455, 4
      %v1457 = vmax.f32 %v1455, %v1456
      %v1458 = vrot.slane %v1457, 2
      %v1459 = vmax.f32 %v1457, %v1458
      %v1460 = vrot.slane %v1459, 1
      %v1461 = vmax.f32 %v1459, %v1460
      %v1462 = vmax.f32 %v322, %v354
      %v1463 = vsel %vm1408, %v386, -inf
      %v1464 = vmax.f32 %v1462, %v1463
      %v1465 = vrot.slane %v1464, 4
      %v1466 = vmax.f32 %v1464, %v1465
      %v1467 = vrot.slane %v1466, 2
      %v1468 = vmax.f32 %v1466, %v1467
      %v1469 = vrot.slane %v1468, 1
      %v1470 = vmax.f32 %v1468, %v1469
      %v1471 = vmax.f32 %v323, %v355
      %v1472 = vsel %vm1408, %v387, -inf
      %v1473 = vmax.f32 %v1471, %v1472
      %v1474 = vrot.slane %v1473, 4
      %v1475 = vmax.f32 %v1473, %v1474
      %v1476 = vrot.slane %v1475, 2
      %v1477 = vmax.f32 %v1475, %v1476
      %v1478 = vrot.slane %v1477, 1
      %v1479 = vmax.f32 %v1477, %v1478
      %v1480 = vmax.f32 %v324, %v356
      %v1481 = vsel %vm1408, %v388, -inf
      %v1482 = vmax.f32 %v1480, %v1481
      %v1483 = vrot.slane %v1482, 4
      %v1484 = vmax.f32 %v1482, %v1483
      %v1485 = vrot.slane %v1484, 2
      %v1486 = vmax.f32 %v1484, %v1485
      %v1487 = vrot.slane %v1486, 1
      %v1488 = vmax.f32 %v1486, %v1487
      %v1489 = vmax.f32 %v325, %v357
      %v1490 = vsel %vm1408, %v389, -inf
      %v1491 = vmax.f32 %v1489, %v1490
      %v1492 = vrot.slane %v1491, 4
      %v1493 = vmax.f32 %v1491, %v1492
      %v1494 = vrot.slane %v1493, 2
      %v1495 = vmax.f32 %v1493, %v1494
      %v1496 = vrot.slane %v1495, 1
      %v1497 = vmax.f32 %v1495, %v1496
      %v1498 = vmax.f32 %v326, %v358
      %v1499 = vsel %vm1408, %v390, -inf
      %v1500 = vmax.f32 %v1498, %v1499
      %v1501 = vrot.slane %v1500, 4
      %v1502 = vmax.f32 %v1500, %v1501
      %v1503 = vrot.slane %v1502, 2
      %v1504 = vmax.f32 %v1502, %v1503
      %v1505 = vrot.slane %v1504, 1
      %v1506 = vmax.f32 %v1504, %v1505
      %v1507 = vmax.f32 %v327, %v359
      %v1508 = vsel %vm1408, %v391, -inf
      %v1509 = vmax.f32 %v1507, %v1508
      %v1510 = vrot.slane %v1509, 4
      %v1511 = vmax.f32 %v1509, %v1510
      %v1512 = vrot.slane %v1511, 2
      %v1513 = vmax.f32 %v1511, %v1512
      %v1514 = vrot.slane %v1513, 1
      %v1515 = vmax.f32 %v1513, %v1514
      %v1516 = vmax.f32 %v328, %v360
      %v1517 = vsel %vm1408, %v392, -inf
      %v1518 = vmax.f32 %v1516, %v1517
      %v1519 = vrot.slane %v1518, 4
      %v1520 = vmax.f32 %v1518, %v1519
      %v1521 = vrot.slane %v1520, 2
      %v1522 = vmax.f32 %v1520, %v1521
      %v1523 = vrot.slane %v1522, 1
      %v1524 = vmax.f32 %v1522, %v1523
      %v1525 = vmax.f32 %v329, %v361
      %v1526 = vsel %vm1408, %v393, -inf
      %v1527 = vmax.f32 %v1525, %v1526
      %v1528 = vrot.slane %v1527, 4
      %v1529 = vmax.f32 %v1527, %v1528
      %v1530 = vrot.slane %v1529, 2
      %v1531 = vmax.f32 %v1529, %v1530
      %v1532 = vrot.slane %v1531, 1
      %v1533 = vmax.f32 %v1531, %v1532
      %v1534 = vmax.f32 %v330, %v362
      %v1535 = vsel %vm1408, %v394, -inf
      %v1536 = vmax.f32 %v1534, %v1535
      %v1537 = vrot.slane %v1536, 4
      %v1538 = vmax.f32 %v1536, %v1537
      %v1539 = vrot.slane %v1538, 2
      %v1540 = vmax.f32 %v1538, %v1539
      %v1541 = vrot.slane %v1540, 1
      %v1542 = vmax.f32 %v1540, %v1541
      %v1543 = vmax.f32 %v331, %v363
      %v1544 = vsel %vm1408, %v395, -inf
      %v1545 = vmax.f32 %v1543, %v1544
      %v1546 = vrot.slane %v1545, 4
      %v1547 = vmax.f32 %v1545, %v1546
      %v1548 = vrot.slane %v1547, 2
      %v1549 = vmax.f32 %v1547, %v1548
      %v1550 = vrot.slane %v1549, 1
      %v1551 = vmax.f32 %v1549, %v1550
      %v1552 = vmax.f32 %v332, %v364
      %v1553 = vsel %vm1408, %v396, -inf
      %v1554 = vmax.f32 %v1552, %v1553
      %v1555 = vrot.slane %v1554, 4
      %v1556 = vmax.f32 %v1554, %v1555
      %v1557 = vrot.slane %v1556, 2
      %v1558 = vmax.f32 %v1556, %v1557
      %v1559 = vrot.slane %v1558, 1
      %v1560 = vmax.f32 %v1558, %v1559
      %v1561 = vmax.f32 %v333, %v365
      %v1562 = vsel %vm1408, %v397, -inf
      %v1563 = vmax.f32 %v1561, %v1562
      %v1564 = vrot.slane %v1563, 4
      %v1565 = vmax.f32 %v1563, %v1564
      %v1566 = vrot.slane %v1565, 2
      %v1567 = vmax.f32 %v1565, %v1566
      %v1568 = vrot.slane %v1567, 1
      %v1569 = vmax.f32 %v1567, %v1568
      %v1570 = vmax.f32 %v334, %v366
      %v1571 = vsel %vm1408, %v398, -inf
      %v1572 = vmax.f32 %v1570, %v1571
      %v1573 = vrot.slane %v1572, 4
      %v1574 = vmax.f32 %v1572, %v1573
      %v1575 = vrot.slane %v1574, 2
      %v1576 = vmax.f32 %v1574, %v1575
      %v1577 = vrot.slane %v1576, 1
      %v1578 = vmax.f32 %v1576, %v1577
      %v1579 = vmax.f32 %v335, %v367
      %v1580 = vsel %vm1408, %v399, -inf
      %v1581 = vmax.f32 %v1579, %v1580
      %v1582 = vrot.slane %v1581, 4
      %v1583 = vmax.f32 %v1581, %v1582
      %v1584 = vrot.slane %v1583, 2
      %v1585 = vmax.f32 %v1583, %v1584
      %v1586 = vrot.slane %v1585, 1
      %v1587 = vmax.f32 %v1585, %v1586
      %v1588 = vmax.f32 %v336, %v368
      %v1589 = vsel %vm1408, %v400, -inf
      %v1590 = vmax.f32 %v1588, %v1589
      %v1591 = vrot.slane %v1590, 4
      %v1592 = vmax.f32 %v1590, %v1591
      %v1593 = vrot.slane %v1592, 2
      %v1594 = vmax.f32 %v1592, %v1593
      %v1595 = vrot.slane %v1594, 1
      %v1596 = vmax.f32 %v1594, %v1595
      %v1597 = vmax.f32 %v337, %v369
      %v1598 = vsel %vm1408, %v401, -inf
      %v1599 = vmax.f32 %v1597, %v1598
      %v1600 = vrot.slane %v1599, 4
      %v1601 = vmax.f32 %v1599, %v1600
      %v1602 = vrot.slane %v1601, 2
      %v1603 = vmax.f32 %v1601, %v1602
      %v1604 = vrot.slane %v1603, 1
      %v1605 = vmax.f32 %v1603, %v1604
      %v1606 = vmax.f32 %v338, %v370
      %v1607 = vsel %vm1408, %v402, -inf
      %v1608 = vmax.f32 %v1606, %v1607
      %v1609 = vrot.slane %v1608, 4
      %v1610 = vmax.f32 %v1608, %v1609
      %v1611 = vrot.slane %v1610, 2
      %v1612 = vmax.f32 %v1610, %v1611
      %v1613 = vrot.slane %v1612, 1
      %v1614 = vmax.f32 %v1612, %v1613
      %v1615 = vmax.f32 %v339, %v371
      %v1616 = vsel %vm1408, %v403, -inf
      %v1617 = vmax.f32 %v1615, %v1616
      %v1618 = vrot.slane %v1617, 4
      %v1619 = vmax.f32 %v1617, %v1618
      %v1620 = vrot.slane %v1619, 2
      %v1621 = vmax.f32 %v1619, %v1620
      %v1622 = vrot.slane %v1621, 1
      %v1623 = vmax.f32 %v1621, %v1622
      %v1624 = vmax.f32 %v340, %v372
      %v1625 = vsel %vm1408, %v404, -inf
      %v1626 = vmax.f32 %v1624, %v1625
      %v1627 = vrot.slane %v1626, 4
      %v1628 = vmax.f32 %v1626, %v1627
      %v1629 = vrot.slane %v1628, 2
      %v1630 = vmax.f32 %v1628, %v1629
      %v1631 = vrot.slane %v1630, 1
      %v1632 = vmax.f32 %v1630, %v1631
      %v1633 = vmax.f32 %v341, %v373
      %v1634 = vsel %vm1408, %v405, -inf
      %v1635 = vmax.f32 %v1633, %v1634
      %v1636 = vrot.slane %v1635, 4
      %v1637 = vmax.f32 %v1635, %v1636
      %v1638 = vrot.slane %v1637, 2
      %v1639 = vmax.f32 %v1637, %v1638
      %v1640 = vrot.slane %v1639, 1
      %v1641 = vmax.f32 %v1639, %v1640
      %v1642 = vmax.f32 %v342, %v374
      %v1643 = vsel %vm1408, %v406, -inf
      %v1644 = vmax.f32 %v1642, %v1643
      %v1645 = vrot.slane %v1644, 4
      %v1646 = vmax.f32 %v1644, %v1645
      %v1647 = vrot.slane %v1646, 2
      %v1648 = vmax.f32 %v1646, %v1647
      %v1649 = vrot.slane %v1648, 1
      %v1650 = vmax.f32 %v1648, %v1649
      %v1651 = vmax.f32 %v343, %v375
      %v1652 = vsel %vm1408, %v407, -inf
      %v1653 = vmax.f32 %v1651, %v1652
      %v1654 = vrot.slane %v1653, 4
      %v1655 = vmax.f32 %v1653, %v1654
      %v1656 = vrot.slane %v1655, 2
      %v1657 = vmax.f32 %v1655, %v1656
      %v1658 = vrot.slane %v1657, 1
      %v1659 = vmax.f32 %v1657, %v1658
      %v1660 = vmax.f32 %v344, %v376
      %v1661 = vsel %vm1408, %v408, -inf
      %v1662 = vmax.f32 %v1660, %v1661
      %v1663 = vrot.slane %v1662, 4
      %v1664 = vmax.f32 %v1662, %v1663
      %v1665 = vrot.slane %v1664, 2
      %v1666 = vmax.f32 %v1664, %v1665
      %v1667 = vrot.slane %v1666, 1
      %v1668 = vmax.f32 %v1666, %v1667
      %v1669 = vmax.f32 %v345, %v377
      %v1670 = vsel %vm1408, %v409, -inf
      %v1671 = vmax.f32 %v1669, %v1670
      %v1672 = vrot.slane %v1671, 4
      %v1673 = vmax.f32 %v1671, %v1672
      %v1674 = vrot.slane %v1673, 2
      %v1675 = vmax.f32 %v1673, %v1674
      %v1676 = vrot.slane %v1675, 1
      %v1677 = vmax.f32 %v1675, %v1676
      %v1678 = vmax.f32 %v346, %v378
      %v1679 = vsel %vm1408, %v410, -inf
      %v1680 = vmax.f32 %v1678, %v1679
      %v1681 = vrot.slane %v1680, 4
      %v1682 = vmax.f32 %v1680, %v1681
      %v1683 = vrot.slane %v1682, 2
      %v1684 = vmax.f32 %v1682, %v1683
      %v1685 = vrot.slane %v1684, 1
      %v1686 = vmax.f32 %v1684, %v1685
      %v1687 = vmax.f32 %v347, %v379
      %v1688 = vsel %vm1408, %v411, -inf
      %v1689 = vmax.f32 %v1687, %v1688
      %v1690 = vrot.slane %v1689, 4
      %v1691 = vmax.f32 %v1689, %v1690
      %v1692 = vrot.slane %v1691, 2
      %v1693 = vmax.f32 %v1691, %v1692
      %v1694 = vrot.slane %v1693, 1
      %v1695 = vmax.f32 %v1693, %v1694
      %v1696 = vsub.f32 %v316, %v1416
      %v1697 = vsub.f32 %v317, %v1425
      %v1698 = vsub.f32 %v318, %v1434
      %v1699 = vsub.f32 %v319, %v1443
      %v1700 = vsub.f32 %v320, %v1452
      %v1701 = vsub.f32 %v321, %v1461
      %v1702 = vsub.f32 %v322, %v1470
      %v1703 = vsub.f32 %v323, %v1479
      %v1704 = vsub.f32 %v324, %v1488
      %v1705 = vsub.f32 %v325, %v1497
      %v1706 = vsub.f32 %v326, %v1506
      %v1707 = vsub.f32 %v327, %v1515
      %v1708 = vsub.f32 %v328, %v1524
      %v1709 = vsub.f32 %v329, %v1533
      %v1710 = vsub.f32 %v330, %v1542
      %v1711 = vsub.f32 %v331, %v1551
      %v1712 = vsub.f32 %v332, %v1560
      %v1713 = vsub.f32 %v333, %v1569
      %v1714 = vsub.f32 %v334, %v1578
      %v1715 = vsub.f32 %v335, %v1587
      %v1716 = vsub.f32 %v336, %v1596
      %v1717 = vsub.f32 %v337, %v1605
      %v1718 = vsub.f32 %v338, %v1614
      %v1719 = vsub.f32 %v339, %v1623
      %v1720 = vsub.f32 %v340, %v1632
      %v1721 = vsub.f32 %v341, %v1641
      %v1722 = vsub.f32 %v342, %v1650
      %v1723 = vsub.f32 %v343, %v1659
      %v1724 = vsub.f32 %v344, %v1668
      %v1725 = vsub.f32 %v345, %v1677
      %v1726 = vsub.f32 %v346, %v1686
      %v1727 = vsub.f32 %v347, %v1695
      %v1728 = vsub.f32 %v348, %v1416
      %v1729 = vsub.f32 %v349, %v1425
      %v1730 = vsub.f32 %v350, %v1434
      %v1731 = vsub.f32 %v351, %v1443
      %v1732 = vsub.f32 %v352, %v1452
      %v1733 = vsub.f32 %v353, %v1461
      %v1734 = vsub.f32 %v354, %v1470
      %v1735 = vsub.f32 %v355, %v1479
      %v1736 = vsub.f32 %v356, %v1488
      %v1737 = vsub.f32 %v357, %v1497
      %v1738 = vsub.f32 %v358, %v1506
      %v1739 = vsub.f32 %v359, %v1515
      %v1740 = vsub.f32 %v360, %v1524
      %v1741 = vsub.f32 %v361, %v1533
      %v1742 = vsub.f32 %v362, %v1542
      %v1743 = vsub.f32 %v363, %v1551
      %v1744 = vsub.f32 %v364, %v1560
      %v1745 = vsub.f32 %v365, %v1569
      %v1746 = vsub.f32 %v366, %v1578
      %v1747 = vsub.f32 %v367, %v1587
      %v1748 = vsub.f32 %v368, %v1596
      %v1749 = vsub.f32 %v369, %v1605
      %v1750 = vsub.f32 %v370, %v1614
      %v1751 = vsub.f32 %v371, %v1623
      %v1752 = vsub.f32 %v372, %v1632
      %v1753 = vsub.f32 %v373, %v1641
      %v1754 = vsub.f32 %v374, %v1650
      %v1755 = vsub.f32 %v375, %v1659
      %v1756 = vsub.f32 %v376, %v1668
      %v1757 = vsub.f32 %v377, %v1677
      %v1758 = vsub.f32 %v378, %v1686
      %v1759 = vsub.f32 %v379, %v1695
      %v1760 = vsub.f32 %v380, %v1416
      %v1761 = vsub.f32 %v381, %v1425
      %v1762 = vsub.f32 %v382, %v1434
      %v1763 = vsub.f32 %v383, %v1443
      %v1764 = vsub.f32 %v384, %v1452
      %v1765 = vsub.f32 %v385, %v1461
      %v1766 = vsub.f32 %v386, %v1470
      %v1767 = vsub.f32 %v387, %v1479
      %v1768 = vsub.f32 %v388, %v1488
      %v1769 = vsub.f32 %v389, %v1497
      %v1770 = vsub.f32 %v390, %v1506
      %v1771 = vsub.f32 %v391, %v1515
      %v1772 = vsub.f32 %v392, %v1524
      %v1773 = vsub.f32 %v393, %v1533
      %v1774 = vsub.f32 %v394, %v1542
      %v1775 = vsub.f32 %v395, %v1551
      %v1776 = vsub.f32 %v396, %v1560
      %v1777 = vsub.f32 %v397, %v1569
      %v1778 = vsub.f32 %v398, %v1578
      %v1779 = vsub.f32 %v399, %v1587
      %v1780 = vsub.f32 %v400, %v1596
      %v1781 = vsub.f32 %v401, %v1605
      %v1782 = vsub.f32 %v402, %v1614
      %v1783 = vsub.f32 %v403, %v1623
      %v1784 = vsub.f32 %v404, %v1632
      %v1785 = vsub.f32 %v405, %v1641
      %v1786 = vsub.f32 %v406, %v1650
      %v1787 = vsub.f32 %v407, %v1659
      %v1788 = vsub.f32 %v408, %v1668
      %v1789 = vsub.f32 %v409, %v1677
      %v1790 = vsub.f32 %v410, %v1686
      %v1791 = vsub.f32 %v411, %v1695
      %v1792 = vmul.f32 %v1696, 1.442695
      %v1793 = vpow.pop %v1792
      %v1794 = vmul.f32 %v1697, 1.442695
      %v1795 = vpow.pop %v1794
      %v1796 = vmul.f32 %v1698, 1.442695
      %v1797 = vpow.pop %v1796
      %v1798 = vmul.f32 %v1699, 1.442695
      %v1799 = vpow.pop %v1798
      %v1800 = vmul.f32 %v1700, 1.442695
      %v1801 = vpow.pop %v1800
      %v1802 = vmul.f32 %v1701, 1.442695
      %v1803 = vpow.pop %v1802
      %v1804 = vmul.f32 %v1702, 1.442695
      %v1805 = vpow.pop %v1804
      %v1806 = vmul.f32 %v1703, 1.442695
      %v1807 = vpow.pop %v1806
      %v1808 = vmul.f32 %v1704, 1.442695
      %v1809 = vpow.pop %v1808
      %v1810 = vmul.f32 %v1705, 1.442695
      %v1811 = vpow.pop %v1810
      %v1812 = vmul.f32 %v1706, 1.442695
      %v1813 = vpow.pop %v1812
      %v1814 = vmul.f32 %v1707, 1.442695
      %v1815 = vpow.pop %v1814
      %v1816 = vmul.f32 %v1708, 1.442695
      %v1817 = vpow.pop %v1816
      %v1818 = vmul.f32 %v1709, 1.442695
      %v1819 = vpow.pop %v1818
      %v1820 = vmul.f32 %v1710, 1.442695
      %v1821 = vpow.pop %v1820
      %v1822 = vmul.f32 %v1711, 1.442695
      %v1823 = vpow.pop %v1822
      %v1824 = vmul.f32 %v1712, 1.442695
      %v1825 = vpow.pop %v1824
      %v1826 = vmul.f32 %v1713, 1.442695
      %v1827 = vpow.pop %v1826
      %v1828 = vmul.f32 %v1714, 1.442695
      %v1829 = vpow.pop %v1828
      %v1830 = vmul.f32 %v1715, 1.442695
      %v1831 = vpow.pop %v1830
      %v1832 = vmul.f32 %v1716, 1.442695
      %v1833 = vpow.pop %v1832
      %v1834 = vmul.f32 %v1717, 1.442695
      %v1835 = vpow.pop %v1834
      %v1836 = vmul.f32 %v1718, 1.442695
      %v1837 = vpow.pop %v1836
      %v1838 = vmul.f32 %v1719, 1.442695
      %v1839 = vpow.pop %v1838
      %v1840 = vmul.f32 %v1720, 1.442695
      %v1841 = vpow.pop %v1840
      %v1842 = vmul.f32 %v1721, 1.442695
      %v1843 = vpow.pop %v1842
      %v1844 = vmul.f32 %v1722, 1.442695
      %v1845 = vpow.pop %v1844
      %v1846 = vmul.f32 %v1723, 1.442695
      %v1847 = vpow.pop %v1846
      %v1848 = vmul.f32 %v1724, 1.442695
      %v1849 = vpow.pop %v1848
      %v1850 = vmul.f32 %v1725, 1.442695
      %v1851 = vpow.pop %v1850
      %v1852 = vmul.f32 %v1726, 1.442695
      %v1853 = vpow.pop %v1852
      %v1854 = vmul.f32 %v1727, 1.442695
      %v1855 = vpow.pop %v1854
      %v1856 = vmul.f32 %v1728, 1.442695
      %v1857 = vpow.pop %v1856
      %v1858 = vmul.f32 %v1729, 1.442695
      %v1859 = vpow.pop %v1858
      %v1860 = vmul.f32 %v1730, 1.442695
      %v1861 = vpow.pop %v1860
      %v1862 = vmul.f32 %v1731, 1.442695
      %v1863 = vpow.pop %v1862
      %v1864 = vmul.f32 %v1732, 1.442695
      %v1865 = vpow.pop %v1864
      %v1866 = vmul.f32 %v1733, 1.442695
      %v1867 = vpow.pop %v1866
      %v1868 = vmul.f32 %v1734, 1.442695
      %v1869 = vpow.pop %v1868
      %v1870 = vmul.f32 %v1735, 1.442695
      %v1871 = vpow.pop %v1870
      %v1872 = vmul.f32 %v1736, 1.442695
      %v1873 = vpow.pop %v1872
      %v1874 = vmul.f32 %v1737, 1.442695
      %v1875 = vpow.pop %v1874
      %v1876 = vmul.f32 %v1738, 1.442695
      %v1877 = vpow.pop %v1876
      %v1878 = vmul.f32 %v1739, 1.442695
      %v1879 = vpow.pop %v1878
      %v1880 = vmul.f32 %v1740, 1.442695
      %v1881 = vpow.pop %v1880
      %v1882 = vmul.f32 %v1741, 1.442695
      %v1883 = vpow.pop %v1882
      %v1884 = vmul.f32 %v1742, 1.442695
      %v1885 = vpow.pop %v1884
      %v1886 = vmul.f32 %v1743, 1.442695
      %v1887 = vpow.pop %v1886
      %v1888 = vmul.f32 %v1744, 1.442695
      %v1889 = vpow.pop %v1888
      %v1890 = vmul.f32 %v1745, 1.442695
      %v1891 = vpow.pop %v1890
      %v1892 = vmul.f32 %v1746, 1.442695
      %v1893 = vpow.pop %v1892
      %v1894 = vmul.f32 %v1747, 1.442695
      %v1895 = vpow.pop %v1894
      %v1896 = vmul.f32 %v1748, 1.442695
      %v1897 = vpow.pop %v1896
      %v1898 = vmul.f32 %v1749, 1.442695
      %v1899 = vpow.pop %v1898
      %v1900 = vmul.f32 %v1750, 1.442695
      %v1901 = vpow.pop %v1900
      %v1902 = vmul.f32 %v1751, 1.442695
      %v1903 = vpow.pop %v1902
      %v1904 = vmul.f32 %v1752, 1.442695
      %v1905 = vpow.pop %v1904
      %v1906 = vmul.f32 %v1753, 1.442695
      %v1907 = vpow.pop %v1906
      %v1908 = vmul.f32 %v1754, 1.442695
      %v1909 = vpow.pop %v1908
      %v1910 = vmul.f32 %v1755, 1.442695
      %v1911 = vpow.pop %v1910
      %v1912 = vmul.f32 %v1756, 1.442695
      %v1913 = vpow.pop %v1912
      %v1914 = vmul.f32 %v1757, 1.442695
      %v1915 = vpow.pop %v1914
      %v1916 = vmul.f32 %v1758, 1.442695
      %v1917 = vpow.pop %v1916
      %v1918 = vmul.f32 %v1759, 1.442695
      %v1919 = vpow.pop %v1918
      %v1920 = vmul.f32 %v1760, 1.442695
      %v1921 = vpow.pop %v1920
      %v1922 = vmul.f32 %v1761, 1.442695
      %v1923 = vpow.pop %v1922
      %v1924 = vmul.f32 %v1762, 1.442695
      %v1925 = vpow.pop %v1924
      %v1926 = vmul.f32 %v1763, 1.442695
      %v1927 = vpow.pop %v1926
      %v1928 = vmul.f32 %v1764, 1.442695
      %v1929 = vpow.pop %v1928
      %v1930 = vmul.f32 %v1765, 1.442695
      %v1931 = vpow.pop %v1930
      %v1932 = vmul.f32 %v1766, 1.442695
      %v1933 = vpow.pop %v1932
      %v1934 = vmul.f32 %v1767, 1.442695
      %v1935 = vpow.pop %v1934
      %v1936 = vmul.f32 %v1768, 1.442695
      %v1937 = vpow.pop %v1936
      %v1938 = vmul.f32 %v1769, 1.442695
      %v1939 = vpow.pop %v1938
      %v1940 = vmul.f32 %v1770, 1.442695
      %v1941 = vpow.pop %v1940
      %v1942 = vmul.f32 %v1771, 1.442695
      %v1943 = vpow.pop %v1942
      %v1944 = vmul.f32 %v1772, 1.442695
      %v1945 = vpow.pop %v1944
      %v1946 = vmul.f32 %v1773, 1.442695
      %v1947 = vpow.pop %v1946
      %v1948 = vmul.f32 %v1774, 1.442695
      %v1949 = vpow.pop %v1948
      %v1950 = vmul.f32 %v1775, 1.442695
      %v1951 = vpow.pop %v1950
      %v1952 = vmul.f32 %v1776, 1.442695
      %v1953 = vpow.pop %v1952
      %v1954 = vmul.f32 %v1777, 1.442695
      %v1955 = vpow.pop %v1954
      %v1956 = vmul.f32 %v1778, 1.442695
      %v1957 = vpow.pop %v1956
      %v1958 = vmul.f32 %v1779, 1.442695
      %v1959 = vpow.pop %v1958
      %v1960 = vmul.f32 %v1780, 1.442695
      %v1961 = vpow.pop %v1960
      %v1962 = vmul.f32 %v1781, 1.442695
      %v1963 = vpow.pop %v1962
      %v1964 = vmul.f32 %v1782, 1.442695
      %v1965 = vpow.pop %v1964
      %v1966 = vmul.f32 %v1783, 1.442695
      %v1967 = vpow.pop %v1966
      %v1968 = vmul.f32 %v1784, 1.442695
      %v1969 = vpow.pop %v1968
      %v1970 = vmul.f32 %v1785, 1.442695
      %v1971 = vpow.pop %v1970
      %v1972 = vmul.f32 %v1786, 1.442695
      %v1973 = vpow.pop %v1972
      %v1974 = vmul.f32 %v1787, 1.442695
      %v1975 = vpow.pop %v1974
      %v1976 = vmul.f32 %v1788, 1.442695
      %v1977 = vpow.pop %v1976
      %v1978 = vmul.f32 %v1789, 1.442695
      %v1979 = vpow.pop %v1978
      %v1980 = vmul.f32 %v1790, 1.442695
      %v1981 = vpow.pop %v1980
      %v1982 = vmul.f32 %v1791, 1.442695
      %v1983 = vpow.pop %v1982
      %v1984 = vadd.f32 %v1793, %v1857
      %v1985 = vsel %vm1408, %v1921, 0.0
      %v1986 = vadd.f32 %v1984, %v1985
      %v1987 = vrot.slane %v1986, 4
      %v1988 = vadd.f32 %v1986, %v1987
      %v1989 = vrot.slane %v1988, 2
      %v1990 = vadd.f32 %v1988, %v1989
      %v1991 = vrot.slane %v1990, 1
      %v1992 = vadd.f32 %v1990, %v1991
      %v1993 = vadd.f32 %v1795, %v1859
      %v1994 = vsel %vm1408, %v1923, 0.0
      %v1995 = vadd.f32 %v1993, %v1994
      %v1996 = vrot.slane %v1995, 4
      %v1997 = vadd.f32 %v1995, %v1996
      %v1998 = vrot.slane %v1997, 2
      %v1999 = vadd.f32 %v1997, %v1998
      %v2000 = vrot.slane %v1999, 1
      %v2001 = vadd.f32 %v1999, %v2000
      %v2002 = vadd.f32 %v1797, %v1861
      %v2003 = vsel %vm1408, %v1925, 0.0
      %v2004 = vadd.f32 %v2002, %v2003
      %v2005 = vrot.slane %v2004, 4
      %v2006 = vadd.f32 %v2004, %v2005
      %v2007 = vrot.slane %v2006, 2
      %v2008 = vadd.f32 %v2006, %v2007
      %v2009 = vrot.slane %v2008, 1
      %v2010 = vadd.f32 %v2008, %v2009
      %v2011 = vadd.f32 %v1799, %v1863
      %v2012 = vsel %vm1408, %v1927, 0.0
      %v2013 = vadd.f32 %v2011, %v2012
      %v2014 = vrot.slane %v2013, 4
      %v2015 = vadd.f32 %v2013, %v2014
      %v2016 = vrot.slane %v2015, 2
      %v2017 = vadd.f32 %v2015, %v2016
      %v2018 = vrot.slane %v2017, 1
      %v2019 = vadd.f32 %v2017, %v2018
      %v2020 = vadd.f32 %v1801, %v1865
      %v2021 = vsel %vm1408, %v1929, 0.0
      %v2022 = vadd.f32 %v2020, %v2021
      %v2023 = vrot.slane %v2022, 4
      %v2024 = vadd.f32 %v2022, %v2023
      %v2025 = vrot.slane %v2024, 2
      %v2026 = vadd.f32 %v2024, %v2025
      %v2027 = vrot.slane %v2026, 1
      %v2028 = vadd.f32 %v2026, %v2027
      %v2029 = vadd.f32 %v1803, %v1867
      %v2030 = vsel %vm1408, %v1931, 0.0
      %v2031 = vadd.f32 %v2029, %v2030
      %v2032 = vrot.slane %v2031, 4
      %v2033 = vadd.f32 %v2031, %v2032
      %v2034 = vrot.slane %v2033, 2
      %v2035 = vadd.f32 %v2033, %v2034
      %v2036 = vrot.slane %v2035, 1
      %v2037 = vadd.f32 %v2035, %v2036
      %v2038 = vadd.f32 %v1805, %v1869
      %v2039 = vsel %vm1408, %v1933, 0.0
      %v2040 = vadd.f32 %v2038, %v2039
      %v2041 = vrot.slane %v2040, 4
      %v2042 = vadd.f32 %v2040, %v2041
      %v2043 = vrot.slane %v2042, 2
      %v2044 = vadd.f32 %v2042, %v2043
      %v2045 = vrot.slane %v2044, 1
      %v2046 = vadd.f32 %v2044, %v2045
      %v2047 = vadd.f32 %v1807, %v1871
      %v2048 = vsel %vm1408, %v1935, 0.0
      %v2049 = vadd.f32 %v2047, %v2048
      %v2050 = vrot.slane %v2049, 4
      %v2051 = vadd.f32 %v2049, %v2050
      %v2052 = vrot.slane %v2051, 2
      %v2053 = vadd.f32 %v2051, %v2052
      %v2054 = vrot.slane %v2053, 1
      %v2055 = vadd.f32 %v2053, %v2054
      %v2056 = vadd.f32 %v1809, %v1873
      %v2057 = vsel %vm1408, %v1937, 0.0
      %v2058 = vadd.f32 %v2056, %v2057
      %v2059 = vrot.slane %v2058, 4
      %v2060 = vadd.f32 %v2058, %v2059
      %v2061 = vrot.slane %v2060, 2
      %v2062 = vadd.f32 %v2060, %v2061
      %v2063 = vrot.slane %v2062, 1
      %v2064 = vadd.f32 %v2062, %v2063
      %v2065 = vadd.f32 %v1811, %v1875
      %v2066 = vsel %vm1408, %v1939, 0.0
      %v2067 = vadd.f32 %v2065, %v2066
      %v2068 = vrot.slane %v2067, 4
      %v2069 = vadd.f32 %v2067, %v2068
      %v2070 = vrot.slane %v2069, 2
      %v2071 = vadd.f32 %v2069, %v2070
      %v2072 = vrot.slane %v2071, 1
      %v2073 = vadd.f32 %v2071, %v2072
      %v2074 = vadd.f32 %v1813, %v1877
      %v2075 = vsel %vm1408, %v1941, 0.0
      %v2076 = vadd.f32 %v2074, %v2075
      %v2077 = vrot.slane %v2076, 4
      %v2078 = vadd.f32 %v2076, %v2077
      %v2079 = vrot.slane %v2078, 2
      %v2080 = vadd.f32 %v2078, %v2079
      %v2081 = vrot.slane %v2080, 1
      %v2082 = vadd.f32 %v2080, %v2081
      %v2083 = vadd.f32 %v1815, %v1879
      %v2084 = vsel %vm1408, %v1943, 0.0
      %v2085 = vadd.f32 %v2083, %v2084
      %v2086 = vrot.slane %v2085, 4
      %v2087 = vadd.f32 %v2085, %v2086
      %v2088 = vrot.slane %v2087, 2
      %v2089 = vadd.f32 %v2087, %v2088
      %v2090 = vrot.slane %v2089, 1
      %v2091 = vadd.f32 %v2089, %v2090
      %v2092 = vadd.f32 %v1817, %v1881
      %v2093 = vsel %vm1408, %v1945, 0.0
      %v2094 = vadd.f32 %v2092, %v2093
      %v2095 = vrot.slane %v2094, 4
      %v2096 = vadd.f32 %v2094, %v2095
      %v2097 = vrot.slane %v2096, 2
      %v2098 = vadd.f32 %v2096, %v2097
      %v2099 = vrot.slane %v2098, 1
      %v2100 = vadd.f32 %v2098, %v2099
      %v2101 = vadd.f32 %v1819, %v1883
      %v2102 = vsel %vm1408, %v1947, 0.0
      %v2103 = vadd.f32 %v2101, %v2102
      %v2104 = vrot.slane %v2103, 4
      %v2105 = vadd.f32 %v2103, %v2104
      %v2106 = vrot.slane %v2105, 2
      %v2107 = vadd.f32 %v2105, %v2106
      %v2108 = vrot.slane %v2107, 1
      %v2109 = vadd.f32 %v2107, %v2108
      %v2110 = vadd.f32 %v1821, %v1885
      %v2111 = vsel %vm1408, %v1949, 0.0
      %v2112 = vadd.f32 %v2110, %v2111
      %v2113 = vrot.slane %v2112, 4
      %v2114 = vadd.f32 %v2112, %v2113
      %v2115 = vrot.slane %v2114, 2
      %v2116 = vadd.f32 %v2114, %v2115
      %v2117 = vrot.slane %v2116, 1
      %v2118 = vadd.f32 %v2116, %v2117
      %v2119 = vadd.f32 %v1823, %v1887
      %v2120 = vsel %vm1408, %v1951, 0.0
      %v2121 = vadd.f32 %v2119, %v2120
      %v2122 = vrot.slane %v2121, 4
      %v2123 = vadd.f32 %v2121, %v2122
      %v2124 = vrot.slane %v2123, 2
      %v2125 = vadd.f32 %v2123, %v2124
      %v2126 = vrot.slane %v2125, 1
      %v2127 = vadd.f32 %v2125, %v2126
      %v2128 = vadd.f32 %v1825, %v1889
      %v2129 = vsel %vm1408, %v1953, 0.0
      %v2130 = vadd.f32 %v2128, %v2129
      %v2131 = vrot.slane %v2130, 4
      %v2132 = vadd.f32 %v2130, %v2131
      %v2133 = vrot.slane %v2132, 2
      %v2134 = vadd.f32 %v2132, %v2133
      %v2135 = vrot.slane %v2134, 1
      %v2136 = vadd.f32 %v2134, %v2135
      %v2137 = vadd.f32 %v1827, %v1891
      %v2138 = vsel %vm1408, %v1955, 0.0
      %v2139 = vadd.f32 %v2137, %v2138
      %v2140 = vrot.slane %v2139, 4
      %v2141 = vadd.f32 %v2139, %v2140
      %v2142 = vrot.slane %v2141, 2
      %v2143 = vadd.f32 %v2141, %v2142
      %v2144 = vrot.slane %v2143, 1
      %v2145 = vadd.f32 %v2143, %v2144
      %v2146 = vadd.f32 %v1829, %v1893
      %v2147 = vsel %vm1408, %v1957, 0.0
      %v2148 = vadd.f32 %v2146, %v2147
      %v2149 = vrot.slane %v2148, 4
      %v2150 = vadd.f32 %v2148, %v2149
      %v2151 = vrot.slane %v2150, 2
      %v2152 = vadd.f32 %v2150, %v2151
      %v2153 = vrot.slane %v2152, 1
      %v2154 = vadd.f32 %v2152, %v2153
      %v2155 = vadd.f32 %v1831, %v1895
      %v2156 = vsel %vm1408, %v1959, 0.0
      %v2157 = vadd.f32 %v2155, %v2156
      %v2158 = vrot.slane %v2157, 4
      %v2159 = vadd.f32 %v2157, %v2158
      %v2160 = vrot.slane %v2159, 2
      %v2161 = vadd.f32 %v2159, %v2160
      %v2162 = vrot.slane %v2161, 1
      %v2163 = vadd.f32 %v2161, %v2162
      %v2164 = vadd.f32 %v1833, %v1897
      %v2165 = vsel %vm1408, %v1961, 0.0
      %v2166 = vadd.f32 %v2164, %v2165
      %v2167 = vrot.slane %v2166, 4
      %v2168 = vadd.f32 %v2166, %v2167
      %v2169 = vrot.slane %v2168, 2
      %v2170 = vadd.f32 %v2168, %v2169
      %v2171 = vrot.slane %v2170, 1
      %v2172 = vadd.f32 %v2170, %v2171
      %v2173 = vadd.f32 %v1835, %v1899
      %v2174 = vsel %vm1408, %v1963, 0.0
      %v2175 = vadd.f32 %v2173, %v2174
      %v2176 = vrot.slane %v2175, 4
      %v2177 = vadd.f32 %v2175, %v2176
      %v2178 = vrot.slane %v2177, 2
      %v2179 = vadd.f32 %v2177, %v2178
      %v2180 = vrot.slane %v2179, 1
      %v2181 = vadd.f32 %v2179, %v2180
      %v2182 = vadd.f32 %v1837, %v1901
      %v2183 = vsel %vm1408, %v1965, 0.0
      %v2184 = vadd.f32 %v2182, %v2183
      %v2185 = vrot.slane %v2184, 4
      %v2186 = vadd.f32 %v2184, %v2185
      %v2187 = vrot.slane %v2186, 2
      %v2188 = vadd.f32 %v2186, %v2187
      %v2189 = vrot.slane %v2188, 1
      %v2190 = vadd.f32 %v2188, %v2189
      %v2191 = vadd.f32 %v1839, %v1903
      %v2192 = vsel %vm1408, %v1967, 0.0
      %v2193 = vadd.f32 %v2191, %v2192
      %v2194 = vrot.slane %v2193, 4
      %v2195 = vadd.f32 %v2193, %v2194
      %v2196 = vrot.slane %v2195, 2
      %v2197 = vadd.f32 %v2195, %v2196
      %v2198 = vrot.slane %v2197, 1
      %v2199 = vadd.f32 %v2197, %v2198
      %v2200 = vadd.f32 %v1841, %v1905
      %v2201 = vsel %vm1408, %v1969, 0.0
      %v2202 = vadd.f32 %v2200, %v2201
      %v2203 = vrot.slane %v2202, 4
      %v2204 = vadd.f32 %v2202, %v2203
      %v2205 = vrot.slane %v2204, 2
      %v2206 = vadd.f32 %v2204, %v2205
      %v2207 = vrot.slane %v2206, 1
      %v2208 = vadd.f32 %v2206, %v2207
      %v2209 = vadd.f32 %v1843, %v1907
      %v2210 = vsel %vm1408, %v1971, 0.0
      %v2211 = vadd.f32 %v2209, %v2210
      %v2212 = vrot.slane %v2211, 4
      %v2213 = vadd.f32 %v2211, %v2212
      %v2214 = vrot.slane %v2213, 2
      %v2215 = vadd.f32 %v2213, %v2214
      %v2216 = vrot.slane %v2215, 1
      %v2217 = vadd.f32 %v2215, %v2216
      %v2218 = vadd.f32 %v1845, %v1909
      %v2219 = vsel %vm1408, %v1973, 0.0
      %v2220 = vadd.f32 %v2218, %v2219
      %v2221 = vrot.slane %v2220, 4
      %v2222 = vadd.f32 %v2220, %v2221
      %v2223 = vrot.slane %v2222, 2
      %v2224 = vadd.f32 %v2222, %v2223
      %v2225 = vrot.slane %v2224, 1
      %v2226 = vadd.f32 %v2224, %v2225
      %v2227 = vadd.f32 %v1847, %v1911
      %v2228 = vsel %vm1408, %v1975, 0.0
      %v2229 = vadd.f32 %v2227, %v2228
      %v2230 = vrot.slane %v2229, 4
      %v2231 = vadd.f32 %v2229, %v2230
      %v2232 = vrot.slane %v2231, 2
      %v2233 = vadd.f32 %v2231, %v2232
      %v2234 = vrot.slane %v2233, 1
      %v2235 = vadd.f32 %v2233, %v2234
      %v2236 = vadd.f32 %v1849, %v1913
      %v2237 = vsel %vm1408, %v1977, 0.0
      %v2238 = vadd.f32 %v2236, %v2237
      %v2239 = vrot.slane %v2238, 4
      %v2240 = vadd.f32 %v2238, %v2239
      %v2241 = vrot.slane %v2240, 2
      %v2242 = vadd.f32 %v2240, %v2241
      %v2243 = vrot.slane %v2242, 1
      %v2244 = vadd.f32 %v2242, %v2243
      %v2245 = vadd.f32 %v1851, %v1915
      %v2246 = vsel %vm1408, %v1979, 0.0
      %v2247 = vadd.f32 %v2245, %v2246
      %v2248 = vrot.slane %v2247, 4
      %v2249 = vadd.f32 %v2247, %v2248
      %v2250 = vrot.slane %v2249, 2
      %v2251 = vadd.f32 %v2249, %v2250
      %v2252 = vrot.slane %v2251, 1
      %v2253 = vadd.f32 %v2251, %v2252
      %v2254 = vadd.f32 %v1853, %v1917
      %v2255 = vsel %vm1408, %v1981, 0.0
      %v2256 = vadd.f32 %v2254, %v2255
      %v2257 = vrot.slane %v2256, 4
      %v2258 = vadd.f32 %v2256, %v2257
      %v2259 = vrot.slane %v2258, 2
      %v2260 = vadd.f32 %v2258, %v2259
      %v2261 = vrot.slane %v2260, 1
      %v2262 = vadd.f32 %v2260, %v2261
      %v2263 = vadd.f32 %v1855, %v1919
      %v2264 = vsel %vm1408, %v1983, 0.0
      %v2265 = vadd.f32 %v2263, %v2264
      %v2266 = vrot.slane %v2265, 4
      %v2267 = vadd.f32 %v2265, %v2266
      %v2268 = vrot.slane %v2267, 2
      %v2269 = vadd.f32 %v2267, %v2268
      %v2270 = vrot.slane %v2269, 1
      %v2271 = vadd.f32 %v2269, %v2270
      %v2272 = vrcp.pop %v1992
      %v2273 = vrcp.pop %v2001
      %v2274 = vrcp.pop %v2010
      %v2275 = vrcp.pop %v2019
      %v2276 = vrcp.pop %v2028
      %v2277 = vrcp.pop %v2037
      %v2278 = vrcp.pop %v2046
      %v2279 = vrcp.pop %v2055
      %v2280 = vrcp.pop %v2064
      %v2281 = vrcp.pop %v2073
      %v2282 = vrcp.pop %v2082
      %v2283 = vrcp.pop %v2091
      %v2284 = vrcp.pop %v2100
      %v2285 = vrcp.pop %v2109
      %v2286 = vrcp.pop %v2118
      %v2287 = vrcp.pop %v2127
      %v2288 = vrcp.pop %v2136
      %v2289 = vrcp.pop %v2145
      %v2290 = vrcp.pop %v2154
      %v2291 = vrcp.pop %v2163
      %v2292 = vrcp.pop %v2172
      %v2293 = vrcp.pop %v2181
      %v2294 = vrcp.pop %v2190
      %v2295 = vrcp.pop %v2199
      %v2296 = vrcp.pop %v2208
      %v2297 = vrcp.pop %v2217
      %v2298 = vrcp.pop %v2226
      %v2299 = vrcp.pop %v2235
      %v2300 = vrcp.pop %v2244
      %v2301 = vrcp.pop %v2253
      %v2302 = vrcp.pop %v2262
      %v2303 = vrcp.pop %v2271
      %v2336 = vcombine.low %v2272, %v2273
      %v2337 = vcombine.low %v2274, %v2275
      %v2339 = vunpack.c.l.s4 1983009808
      %v2340 = vunpack.c.0.s8 %v2339
      %v2341 = vlaneseq
      %v2342 = vshrl.u32 %v2341, 7
      %v2343 = vsub.s32 %v2340, %v2342
      %v2344 = vrot.slane %v2336, %v2343
      %v2346 = vunpack.c.l.s4 1983009808
      %v2347 = vunpack.c.0.s8 %v2346
      %v2348 = vlaneseq
      %v2349 = vshrl.u32 %v2348, 7
      %v2350 = vsub.s32 %v2347, %v2349
      %v2351 = vrot.slane %v2337, %v2350
      %v2352 = vcombine.low %v2344, %v2351
      %v2353 = vcombine.low %v2276, %v2277
      %v2354 = vcombine.low %v2278, %v2279
      %v2356 = vunpack.c.l.s4 1983009808
      %v2357 = vunpack.c.0.s8 %v2356
      %v2358 = vlaneseq
      %v2359 = vshrl.u32 %v2358, 7
      %v2360 = vsub.s32 %v2357, %v2359
      %v2361 = vrot.slane %v2353, %v2360
      %v2363 = vunpack.c.l.s4 1983009808
      %v2364 = vunpack.c.0.s8 %v2363
      %v2365 = vlaneseq
      %v2366 = vshrl.u32 %v2365, 7
      %v2367 = vsub.s32 %v2364, %v2366
      %v2368 = vrot.slane %v2354, %v2367
      %v2369 = vcombine.low %v2361, %v2368
      %v2370 = vcombine.low %v2280, %v2281
      %v2371 = vcombine.low %v2282, %v2283
      %v2373 = vunpack.c.l.s4 1983009808
      %v2374 = vunpack.c.0.s8 %v2373
      %v2375 = vlaneseq
      %v2376 = vshrl.u32 %v2375, 7
      %v2377 = vsub.s32 %v2374, %v2376
      %v2378 = vrot.slane %v2370, %v2377
      %v2380 = vunpack.c.l.s4 1983009808
      %v2381 = vunpack.c.0.s8 %v2380
      %v2382 = vlaneseq
      %v2383 = vshrl.u32 %v2382, 7
      %v2384 = vsub.s32 %v2381, %v2383
      %v2385 = vrot.slane %v2371, %v2384
      %v2386 = vcombine.low %v2378, %v2385
      %v2387 = vcombine.low %v2284, %v2285
      %v2388 = vcombine.low %v2286, %v2287
      %v2390 = vunpack.c.l.s4 1983009808
      %v2391 = vunpack.c.0.s8 %v2390
      %v2392 = vlaneseq
      %v2393 = vshrl.u32 %v2392, 7
      %v2394 = vsub.s32 %v2391, %v2393
      %v2395 = vrot.slane %v2387, %v2394
      %v2397 = vunpack.c.l.s4 1983009808
      %v2398 = vunpack.c.0.s8 %v2397
      %v2399 = vlaneseq
      %v2400 = vshrl.u32 %v2399, 7
      %v2401 = vsub.s32 %v2398, %v2400
      %v2402 = vrot.slane %v2388, %v2401
      %v2403 = vcombine.low %v2395, %v2402
      %v2404 = vcombine.low %v2288, %v2289
      %v2405 = vcombine.low %v2290, %v2291
      %v2407 = vunpack.c.l.s4 1983009808
      %v2408 = vunpack.c.0.s8 %v2407
      %v2409 = vlaneseq
      %v2410 = vshrl.u32 %v2409, 7
      %v2411 = vsub.s32 %v2408, %v2410
      %v2412 = vrot.slane %v2404, %v2411
      %v2414 = vunpack.c.l.s4 1983009808
      %v2415 = vunpack.c.0.s8 %v2414
      %v2416 = vlaneseq
      %v2417 = vshrl.u32 %v2416, 7
      %v2418 = vsub.s32 %v2415, %v2417
      %v2419 = vrot.slane %v2405, %v2418
      %v2420 = vcombine.low %v2412, %v2419
      %v2421 = vcombine.low %v2292, %v2293
      %v2422 = vcombine.low %v2294, %v2295
      %v2424 = vunpack.c.l.s4 1983009808
      %v2425 = vunpack.c.0.s8 %v2424
      %v2426 = vlaneseq
      %v2427 = vshrl.u32 %v2426, 7
      %v2428 = vsub.s32 %v2425, %v2427
      %v2429 = vrot.slane %v2421, %v2428
      %v2431 = vunpack.c.l.s4 1983009808
      %v2432 = vunpack.c.0.s8 %v2431
      %v2433 = vlaneseq
      %v2434 = vshrl.u32 %v2433, 7
      %v2435 = vsub.s32 %v2432, %v2434
      %v2436 = vrot.slane %v2422, %v2435
      %v2437 = vcombine.low %v2429, %v2436
      %v2438 = vcombine.low %v2296, %v2297
      %v2439 = vcombine.low %v2298, %v2299
      %v2441 = vunpack.c.l.s4 1983009808
      %v2442 = vunpack.c.0.s8 %v2441
      %v2443 = vlaneseq
      %v2444 = vshrl.u32 %v2443, 7
      %v2445 = vsub.s32 %v2442, %v2444
      %v2446 = vrot.slane %v2438, %v2445
      %v2448 = vunpack.c.l.s4 1983009808
      %v2449 = vunpack.c.0.s8 %v2448
      %v2450 = vlaneseq
      %v2451 = vshrl.u32 %v2450, 7
      %v2452 = vsub.s32 %v2449, %v2451
      %v2453 = vrot.slane %v2439, %v2452
      %v2454 = vcombine.low %v2446, %v2453
      %v2455 = vcombine.low %v2300, %v2301
      %v2456 = vcombine.low %v2302, %v2303
      %v2458 = vunpack.c.l.s4 1983009808
      %v2459 = vunpack.c.0.s8 %v2458
      %v2460 = vlaneseq
      %v2461 = vshrl.u32 %v2460, 7
      %v2462 = vsub.s32 %v2459, %v2461
      %v2463 = vrot.slane %v2455, %v2462
      %v2465 = vunpack.c.l.s4 1983009808
      %v2466 = vunpack.c.0.s8 %v2465
      %v2467 = vlaneseq
      %v2468 = vshrl.u32 %v2467, 7
      %v2469 = vsub.s32 %v2466, %v2468
      %v2470 = vrot.slane %v2456, %v2469
      %v2471 = vcombine.low %v2463, %v2470
      %v2480 = vmul.f32 %v443, %v2352
      %v2481 = vmul.f32 %v444, %v2369
      %v2482 = vmul.f32 %v445, %v2386
      %v2483 = vmul.f32 %v446, %v2403
      %v2484 = vmul.f32 %v447, %v2420
      %v2485 = vmul.f32 %v448, %v2437
      %v2486 = vmul.f32 %v449, %v2454
      %v2487 = vmul.f32 %v450, %v2471
      %v2496 = vlaneseq
      %v2497 = vshrl.u32 %v2496, 7
      %v2498 = vsub.s32 0, %v2497
      %v2499 = vrot.slane %v2480, %v2498
      %v2500 = vlaneseq
      %v2501 = vshrl.u32 %v2500, 7
      %v2502 = vsub.s32 2, %v2501
      %v2503 = vrot.slane %v2480, %v2502
      %v2504 = vlaneseq
      %v2505 = vshrl.u32 %v2504, 7
      %v2506 = vsub.s32 4, %v2505
      %v2507 = vrot.slane %v2480, %v2506
      %v2508 = vlaneseq
      %v2509 = vshrl.u32 %v2508, 7
      %v2510 = vsub.s32 6, %v2509
      %v2511 = vrot.slane %v2480, %v2510
      %v2512 = vlaneseq
      %v2513 = vshrl.u32 %v2512, 7
      %v2514 = vsub.s32 0, %v2513
      %v2515 = vrot.slane %v2481, %v2514
      %v2516 = vlaneseq
      %v2517 = vshrl.u32 %v2516, 7
      %v2518 = vsub.s32 2, %v2517
      %v2519 = vrot.slane %v2481, %v2518
      %v2520 = vlaneseq
      %v2521 = vshrl.u32 %v2520, 7
      %v2522 = vsub.s32 4, %v2521
      %v2523 = vrot.slane %v2481, %v2522
      %v2524 = vlaneseq
      %v2525 = vshrl.u32 %v2524, 7
      %v2526 = vsub.s32 6, %v2525
      %v2527 = vrot.slane %v2481, %v2526
      %v2528 = vlaneseq
      %v2529 = vshrl.u32 %v2528, 7
      %v2530 = vsub.s32 0, %v2529
      %v2531 = vrot.slane %v2482, %v2530
      %v2532 = vlaneseq
      %v2533 = vshrl.u32 %v2532, 7
      %v2534 = vsub.s32 2, %v2533
      %v2535 = vrot.slane %v2482, %v2534
      %v2536 = vlaneseq
      %v2537 = vshrl.u32 %v2536, 7
      %v2538 = vsub.s32 4, %v2537
      %v2539 = vrot.slane %v2482, %v2538
      %v2540 = vlaneseq
      %v2541 = vshrl.u32 %v2540, 7
      %v2542 = vsub.s32 6, %v2541
      %v2543 = vrot.slane %v2482, %v2542
      %v2544 = vlaneseq
      %v2545 = vshrl.u32 %v2544, 7
      %v2546 = vsub.s32 0, %v2545
      %v2547 = vrot.slane %v2483, %v2546
      %v2548 = vlaneseq
      %v2549 = vshrl.u32 %v2548, 7
      %v2550 = vsub.s32 2, %v2549
      %v2551 = vrot.slane %v2483, %v2550
      %v2552 = vlaneseq
      %v2553 = vshrl.u32 %v2552, 7
      %v2554 = vsub.s32 4, %v2553
      %v2555 = vrot.slane %v2483, %v2554
      %v2556 = vlaneseq
      %v2557 = vshrl.u32 %v2556, 7
      %v2558 = vsub.s32 6, %v2557
      %v2559 = vrot.slane %v2483, %v2558
      %v2560 = vlaneseq
      %v2561 = vshrl.u32 %v2560, 7
      %v2562 = vsub.s32 0, %v2561
      %v2563 = vrot.slane %v2484, %v2562
      %v2564 = vlaneseq
      %v2565 = vshrl.u32 %v2564, 7
      %v2566 = vsub.s32 2, %v2565
      %v2567 = vrot.slane %v2484, %v2566
      %v2568 = vlaneseq
      %v2569 = vshrl.u32 %v2568, 7
      %v2570 = vsub.s32 4, %v2569
      %v2571 = vrot.slane %v2484, %v2570
      %v2572 = vlaneseq
      %v2573 = vshrl.u32 %v2572, 7
      %v2574 = vsub.s32 6, %v2573
      %v2575 = vrot.slane %v2484, %v2574
      %v2576 = vlaneseq
      %v2577 = vshrl.u32 %v2576, 7
      %v2578 = vsub.s32 0, %v2577
      %v2579 = vrot.slane %v2485, %v2578
      %v2580 = vlaneseq
      %v2581 = vshrl.u32 %v2580, 7
      %v2582 = vsub.s32 2, %v2581
      %v2583 = vrot.slane %v2485, %v2582
      %v2584 = vlaneseq
      %v2585 = vshrl.u32 %v2584, 7
      %v2586 = vsub.s32 4, %v2585
      %v2587 = vrot.slane %v2485, %v2586
      %v2588 = vlaneseq
      %v2589 = vshrl.u32 %v2588, 7
      %v2590 = vsub.s32 6, %v2589
      %v2591 = vrot.slane %v2485, %v2590
      %v2592 = vlaneseq
      %v2593 = vshrl.u32 %v2592, 7
      %v2594 = vsub.s32 0, %v2593
      %v2595 = vrot.slane %v2486, %v2594
      %v2596 = vlaneseq
      %v2597 = vshrl.u32 %v2596, 7
      %v2598 = vsub.s32 2, %v2597
      %v2599 = vrot.slane %v2486, %v2598
      %v2600 = vlaneseq
      %v2601 = vshrl.u32 %v2600, 7
      %v2602 = vsub.s32 4, %v2601
      %v2603 = vrot.slane %v2486, %v2602
      %v2604 = vlaneseq
      %v2605 = vshrl.u32 %v2604, 7
      %v2606 = vsub.s32 6, %v2605
      %v2607 = vrot.slane %v2486, %v2606
      %v2608 = vlaneseq
      %v2609 = vshrl.u32 %v2608, 7
      %v2610 = vsub.s32 0, %v2609
      %v2611 = vrot.slane %v2487, %v2610
      %v2612 = vlaneseq
      %v2613 = vshrl.u32 %v2612, 7
      %v2614 = vsub.s32 2, %v2613
      %v2615 = vrot.slane %v2487, %v2614
      %v2616 = vlaneseq
      %v2617 = vshrl.u32 %v2616, 7
      %v2618 = vsub.s32 4, %v2617
      %v2619 = vrot.slane %v2487, %v2618
      %v2620 = vlaneseq
      %v2621 = vshrl.u32 %v2620, 7
      %v2622 = vsub.s32 6, %v2621
      %v2623 = vrot.slane %v2487, %v2622
      %v2656 = vlaneseq
      %v2657 = vshrl.u32 %v2656, 7
      %v2658 = vsub.s32 0, %v2657
      %v2659 = vrot.slane %v2499, %v2658
      %v2660 = vlaneseq
      %v2661 = vshrl.u32 %v2660, 7
      %v2662 = vsub.s32 0, %v2661
      %v2663 = vrot.slane %v2503, %v2662
      %v2664 = vlaneseq
      %v2665 = vshrl.u32 %v2664, 7
      %v2666 = vsub.s32 0, %v2665
      %v2667 = vrot.slane %v2507, %v2666
      %v2668 = vlaneseq
      %v2669 = vshrl.u32 %v2668, 7
      %v2670 = vsub.s32 0, %v2669
      %v2671 = vrot.slane %v2511, %v2670
      %v2672 = vlaneseq
      %v2673 = vshrl.u32 %v2672, 7
      %v2674 = vsub.s32 0, %v2673
      %v2675 = vrot.slane %v2515, %v2674
      %v2676 = vlaneseq
      %v2677 = vshrl.u32 %v2676, 7
      %v2678 = vsub.s32 0, %v2677
      %v2679 = vrot.slane %v2519, %v2678
      %v2680 = vlaneseq
      %v2681 = vshrl.u32 %v2680, 7
      %v2682 = vsub.s32 0, %v2681
      %v2683 = vrot.slane %v2523, %v2682
      %v2684 = vlaneseq
      %v2685 = vshrl.u32 %v2684, 7
      %v2686 = vsub.s32 0, %v2685
      %v2687 = vrot.slane %v2527, %v2686
      %v2688 = vlaneseq
      %v2689 = vshrl.u32 %v2688, 7
      %v2690 = vsub.s32 0, %v2689
      %v2691 = vrot.slane %v2531, %v2690
      %v2692 = vlaneseq
      %v2693 = vshrl.u32 %v2692, 7
      %v2694 = vsub.s32 0, %v2693
      %v2695 = vrot.slane %v2535, %v2694
      %v2696 = vlaneseq
      %v2697 = vshrl.u32 %v2696, 7
      %v2698 = vsub.s32 0, %v2697
      %v2699 = vrot.slane %v2539, %v2698
      %v2700 = vlaneseq
      %v2701 = vshrl.u32 %v2700, 7
      %v2702 = vsub.s32 0, %v2701
      %v2703 = vrot.slane %v2543, %v2702
      %v2704 = vlaneseq
      %v2705 = vshrl.u32 %v2704, 7
      %v2706 = vsub.s32 0, %v2705
      %v2707 = vrot.slane %v2547, %v2706
      %v2708 = vlaneseq
      %v2709 = vshrl.u32 %v2708, 7
      %v2710 = vsub.s32 0, %v2709
      %v2711 = vrot.slane %v2551, %v2710
      %v2712 = vlaneseq
      %v2713 = vshrl.u32 %v2712, 7
      %v2714 = vsub.s32 0, %v2713
      %v2715 = vrot.slane %v2555, %v2714
      %v2716 = vlaneseq
      %v2717 = vshrl.u32 %v2716, 7
      %v2718 = vsub.s32 0, %v2717
      %v2719 = vrot.slane %v2559, %v2718
      %v2720 = vlaneseq
      %v2721 = vshrl.u32 %v2720, 7
      %v2722 = vsub.s32 0, %v2721
      %v2723 = vrot.slane %v2563, %v2722
      %v2724 = vlaneseq
      %v2725 = vshrl.u32 %v2724, 7
      %v2726 = vsub.s32 0, %v2725
      %v2727 = vrot.slane %v2567, %v2726
      %v2728 = vlaneseq
      %v2729 = vshrl.u32 %v2728, 7
      %v2730 = vsub.s32 0, %v2729
      %v2731 = vrot.slane %v2571, %v2730
      %v2732 = vlaneseq
      %v2733 = vshrl.u32 %v2732, 7
      %v2734 = vsub.s32 0, %v2733
      %v2735 = vrot.slane %v2575, %v2734
      %v2736 = vlaneseq
      %v2737 = vshrl.u32 %v2736, 7
      %v2738 = vsub.s32 0, %v2737
      %v2739 = vrot.slane %v2579, %v2738
      %v2740 = vlaneseq
      %v2741 = vshrl.u32 %v2740, 7
      %v2742 = vsub.s32 0, %v2741
      %v2743 = vrot.slane %v2583, %v2742
      %v2744 = vlaneseq
      %v2745 = vshrl.u32 %v2744, 7
      %v2746 = vsub.s32 0, %v2745
      %v2747 = vrot.slane %v2587, %v2746
      %v2748 = vlaneseq
      %v2749 = vshrl.u32 %v2748, 7
      %v2750 = vsub.s32 0, %v2749
      %v2751 = vrot.slane %v2591, %v2750
      %v2752 = vlaneseq
      %v2753 = vshrl.u32 %v2752, 7
      %v2754 = vsub.s32 0, %v2753
      %v2755 = vrot.slane %v2595, %v2754
      %v2756 = vlaneseq
      %v2757 = vshrl.u32 %v2756, 7
      %v2758 = vsub.s32 0, %v2757
      %v2759 = vrot.slane %v2599, %v2758
      %v2760 = vlaneseq
      %v2761 = vshrl.u32 %v2760, 7
      %v2762 = vsub.s32 0, %v2761
      %v2763 = vrot.slane %v2603, %v2762
      %v2764 = vlaneseq
      %v2765 = vshrl.u32 %v2764, 7
      %v2766 = vsub.s32 0, %v2765
      %v2767 = vrot.slane %v2607, %v2766
      %v2768 = vlaneseq
      %v2769 = vshrl.u32 %v2768, 7
      %v2770 = vsub.s32 0, %v2769
      %v2771 = vrot.slane %v2611, %v2770
      %v2772 = vlaneseq
      %v2773 = vshrl.u32 %v2772, 7
      %v2774 = vsub.s32 0, %v2773
      %v2775 = vrot.slane %v2615, %v2774
      %v2776 = vlaneseq
      %v2777 = vshrl.u32 %v2776, 7
      %v2778 = vsub.s32 0, %v2777
      %v2779 = vrot.slane %v2619, %v2778
      %v2780 = vlaneseq
      %v2781 = vshrl.u32 %v2780, 7
      %v2782 = vsub.s32 0, %v2781
      %v2783 = vrot.slane %v2623, %v2782
      %v2784 = vmul.f32 %v1793, %v2659
      %v2785 = vmul.f32 %v1795, %v2663
      %v2786 = vmul.f32 %v1797, %v2667
      %v2787 = vmul.f32 %v1799, %v2671
      %v2788 = vmul.f32 %v1801, %v2675
      %v2789 = vmul.f32 %v1803, %v2679
      %v2790 = vmul.f32 %v1805, %v2683
      %v2791 = vmul.f32 %v1807, %v2687
      %v2792 = vmul.f32 %v1809, %v2691
      %v2793 = vmul.f32 %v1811, %v2695
      %v2794 = vmul.f32 %v1813, %v2699
      %v2795 = vmul.f32 %v1815, %v2703
      %v2796 = vmul.f32 %v1817, %v2707
      %v2797 = vmul.f32 %v1819, %v2711
      %v2798 = vmul.f32 %v1821, %v2715
      %v2799 = vmul.f32 %v1823, %v2719
      %v2800 = vmul.f32 %v1825, %v2723
      %v2801 = vmul.f32 %v1827, %v2727
      %v2802 = vmul.f32 %v1829, %v2731
      %v2803 = vmul.f32 %v1831, %v2735
      %v2804 = vmul.f32 %v1833, %v2739
      %v2805 = vmul.f32 %v1835, %v2743
      %v2806 = vmul.f32 %v1837, %v2747
      %v2807 = vmul.f32 %v1839, %v2751
      %v2808 = vmul.f32 %v1841, %v2755
      %v2809 = vmul.f32 %v1843, %v2759
      %v2810 = vmul.f32 %v1845, %v2763
      %v2811 = vmul.f32 %v1847, %v2767
      %v2812 = vmul.f32 %v1849, %v2771
      %v2813 = vmul.f32 %v1851, %v2775
      %v2814 = vmul.f32 %v1853, %v2779
      %v2815 = vmul.f32 %v1855, %v2783
      %v2816 = vmul.f32 %v1857, %v2659
      %v2817 = vmul.f32 %v1859, %v2663
      %v2818 = vmul.f32 %v1861, %v2667
      %v2819 = vmul.f32 %v1863, %v2671
      %v2820 = vmul.f32 %v1865, %v2675
      %v2821 = vmul.f32 %v1867, %v2679
      %v2822 = vmul.f32 %v1869, %v2683
      %v2823 = vmul.f32 %v1871, %v2687
      %v2824 = vmul.f32 %v1873, %v2691
      %v2825 = vmul.f32 %v1875, %v2695
      %v2826 = vmul.f32 %v1877, %v2699
      %v2827 = vmul.f32 %v1879, %v2703
      %v2828 = vmul.f32 %v1881, %v2707
      %v2829 = vmul.f32 %v1883, %v2711
      %v2830 = vmul.f32 %v1885, %v2715
      %v2831 = vmul.f32 %v1887, %v2719
      %v2832 = vmul.f32 %v1889, %v2723
      %v2833 = vmul.f32 %v1891, %v2727
      %v2834 = vmul.f32 %v1893, %v2731
      %v2835 = vmul.f32 %v1895, %v2735
      %v2836 = vmul.f32 %v1897, %v2739
      %v2837 = vmul.f32 %v1899, %v2743
      %v2838 = vmul.f32 %v1901, %v2747
      %v2839 = vmul.f32 %v1903, %v2751
      %v2840 = vmul.f32 %v1905, %v2755
      %v2841 = vmul.f32 %v1907, %v2759
      %v2842 = vmul.f32 %v1909, %v2763
      %v2843 = vmul.f32 %v1911, %v2767
      %v2844 = vmul.f32 %v1913, %v2771
      %v2845 = vmul.f32 %v1915, %v2775
      %v2846 = vmul.f32 %v1917, %v2779
      %v2847 = vmul.f32 %v1919, %v2783
      %v2848 = vmul.f32 %v1921, %v2659
      %v2849 = vmul.f32 %v1923, %v2663
      %v2850 = vmul.f32 %v1925, %v2667
      %v2851 = vmul.f32 %v1927, %v2671
      %v2852 = vmul.f32 %v1929, %v2675
      %v2853 = vmul.f32 %v1931, %v2679
      %v2854 = vmul.f32 %v1933, %v2683
      %v2855 = vmul.f32 %v1935, %v2687
      %v2856 = vmul.f32 %v1937, %v2691
      %v2857 = vmul.f32 %v1939, %v2695
      %v2858 = vmul.f32 %v1941, %v2699
      %v2859 = vmul.f32 %v1943, %v2703
      %v2860 = vmul.f32 %v1945, %v2707
      %v2861 = vmul.f32 %v1947, %v2711
      %v2862 = vmul.f32 %v1949, %v2715
      %v2863 = vmul.f32 %v1951, %v2719
      %v2864 = vmul.f32 %v1953, %v2723
      %v2865 = vmul.f32 %v1955, %v2727
      %v2866 = vmul.f32 %v1957, %v2731
      %v2867 = vmul.f32 %v1959, %v2735
      %v2868 = vmul.f32 %v1961, %v2739
      %v2869 = vmul.f32 %v1963, %v2743
      %v2870 = vmul.f32 %v1965, %v2747
      %v2871 = vmul.f32 %v1967, %v2751
      %v2872 = vmul.f32 %v1969, %v2755
      %v2873 = vmul.f32 %v1971, %v2759
      %v2874 = vmul.f32 %v1973, %v2763
      %v2875 = vmul.f32 %v1975, %v2767
      %v2876 = vmul.f32 %v1977, %v2771
      %v2877 = vmul.f32 %v1979, %v2775
      %v2878 = vmul.f32 %v1981, %v2779
      %v2879 = vmul.f32 %v1983, %v2783
      %v2880 = vlog2.pop %v1992
      %v2881 = vmul.f32 %v2880, 0.6931472
      %v2882 = vlog2.pop %v2001
      %v2883 = vmul.f32 %v2882, 0.6931472
      %v2884 = vlog2.pop %v2010
      %v2885 = vmul.f32 %v2884, 0.6931472
      %v2886 = vlog2.pop %v2019
      %v2887 = vmul.f32 %v2886, 0.6931472
      %v2888 = vlog2.pop %v2028
      %v2889 = vmul.f32 %v2888, 0.6931472
      %v2890 = vlog2.pop %v2037
      %v2891 = vmul.f32 %v2890, 0.6931472
      %v2892 = vlog2.pop %v2046
      %v2893 = vmul.f32 %v2892, 0.6931472
      %v2894 = vlog2.pop %v2055
      %v2895 = vmul.f32 %v2894, 0.6931472
      %v2896 = vlog2.pop %v2064
      %v2897 = vmul.f32 %v2896, 0.6931472
      %v2898 = vlog2.pop %v2073
      %v2899 = vmul.f32 %v2898, 0.6931472
      %v2900 = vlog2.pop %v2082
      %v2901 = vmul.f32 %v2900, 0.6931472
      %v2902 = vlog2.pop %v2091
      %v2903 = vmul.f32 %v2902, 0.6931472
      %v2904 = vlog2.pop %v2100
      %v2905 = vmul.f32 %v2904, 0.6931472
      %v2906 = vlog2.pop %v2109
      %v2907 = vmul.f32 %v2906, 0.6931472
      %v2908 = vlog2.pop %v2118
      %v2909 = vmul.f32 %v2908, 0.6931472
      %v2910 = vlog2.pop %v2127
      %v2911 = vmul.f32 %v2910, 0.6931472
      %v2912 = vlog2.pop %v2136
      %v2913 = vmul.f32 %v2912, 0.6931472
      %v2914 = vlog2.pop %v2145
      %v2915 = vmul.f32 %v2914, 0.6931472
      %v2916 = vlog2.pop %v2154
      %v2917 = vmul.f32 %v2916, 0.6931472
      %v2918 = vlog2.pop %v2163
      %v2919 = vmul.f32 %v2918, 0.6931472
      %v2920 = vlog2.pop %v2172
      %v2921 = vmul.f32 %v2920, 0.6931472
      %v2922 = vlog2.pop %v2181
      %v2923 = vmul.f32 %v2922, 0.6931472
      %v2924 = vlog2.pop %v2190
      %v2925 = vmul.f32 %v2924, 0.6931472
      %v2926 = vlog2.pop %v2199
      %v2927 = vmul.f32 %v2926, 0.6931472
      %v2928 = vlog2.pop %v2208
      %v2929 = vmul.f32 %v2928, 0.6931472
      %v2930 = vlog2.pop %v2217
      %v2931 = vmul.f32 %v2930, 0.6931472
      %v2932 = vlog2.pop %v2226
      %v2933 = vmul.f32 %v2932, 0.6931472
      %v2934 = vlog2.pop %v2235
      %v2935 = vmul.f32 %v2934, 0.6931472
      %v2936 = vlog2.pop %v2244
      %v2937 = vmul.f32 %v2936, 0.6931472
      %v2938 = vlog2.pop %v2253
      %v2939 = vmul.f32 %v2938, 0.6931472
      %v2940 = vlog2.pop %v2262
      %v2941 = vmul.f32 %v2940, 0.6931472
      %v2942 = vlog2.pop %v2271
      %v2943 = vmul.f32 %v2942, 0.6931472
      %v2944 = vadd.f32 %v1416, %v2881
      %v2945 = vadd.f32 %v1425, %v2883
      %v2946 = vadd.f32 %v1434, %v2885
      %v2947 = vadd.f32 %v1443, %v2887
      %v2948 = vadd.f32 %v1452, %v2889
      %v2949 = vadd.f32 %v1461, %v2891
      %v2950 = vadd.f32 %v1470, %v2893
      %v2951 = vadd.f32 %v1479, %v2895
      %v2952 = vadd.f32 %v1488, %v2897
      %v2953 = vadd.f32 %v1497, %v2899
      %v2954 = vadd.f32 %v1506, %v2901
      %v2955 = vadd.f32 %v1515, %v2903
      %v2956 = vadd.f32 %v1524, %v2905
      %v2957 = vadd.f32 %v1533, %v2907
      %v2958 = vadd.f32 %v1542, %v2909
      %v2959 = vadd.f32 %v1551, %v2911
      %v2960 = vadd.f32 %v1560, %v2913
      %v2961 = vadd.f32 %v1569, %v2915
      %v2962 = vadd.f32 %v1578, %v2917
      %v2963 = vadd.f32 %v1587, %v2919
      %v2964 = vadd.f32 %v1596, %v2921
      %v2965 = vadd.f32 %v1605, %v2923
      %v2966 = vadd.f32 %v1614, %v2925
      %v2967 = vadd.f32 %v1623, %v2927
      %v2968 = vadd.f32 %v1632, %v2929
      %v2969 = vadd.f32 %v1641, %v2931
      %v2970 = vadd.f32 %v1650, %v2933
      %v2971 = vadd.f32 %v1659, %v2935
      %v2972 = vadd.f32 %v1668, %v2937
      %v2973 = vadd.f32 %v1677, %v2939
      %v2974 = vadd.f32 %v1686, %v2941
      %v2975 = vadd.f32 %v1695, %v2943
      %v2976 = vmul.f32 %v316, %v1311
      %v2977 = vmul.f32 %v317, %v1312
      %v2978 = vmul.f32 %v318, %v1313
      %v2979 = vmul.f32 %v319, %v1314
      %v2980 = vmul.f32 %v320, %v1315
      %v2981 = vmul.f32 %v321, %v1316
      %v2982 = vmul.f32 %v322, %v1317
      %v2983 = vmul.f32 %v323, %v1318
      %v2984 = vmul.f32 %v324, %v1319
      %v2985 = vmul.f32 %v325, %v1320
      %v2986 = vmul.f32 %v326, %v1321
      %v2987 = vmul.f32 %v327, %v1322
      %v2988 = vmul.f32 %v328, %v1323
      %v2989 = vmul.f32 %v329, %v1324
      %v2990 = vmul.f32 %v330, %v1325
      %v2991 = vmul.f32 %v331, %v1326
      %v2992 = vmul.f32 %v332, %v1327
      %v2993 = vmul.f32 %v333, %v1328
      %v2994 = vmul.f32 %v334, %v1329
      %v2995 = vmul.f32 %v335, %v1330
      %v2996 = vmul.f32 %v336, %v1331
      %v2997 = vmul.f32 %v337, %v1332
      %v2998 = vmul.f32 %v338, %v1333
      %v2999 = vmul.f32 %v339, %v1334
      %v3000 = vmul.f32 %v340, %v1335
      %v3001 = vmul.f32 %v341, %v1336
      %v3002 = vmul.f32 %v342, %v1337
      %v3003 = vmul.f32 %v343, %v1338
      %v3004 = vmul.f32 %v344, %v1339
      %v3005 = vmul.f32 %v345, %v1340
      %v3006 = vmul.f32 %v346, %v1341
      %v3007 = vmul.f32 %v347, %v1342
      %v3008 = vmul.f32 %v348, %v1343
      %v3009 = vmul.f32 %v349, %v1344
      %v3010 = vmul.f32 %v350, %v1345
      %v3011 = vmul.f32 %v351, %v1346
      %v3012 = vmul.f32 %v352, %v1347
      %v3013 = vmul.f32 %v353, %v1348
      %v3014 = vmul.f32 %v354, %v1349
      %v3015 = vmul.f32 %v355, %v1350
      %v3016 = vmul.f32 %v356, %v1351
      %v3017 = vmul.f32 %v357, %v1352
      %v3018 = vmul.f32 %v358, %v1353
      %v3019 = vmul.f32 %v359, %v1354
      %v3020 = vmul.f32 %v360, %v1355
      %v3021 = vmul.f32 %v361, %v1356
      %v3022 = vmul.f32 %v362, %v1357
      %v3023 = vmul.f32 %v363, %v1358
      %v3024 = vmul.f32 %v364, %v1359
      %v3025 = vmul.f32 %v365, %v1360
      %v3026 = vmul.f32 %v366, %v1361
      %v3027 = vmul.f32 %v367, %v1362
      %v3028 = vmul.f32 %v368, %v1363
      %v3029 = vmul.f32 %v369, %v1364
      %v3030 = vmul.f32 %v370, %v1365
      %v3031 = vmul.f32 %v371, %v1366
      %v3032 = vmul.f32 %v372, %v1367
      %v3033 = vmul.f32 %v373, %v1368
      %v3034 = vmul.f32 %v374, %v1369
      %v3035 = vmul.f32 %v375, %v1370
      %v3036 = vmul.f32 %v376, %v1371
      %v3037 = vmul.f32 %v377, %v1372
      %v3038 = vmul.f32 %v378, %v1373
      %v3039 = vmul.f32 %v379, %v1374
      %v3040 = vmul.f32 %v380, %v1375
      %v3041 = vmul.f32 %v381, %v1376
      %v3042 = vmul.f32 %v382, %v1377
      %v3043 = vmul.f32 %v383, %v1378
      %v3044 = vmul.f32 %v384, %v1379
      %v3045 = vmul.f32 %v385, %v1380
      %v3046 = vmul.f32 %v386, %v1381
      %v3047 = vmul.f32 %v387, %v1382
      %v3048 = vmul.f32 %v388, %v1383
      %v3049 = vmul.f32 %v389, %v1384
      %v3050 = vmul.f32 %v390, %v1385
      %v3051 = vmul.f32 %v391, %v1386
      %v3052 = vmul.f32 %v392, %v1387
      %v3053 = vmul.f32 %v393, %v1388
      %v3054 = vmul.f32 %v394, %v1389
      %v3055 = vmul.f32 %v395, %v1390
      %v3056 = vmul.f32 %v396, %v1391
      %v3057 = vmul.f32 %v397, %v1392
      %v3058 = vmul.f32 %v398, %v1393
      %v3059 = vmul.f32 %v399, %v1394
      %v3060 = vmul.f32 %v400, %v1395
      %v3061 = vmul.f32 %v401, %v1396
      %v3062 = vmul.f32 %v402, %v1397
      %v3063 = vmul.f32 %v403, %v1398
      %v3064 = vmul.f32 %v404, %v1399
      %v3065 = vmul.f32 %v405, %v1400
      %v3066 = vmul.f32 %v406, %v1401
      %v3067 = vmul.f32 %v407, %v1402
      %v3068 = vmul.f32 %v408, %v1403
      %v3069 = vmul.f32 %v409, %v1404
      %v3070 = vmul.f32 %v410, %v1405
      %v3071 = vmul.f32 %v411, %v1406
      %v3072 = vadd.f32 %v2976, %v3008
      %v3073 = vsel %vm1408, %v3040, 0.0
      %v3074 = vadd.f32 %v3072, %v3073
      %v3075 = vrot.slane %v3074, 4
      %v3076 = vadd.f32 %v3074, %v3075
      %v3077 = vrot.slane %v3076, 2
      %v3078 = vadd.f32 %v3076, %v3077
      %v3079 = vrot.slane %v3078, 1
      %v3080 = vadd.f32 %v3078, %v3079
      %v3081 = vadd.f32 %v2977, %v3009
      %v3082 = vsel %vm1408, %v3041, 0.0
      %v3083 = vadd.f32 %v3081, %v3082
      %v3084 = vrot.slane %v3083, 4
      %v3085 = vadd.f32 %v3083, %v3084
      %v3086 = vrot.slane %v3085, 2
      %v3087 = vadd.f32 %v3085, %v3086
      %v3088 = vrot.slane %v3087, 1
      %v3089 = vadd.f32 %v3087, %v3088
      %v3090 = vadd.f32 %v2978, %v3010
      %v3091 = vsel %vm1408, %v3042, 0.0
      %v3092 = vadd.f32 %v3090, %v3091
      %v3093 = vrot.slane %v3092, 4
      %v3094 = vadd.f32 %v3092, %v3093
      %v3095 = vrot.slane %v3094, 2
      %v3096 = vadd.f32 %v3094, %v3095
      %v3097 = vrot.slane %v3096, 1
      %v3098 = vadd.f32 %v3096, %v3097
      %v3099 = vadd.f32 %v2979, %v3011
      %v3100 = vsel %vm1408, %v3043, 0.0
      %v3101 = vadd.f32 %v3099, %v3100
      %v3102 = vrot.slane %v3101, 4
      %v3103 = vadd.f32 %v3101, %v3102
      %v3104 = vrot.slane %v3103, 2
      %v3105 = vadd.f32 %v3103, %v3104
      %v3106 = vrot.slane %v3105, 1
      %v3107 = vadd.f32 %v3105, %v3106
      %v3108 = vadd.f32 %v2980, %v3012
      %v3109 = vsel %vm1408, %v3044, 0.0
      %v3110 = vadd.f32 %v3108, %v3109
      %v3111 = vrot.slane %v3110, 4
      %v3112 = vadd.f32 %v3110, %v3111
      %v3113 = vrot.slane %v3112, 2
      %v3114 = vadd.f32 %v3112, %v3113
      %v3115 = vrot.slane %v3114, 1
      %v3116 = vadd.f32 %v3114, %v3115
      %v3117 = vadd.f32 %v2981, %v3013
      %v3118 = vsel %vm1408, %v3045, 0.0
      %v3119 = vadd.f32 %v3117, %v3118
      %v3120 = vrot.slane %v3119, 4
      %v3121 = vadd.f32 %v3119, %v3120
      %v3122 = vrot.slane %v3121, 2
      %v3123 = vadd.f32 %v3121, %v3122
      %v3124 = vrot.slane %v3123, 1
      %v3125 = vadd.f32 %v3123, %v3124
      %v3126 = vadd.f32 %v2982, %v3014
      %v3127 = vsel %vm1408, %v3046, 0.0
      %v3128 = vadd.f32 %v3126, %v3127
      %v3129 = vrot.slane %v3128, 4
      %v3130 = vadd.f32 %v3128, %v3129
      %v3131 = vrot.slane %v3130, 2
      %v3132 = vadd.f32 %v3130, %v3131
      %v3133 = vrot.slane %v3132, 1
      %v3134 = vadd.f32 %v3132, %v3133
      %v3135 = vadd.f32 %v2983, %v3015
      %v3136 = vsel %vm1408, %v3047, 0.0
      %v3137 = vadd.f32 %v3135, %v3136
      %v3138 = vrot.slane %v3137, 4
      %v3139 = vadd.f32 %v3137, %v3138
      %v3140 = vrot.slane %v3139, 2
      %v3141 = vadd.f32 %v3139, %v3140
      %v3142 = vrot.slane %v3141, 1
      %v3143 = vadd.f32 %v3141, %v3142
      %v3144 = vadd.f32 %v2984, %v3016
      %v3145 = vsel %vm1408, %v3048, 0.0
      %v3146 = vadd.f32 %v3144, %v3145
      %v3147 = vrot.slane %v3146, 4
      %v3148 = vadd.f32 %v3146, %v3147
      %v3149 = vrot.slane %v3148, 2
      %v3150 = vadd.f32 %v3148, %v3149
      %v3151 = vrot.slane %v3150, 1
      %v3152 = vadd.f32 %v3150, %v3151
      %v3153 = vadd.f32 %v2985, %v3017
      %v3154 = vsel %vm1408, %v3049, 0.0
      %v3155 = vadd.f32 %v3153, %v3154
      %v3156 = vrot.slane %v3155, 4
      %v3157 = vadd.f32 %v3155, %v3156
      %v3158 = vrot.slane %v3157, 2
      %v3159 = vadd.f32 %v3157, %v3158
      %v3160 = vrot.slane %v3159, 1
      %v3161 = vadd.f32 %v3159, %v3160
      %v3162 = vadd.f32 %v2986, %v3018
      %v3163 = vsel %vm1408, %v3050, 0.0
      %v3164 = vadd.f32 %v3162, %v3163
      %v3165 = vrot.slane %v3164, 4
      %v3166 = vadd.f32 %v3164, %v3165
      %v3167 = vrot.slane %v3166, 2
      %v3168 = vadd.f32 %v3166, %v3167
      %v3169 = vrot.slane %v3168, 1
      %v3170 = vadd.f32 %v3168, %v3169
      %v3171 = vadd.f32 %v2987, %v3019
      %v3172 = vsel %vm1408, %v3051, 0.0
      %v3173 = vadd.f32 %v3171, %v3172
      %v3174 = vrot.slane %v3173, 4
      %v3175 = vadd.f32 %v3173, %v3174
      %v3176 = vrot.slane %v3175, 2
      %v3177 = vadd.f32 %v3175, %v3176
      %v3178 = vrot.slane %v3177, 1
      %v3179 = vadd.f32 %v3177, %v3178
      %v3180 = vadd.f32 %v2988, %v3020
      %v3181 = vsel %vm1408, %v3052, 0.0
      %v3182 = vadd.f32 %v3180, %v3181
      %v3183 = vrot.slane %v3182, 4
      %v3184 = vadd.f32 %v3182, %v3183
      %v3185 = vrot.slane %v3184, 2
      %v3186 = vadd.f32 %v3184, %v3185
      %v3187 = vrot.slane %v3186, 1
      %v3188 = vadd.f32 %v3186, %v3187
      %v3189 = vadd.f32 %v2989, %v3021
      %v3190 = vsel %vm1408, %v3053, 0.0
      %v3191 = vadd.f32 %v3189, %v3190
      %v3192 = vrot.slane %v3191, 4
      %v3193 = vadd.f32 %v3191, %v3192
      %v3194 = vrot.slane %v3193, 2
      %v3195 = vadd.f32 %v3193, %v3194
      %v3196 = vrot.slane %v3195, 1
      %v3197 = vadd.f32 %v3195, %v3196
      %v3198 = vadd.f32 %v2990, %v3022
      %v3199 = vsel %vm1408, %v3054, 0.0
      %v3200 = vadd.f32 %v3198, %v3199
      %v3201 = vrot.slane %v3200, 4
      %v3202 = vadd.f32 %v3200, %v3201
      %v3203 = vrot.slane %v3202, 2
      %v3204 = vadd.f32 %v3202, %v3203
      %v3205 = vrot.slane %v3204, 1
      %v3206 = vadd.f32 %v3204, %v3205
      %v3207 = vadd.f32 %v2991, %v3023
      %v3208 = vsel %vm1408, %v3055, 0.0
      %v3209 = vadd.f32 %v3207, %v3208
      %v3210 = vrot.slane %v3209, 4
      %v3211 = vadd.f32 %v3209, %v3210
      %v3212 = vrot.slane %v3211, 2
      %v3213 = vadd.f32 %v3211, %v3212
      %v3214 = vrot.slane %v3213, 1
      %v3215 = vadd.f32 %v3213, %v3214
      %v3216 = vadd.f32 %v2992, %v3024
      %v3217 = vsel %vm1408, %v3056, 0.0
      %v3218 = vadd.f32 %v3216, %v3217
      %v3219 = vrot.slane %v3218, 4
      %v3220 = vadd.f32 %v3218, %v3219
      %v3221 = vrot.slane %v3220, 2
      %v3222 = vadd.f32 %v3220, %v3221
      %v3223 = vrot.slane %v3222, 1
      %v3224 = vadd.f32 %v3222, %v3223
      %v3225 = vadd.f32 %v2993, %v3025
      %v3226 = vsel %vm1408, %v3057, 0.0
      %v3227 = vadd.f32 %v3225, %v3226
      %v3228 = vrot.slane %v3227, 4
      %v3229 = vadd.f32 %v3227, %v3228
      %v3230 = vrot.slane %v3229, 2
      %v3231 = vadd.f32 %v3229, %v3230
      %v3232 = vrot.slane %v3231, 1
      %v3233 = vadd.f32 %v3231, %v3232
      %v3234 = vadd.f32 %v2994, %v3026
      %v3235 = vsel %vm1408, %v3058, 0.0
      %v3236 = vadd.f32 %v3234, %v3235
      %v3237 = vrot.slane %v3236, 4
      %v3238 = vadd.f32 %v3236, %v3237
      %v3239 = vrot.slane %v3238, 2
      %v3240 = vadd.f32 %v3238, %v3239
      %v3241 = vrot.slane %v3240, 1
      %v3242 = vadd.f32 %v3240, %v3241
      %v3243 = vadd.f32 %v2995, %v3027
      %v3244 = vsel %vm1408, %v3059, 0.0
      %v3245 = vadd.f32 %v3243, %v3244
      %v3246 = vrot.slane %v3245, 4
      %v3247 = vadd.f32 %v3245, %v3246
      %v3248 = vrot.slane %v3247, 2
      %v3249 = vadd.f32 %v3247, %v3248
      %v3250 = vrot.slane %v3249, 1
      %v3251 = vadd.f32 %v3249, %v3250
      %v3252 = vadd.f32 %v2996, %v3028
      %v3253 = vsel %vm1408, %v3060, 0.0
      %v3254 = vadd.f32 %v3252, %v3253
      %v3255 = vrot.slane %v3254, 4
      %v3256 = vadd.f32 %v3254, %v3255
      %v3257 = vrot.slane %v3256, 2
      %v3258 = vadd.f32 %v3256, %v3257
      %v3259 = vrot.slane %v3258, 1
      %v3260 = vadd.f32 %v3258, %v3259
      %v3261 = vadd.f32 %v2997, %v3029
      %v3262 = vsel %vm1408, %v3061, 0.0
      %v3263 = vadd.f32 %v3261, %v3262
      %v3264 = vrot.slane %v3263, 4
      %v3265 = vadd.f32 %v3263, %v3264
      %v3266 = vrot.slane %v3265, 2
      %v3267 = vadd.f32 %v3265, %v3266
      %v3268 = vrot.slane %v3267, 1
      %v3269 = vadd.f32 %v3267, %v3268
      %v3270 = vadd.f32 %v2998, %v3030
      %v3271 = vsel %vm1408, %v3062, 0.0
      %v3272 = vadd.f32 %v3270, %v3271
      %v3273 = vrot.slane %v3272, 4
      %v3274 = vadd.f32 %v3272, %v3273
      %v3275 = vrot.slane %v3274, 2
      %v3276 = vadd.f32 %v3274, %v3275
      %v3277 = vrot.slane %v3276, 1
      %v3278 = vadd.f32 %v3276, %v3277
      %v3279 = vadd.f32 %v2999, %v3031
      %v3280 = vsel %vm1408, %v3063, 0.0
      %v3281 = vadd.f32 %v3279, %v3280
      %v3282 = vrot.slane %v3281, 4
      %v3283 = vadd.f32 %v3281, %v3282
      %v3284 = vrot.slane %v3283, 2
      %v3285 = vadd.f32 %v3283, %v3284
      %v3286 = vrot.slane %v3285, 1
      %v3287 = vadd.f32 %v3285, %v3286
      %v3288 = vadd.f32 %v3000, %v3032
      %v3289 = vsel %vm1408, %v3064, 0.0
      %v3290 = vadd.f32 %v3288, %v3289
      %v3291 = vrot.slane %v3290, 4
      %v3292 = vadd.f32 %v3290, %v3291
      %v3293 = vrot.slane %v3292, 2
      %v3294 = vadd.f32 %v3292, %v3293
      %v3295 = vrot.slane %v3294, 1
      %v3296 = vadd.f32 %v3294, %v3295
      %v3297 = vadd.f32 %v3001, %v3033
      %v3298 = vsel %vm1408, %v3065, 0.0
      %v3299 = vadd.f32 %v3297, %v3298
      %v3300 = vrot.slane %v3299, 4
      %v3301 = vadd.f32 %v3299, %v3300
      %v3302 = vrot.slane %v3301, 2
      %v3303 = vadd.f32 %v3301, %v3302
      %v3304 = vrot.slane %v3303, 1
      %v3305 = vadd.f32 %v3303, %v3304
      %v3306 = vadd.f32 %v3002, %v3034
      %v3307 = vsel %vm1408, %v3066, 0.0
      %v3308 = vadd.f32 %v3306, %v3307
      %v3309 = vrot.slane %v3308, 4
      %v3310 = vadd.f32 %v3308, %v3309
      %v3311 = vrot.slane %v3310, 2
      %v3312 = vadd.f32 %v3310, %v3311
      %v3313 = vrot.slane %v3312, 1
      %v3314 = vadd.f32 %v3312, %v3313
      %v3315 = vadd.f32 %v3003, %v3035
      %v3316 = vsel %vm1408, %v3067, 0.0
      %v3317 = vadd.f32 %v3315, %v3316
      %v3318 = vrot.slane %v3317, 4
      %v3319 = vadd.f32 %v3317, %v3318
      %v3320 = vrot.slane %v3319, 2
      %v3321 = vadd.f32 %v3319, %v3320
      %v3322 = vrot.slane %v3321, 1
      %v3323 = vadd.f32 %v3321, %v3322
      %v3324 = vadd.f32 %v3004, %v3036
      %v3325 = vsel %vm1408, %v3068, 0.0
      %v3326 = vadd.f32 %v3324, %v3325
      %v3327 = vrot.slane %v3326, 4
      %v3328 = vadd.f32 %v3326, %v3327
      %v3329 = vrot.slane %v3328, 2
      %v3330 = vadd.f32 %v3328, %v3329
      %v3331 = vrot.slane %v3330, 1
      %v3332 = vadd.f32 %v3330, %v3331
      %v3333 = vadd.f32 %v3005, %v3037
      %v3334 = vsel %vm1408, %v3069, 0.0
      %v3335 = vadd.f32 %v3333, %v3334
      %v3336 = vrot.slane %v3335, 4
      %v3337 = vadd.f32 %v3335, %v3336
      %v3338 = vrot.slane %v3337, 2
      %v3339 = vadd.f32 %v3337, %v3338
      %v3340 = vrot.slane %v3339, 1
      %v3341 = vadd.f32 %v3339, %v3340
      %v3342 = vadd.f32 %v3006, %v3038
      %v3343 = vsel %vm1408, %v3070, 0.0
      %v3344 = vadd.f32 %v3342, %v3343
      %v3345 = vrot.slane %v3344, 4
      %v3346 = vadd.f32 %v3344, %v3345
      %v3347 = vrot.slane %v3346, 2
      %v3348 = vadd.f32 %v3346, %v3347
      %v3349 = vrot.slane %v3348, 1
      %v3350 = vadd.f32 %v3348, %v3349
      %v3351 = vadd.f32 %v3007, %v3039
      %v3352 = vsel %vm1408, %v3071, 0.0
      %v3353 = vadd.f32 %v3351, %v3352
      %v3354 = vrot.slane %v3353, 4
      %v3355 = vadd.f32 %v3353, %v3354
      %v3356 = vrot.slane %v3355, 2
      %v3357 = vadd.f32 %v3355, %v3356
      %v3358 = vrot.slane %v3357, 1
      %v3359 = vadd.f32 %v3357, %v3358
      %3361 = vset.pattern.permute.xlu0 0
      %3362 = vperm.xlu0 %3361, %v424
      %v3363 = vpop.permute.xlu0 %3362
      %3366 = vset.pattern.permute.xlu0 0
      %3367 = vperm.xlu0 %3366, %v425
      %v3368 = vpop.permute.xlu0 %3367
      %3371 = vset.pattern.permute.xlu0 0
      %3372 = vperm.xlu0 %3371, %v426
      %v3373 = vpop.permute.xlu0 %3372
      %v3375 = vmul.f32 %v1311, %v3363
      %v3376 = vmul.f32 %v1312, %v3363
      %v3377 = vmul.f32 %v1313, %v3363
      %v3378 = vmul.f32 %v1314, %v3363
      %v3379 = vmul.f32 %v1315, %v3363
      %v3380 = vmul.f32 %v1316, %v3363
      %v3381 = vmul.f32 %v1317, %v3363
      %v3382 = vmul.f32 %v1318, %v3363
      %v3383 = vmul.f32 %v1319, %v3363
      %v3384 = vmul.f32 %v1320, %v3363
      %v3385 = vmul.f32 %v1321, %v3363
      %v3386 = vmul.f32 %v1322, %v3363
      %v3387 = vmul.f32 %v1323, %v3363
      %v3388 = vmul.f32 %v1324, %v3363
      %v3389 = vmul.f32 %v1325, %v3363
      %v3390 = vmul.f32 %v1326, %v3363
      %v3391 = vmul.f32 %v1327, %v3363
      %v3392 = vmul.f32 %v1328, %v3363
      %v3393 = vmul.f32 %v1329, %v3363
      %v3394 = vmul.f32 %v1330, %v3363
      %v3395 = vmul.f32 %v1331, %v3363
      %v3396 = vmul.f32 %v1332, %v3363
      %v3397 = vmul.f32 %v1333, %v3363
      %v3398 = vmul.f32 %v1334, %v3363
      %v3399 = vmul.f32 %v1335, %v3363
      %v3400 = vmul.f32 %v1336, %v3363
      %v3401 = vmul.f32 %v1337, %v3363
      %v3402 = vmul.f32 %v1338, %v3363
      %v3403 = vmul.f32 %v1339, %v3363
      %v3404 = vmul.f32 %v1340, %v3363
      %v3405 = vmul.f32 %v1341, %v3363
      %v3406 = vmul.f32 %v1342, %v3363
      %v3407 = vmul.f32 %v1343, %v3368
      %v3408 = vmul.f32 %v1344, %v3368
      %v3409 = vmul.f32 %v1345, %v3368
      %v3410 = vmul.f32 %v1346, %v3368
      %v3411 = vmul.f32 %v1347, %v3368
      %v3412 = vmul.f32 %v1348, %v3368
      %v3413 = vmul.f32 %v1349, %v3368
      %v3414 = vmul.f32 %v1350, %v3368
      %v3415 = vmul.f32 %v1351, %v3368
      %v3416 = vmul.f32 %v1352, %v3368
      %v3417 = vmul.f32 %v1353, %v3368
      %v3418 = vmul.f32 %v1354, %v3368
      %v3419 = vmul.f32 %v1355, %v3368
      %v3420 = vmul.f32 %v1356, %v3368
      %v3421 = vmul.f32 %v1357, %v3368
      %v3422 = vmul.f32 %v1358, %v3368
      %v3423 = vmul.f32 %v1359, %v3368
      %v3424 = vmul.f32 %v1360, %v3368
      %v3425 = vmul.f32 %v1361, %v3368
      %v3426 = vmul.f32 %v1362, %v3368
      %v3427 = vmul.f32 %v1363, %v3368
      %v3428 = vmul.f32 %v1364, %v3368
      %v3429 = vmul.f32 %v1365, %v3368
      %v3430 = vmul.f32 %v1366, %v3368
      %v3431 = vmul.f32 %v1367, %v3368
      %v3432 = vmul.f32 %v1368, %v3368
      %v3433 = vmul.f32 %v1369, %v3368
      %v3434 = vmul.f32 %v1370, %v3368
      %v3435 = vmul.f32 %v1371, %v3368
      %v3436 = vmul.f32 %v1372, %v3368
      %v3437 = vmul.f32 %v1373, %v3368
      %v3438 = vmul.f32 %v1374, %v3368
      %v3439 = vmul.f32 %v1375, %v3373
      %v3440 = vmul.f32 %v1376, %v3373
      %v3441 = vmul.f32 %v1377, %v3373
      %v3442 = vmul.f32 %v1378, %v3373
      %v3443 = vmul.f32 %v1379, %v3373
      %v3444 = vmul.f32 %v1380, %v3373
      %v3445 = vmul.f32 %v1381, %v3373
      %v3446 = vmul.f32 %v1382, %v3373
      %v3447 = vmul.f32 %v1383, %v3373
      %v3448 = vmul.f32 %v1384, %v3373
      %v3449 = vmul.f32 %v1385, %v3373
      %v3450 = vmul.f32 %v1386, %v3373
      %v3451 = vmul.f32 %v1387, %v3373
      %v3452 = vmul.f32 %v1388, %v3373
      %v3453 = vmul.f32 %v1389, %v3373
      %v3454 = vmul.f32 %v1390, %v3373
      %v3455 = vmul.f32 %v1391, %v3373
      %v3456 = vmul.f32 %v1392, %v3373
      %v3457 = vmul.f32 %v1393, %v3373
      %v3458 = vmul.f32 %v1394, %v3373
      %v3459 = vmul.f32 %v1395, %v3373
      %v3460 = vmul.f32 %v1396, %v3373
      %v3461 = vmul.f32 %v1397, %v3373
      %v3462 = vmul.f32 %v1398, %v3373
      %v3463 = vmul.f32 %v1399, %v3373
      %v3464 = vmul.f32 %v1400, %v3373
      %v3465 = vmul.f32 %v1401, %v3373
      %v3466 = vmul.f32 %v1402, %v3373
      %v3467 = vmul.f32 %v1403, %v3373
      %v3468 = vmul.f32 %v1404, %v3373
      %v3469 = vmul.f32 %v1405, %v3373
      %v3470 = vmul.f32 %v1406, %v3373
      %v3471 = vadd.f32 %v3375, %v3407
      %v3472 = vsel %vm1408, %v3439, 0.0
      %v3473 = vadd.f32 %v3471, %v3472
      %v3474 = vrot.slane %v3473, 4
      %v3475 = vadd.f32 %v3473, %v3474
      %v3476 = vrot.slane %v3475, 2
      %v3477 = vadd.f32 %v3475, %v3476
      %v3478 = vrot.slane %v3477, 1
      %v3479 = vadd.f32 %v3477, %v3478
      %v3480 = vadd.f32 %v3376, %v3408
      %v3481 = vsel %vm1408, %v3440, 0.0
      %v3482 = vadd.f32 %v3480, %v3481
      %v3483 = vrot.slane %v3482, 4
      %v3484 = vadd.f32 %v3482, %v3483
      %v3485 = vrot.slane %v3484, 2
      %v3486 = vadd.f32 %v3484, %v3485
      %v3487 = vrot.slane %v3486, 1
      %v3488 = vadd.f32 %v3486, %v3487
      %v3489 = vadd.f32 %v3377, %v3409
      %v3490 = vsel %vm1408, %v3441, 0.0
      %v3491 = vadd.f32 %v3489, %v3490
      %v3492 = vrot.slane %v3491, 4
      %v3493 = vadd.f32 %v3491, %v3492
      %v3494 = vrot.slane %v3493, 2
      %v3495 = vadd.f32 %v3493, %v3494
      %v3496 = vrot.slane %v3495, 1
      %v3497 = vadd.f32 %v3495, %v3496
      %v3498 = vadd.f32 %v3378, %v3410
      %v3499 = vsel %vm1408, %v3442, 0.0
      %v3500 = vadd.f32 %v3498, %v3499
      %v3501 = vrot.slane %v3500, 4
      %v3502 = vadd.f32 %v3500, %v3501
      %v3503 = vrot.slane %v3502, 2
      %v3504 = vadd.f32 %v3502, %v3503
      %v3505 = vrot.slane %v3504, 1
      %v3506 = vadd.f32 %v3504, %v3505
      %v3507 = vadd.f32 %v3379, %v3411
      %v3508 = vsel %vm1408, %v3443, 0.0
      %v3509 = vadd.f32 %v3507, %v3508
      %v3510 = vrot.slane %v3509, 4
      %v3511 = vadd.f32 %v3509, %v3510
      %v3512 = vrot.slane %v3511, 2
      %v3513 = vadd.f32 %v3511, %v3512
      %v3514 = vrot.slane %v3513, 1
      %v3515 = vadd.f32 %v3513, %v3514
      %v3516 = vadd.f32 %v3380, %v3412
      %v3517 = vsel %vm1408, %v3444, 0.0
      %v3518 = vadd.f32 %v3516, %v3517
      %v3519 = vrot.slane %v3518, 4
      %v3520 = vadd.f32 %v3518, %v3519
      %v3521 = vrot.slane %v3520, 2
      %v3522 = vadd.f32 %v3520, %v3521
      %v3523 = vrot.slane %v3522, 1
      %v3524 = vadd.f32 %v3522, %v3523
      %v3525 = vadd.f32 %v3381, %v3413
      %v3526 = vsel %vm1408, %v3445, 0.0
      %v3527 = vadd.f32 %v3525, %v3526
      %v3528 = vrot.slane %v3527, 4
      %v3529 = vadd.f32 %v3527, %v3528
      %v3530 = vrot.slane %v3529, 2
      %v3531 = vadd.f32 %v3529, %v3530
      %v3532 = vrot.slane %v3531, 1
      %v3533 = vadd.f32 %v3531, %v3532
      %v3534 = vadd.f32 %v3382, %v3414
      %v3535 = vsel %vm1408, %v3446, 0.0
      %v3536 = vadd.f32 %v3534, %v3535
      %v3537 = vrot.slane %v3536, 4
      %v3538 = vadd.f32 %v3536, %v3537
      %v3539 = vrot.slane %v3538, 2
      %v3540 = vadd.f32 %v3538, %v3539
      %v3541 = vrot.slane %v3540, 1
      %v3542 = vadd.f32 %v3540, %v3541
      %v3543 = vadd.f32 %v3383, %v3415
      %v3544 = vsel %vm1408, %v3447, 0.0
      %v3545 = vadd.f32 %v3543, %v3544
      %v3546 = vrot.slane %v3545, 4
      %v3547 = vadd.f32 %v3545, %v3546
      %v3548 = vrot.slane %v3547, 2
      %v3549 = vadd.f32 %v3547, %v3548
      %v3550 = vrot.slane %v3549, 1
      %v3551 = vadd.f32 %v3549, %v3550
      %v3552 = vadd.f32 %v3384, %v3416
      %v3553 = vsel %vm1408, %v3448, 0.0
      %v3554 = vadd.f32 %v3552, %v3553
      %v3555 = vrot.slane %v3554, 4
      %v3556 = vadd.f32 %v3554, %v3555
      %v3557 = vrot.slane %v3556, 2
      %v3558 = vadd.f32 %v3556, %v3557
      %v3559 = vrot.slane %v3558, 1
      %v3560 = vadd.f32 %v3558, %v3559
      %v3561 = vadd.f32 %v3385, %v3417
      %v3562 = vsel %vm1408, %v3449, 0.0
      %v3563 = vadd.f32 %v3561, %v3562
      %v3564 = vrot.slane %v3563, 4
      %v3565 = vadd.f32 %v3563, %v3564
      %v3566 = vrot.slane %v3565, 2
      %v3567 = vadd.f32 %v3565, %v3566
      %v3568 = vrot.slane %v3567, 1
      %v3569 = vadd.f32 %v3567, %v3568
      %v3570 = vadd.f32 %v3386, %v3418
      %v3571 = vsel %vm1408, %v3450, 0.0
      %v3572 = vadd.f32 %v3570, %v3571
      %v3573 = vrot.slane %v3572, 4
      %v3574 = vadd.f32 %v3572, %v3573
      %v3575 = vrot.slane %v3574, 2
      %v3576 = vadd.f32 %v3574, %v3575
      %v3577 = vrot.slane %v3576, 1
      %v3578 = vadd.f32 %v3576, %v3577
      %v3579 = vadd.f32 %v3387, %v3419
      %v3580 = vsel %vm1408, %v3451, 0.0
      %v3581 = vadd.f32 %v3579, %v3580
      %v3582 = vrot.slane %v3581, 4
      %v3583 = vadd.f32 %v3581, %v3582
      %v3584 = vrot.slane %v3583, 2
      %v3585 = vadd.f32 %v3583, %v3584
      %v3586 = vrot.slane %v3585, 1
      %v3587 = vadd.f32 %v3585, %v3586
      %v3588 = vadd.f32 %v3388, %v3420
      %v3589 = vsel %vm1408, %v3452, 0.0
      %v3590 = vadd.f32 %v3588, %v3589
      %v3591 = vrot.slane %v3590, 4
      %v3592 = vadd.f32 %v3590, %v3591
      %v3593 = vrot.slane %v3592, 2
      %v3594 = vadd.f32 %v3592, %v3593
      %v3595 = vrot.slane %v3594, 1
      %v3596 = vadd.f32 %v3594, %v3595
      %v3597 = vadd.f32 %v3389, %v3421
      %v3598 = vsel %vm1408, %v3453, 0.0
      %v3599 = vadd.f32 %v3597, %v3598
      %v3600 = vrot.slane %v3599, 4
      %v3601 = vadd.f32 %v3599, %v3600
      %v3602 = vrot.slane %v3601, 2
      %v3603 = vadd.f32 %v3601, %v3602
      %v3604 = vrot.slane %v3603, 1
      %v3605 = vadd.f32 %v3603, %v3604
      %v3606 = vadd.f32 %v3390, %v3422
      %v3607 = vsel %vm1408, %v3454, 0.0
      %v3608 = vadd.f32 %v3606, %v3607
      %v3609 = vrot.slane %v3608, 4
      %v3610 = vadd.f32 %v3608, %v3609
      %v3611 = vrot.slane %v3610, 2
      %v3612 = vadd.f32 %v3610, %v3611
      %v3613 = vrot.slane %v3612, 1
      %v3614 = vadd.f32 %v3612, %v3613
      %v3615 = vadd.f32 %v3391, %v3423
      %v3616 = vsel %vm1408, %v3455, 0.0
      %v3617 = vadd.f32 %v3615, %v3616
      %v3618 = vrot.slane %v3617, 4
      %v3619 = vadd.f32 %v3617, %v3618
      %v3620 = vrot.slane %v3619, 2
      %v3621 = vadd.f32 %v3619, %v3620
      %v3622 = vrot.slane %v3621, 1
      %v3623 = vadd.f32 %v3621, %v3622
      %v3624 = vadd.f32 %v3392, %v3424
      %v3625 = vsel %vm1408, %v3456, 0.0
      %v3626 = vadd.f32 %v3624, %v3625
      %v3627 = vrot.slane %v3626, 4
      %v3628 = vadd.f32 %v3626, %v3627
      %v3629 = vrot.slane %v3628, 2
      %v3630 = vadd.f32 %v3628, %v3629
      %v3631 = vrot.slane %v3630, 1
      %v3632 = vadd.f32 %v3630, %v3631
      %v3633 = vadd.f32 %v3393, %v3425
      %v3634 = vsel %vm1408, %v3457, 0.0
      %v3635 = vadd.f32 %v3633, %v3634
      %v3636 = vrot.slane %v3635, 4
      %v3637 = vadd.f32 %v3635, %v3636
      %v3638 = vrot.slane %v3637, 2
      %v3639 = vadd.f32 %v3637, %v3638
      %v3640 = vrot.slane %v3639, 1
      %v3641 = vadd.f32 %v3639, %v3640
      %v3642 = vadd.f32 %v3394, %v3426
      %v3643 = vsel %vm1408, %v3458, 0.0
      %v3644 = vadd.f32 %v3642, %v3643
      %v3645 = vrot.slane %v3644, 4
      %v3646 = vadd.f32 %v3644, %v3645
      %v3647 = vrot.slane %v3646, 2
      %v3648 = vadd.f32 %v3646, %v3647
      %v3649 = vrot.slane %v3648, 1
      %v3650 = vadd.f32 %v3648, %v3649
      %v3651 = vadd.f32 %v3395, %v3427
      %v3652 = vsel %vm1408, %v3459, 0.0
      %v3653 = vadd.f32 %v3651, %v3652
      %v3654 = vrot.slane %v3653, 4
      %v3655 = vadd.f32 %v3653, %v3654
      %v3656 = vrot.slane %v3655, 2
      %v3657 = vadd.f32 %v3655, %v3656
      %v3658 = vrot.slane %v3657, 1
      %v3659 = vadd.f32 %v3657, %v3658
      %v3660 = vadd.f32 %v3396, %v3428
      %v3661 = vsel %vm1408, %v3460, 0.0
      %v3662 = vadd.f32 %v3660, %v3661
      %v3663 = vrot.slane %v3662, 4
      %v3664 = vadd.f32 %v3662, %v3663
      %v3665 = vrot.slane %v3664, 2
      %v3666 = vadd.f32 %v3664, %v3665
      %v3667 = vrot.slane %v3666, 1
      %v3668 = vadd.f32 %v3666, %v3667
      %v3669 = vadd.f32 %v3397, %v3429
      %v3670 = vsel %vm1408, %v3461, 0.0
      %v3671 = vadd.f32 %v3669, %v3670
      %v3672 = vrot.slane %v3671, 4
      %v3673 = vadd.f32 %v3671, %v3672
      %v3674 = vrot.slane %v3673, 2
      %v3675 = vadd.f32 %v3673, %v3674
      %v3676 = vrot.slane %v3675, 1
      %v3677 = vadd.f32 %v3675, %v3676
      %v3678 = vadd.f32 %v3398, %v3430
      %v3679 = vsel %vm1408, %v3462, 0.0
      %v3680 = vadd.f32 %v3678, %v3679
      %v3681 = vrot.slane %v3680, 4
      %v3682 = vadd.f32 %v3680, %v3681
      %v3683 = vrot.slane %v3682, 2
      %v3684 = vadd.f32 %v3682, %v3683
      %v3685 = vrot.slane %v3684, 1
      %v3686 = vadd.f32 %v3684, %v3685
      %v3687 = vadd.f32 %v3399, %v3431
      %v3688 = vsel %vm1408, %v3463, 0.0
      %v3689 = vadd.f32 %v3687, %v3688
      %v3690 = vrot.slane %v3689, 4
      %v3691 = vadd.f32 %v3689, %v3690
      %v3692 = vrot.slane %v3691, 2
      %v3693 = vadd.f32 %v3691, %v3692
      %v3694 = vrot.slane %v3693, 1
      %v3695 = vadd.f32 %v3693, %v3694
      %v3696 = vadd.f32 %v3400, %v3432
      %v3697 = vsel %vm1408, %v3464, 0.0
      %v3698 = vadd.f32 %v3696, %v3697
      %v3699 = vrot.slane %v3698, 4
      %v3700 = vadd.f32 %v3698, %v3699
      %v3701 = vrot.slane %v3700, 2
      %v3702 = vadd.f32 %v3700, %v3701
      %v3703 = vrot.slane %v3702, 1
      %v3704 = vadd.f32 %v3702, %v3703
      %v3705 = vadd.f32 %v3401, %v3433
      %v3706 = vsel %vm1408, %v3465, 0.0
      %v3707 = vadd.f32 %v3705, %v3706
      %v3708 = vrot.slane %v3707, 4
      %v3709 = vadd.f32 %v3707, %v3708
      %v3710 = vrot.slane %v3709, 2
      %v3711 = vadd.f32 %v3709, %v3710
      %v3712 = vrot.slane %v3711, 1
      %v3713 = vadd.f32 %v3711, %v3712
      %v3714 = vadd.f32 %v3402, %v3434
      %v3715 = vsel %vm1408, %v3466, 0.0
      %v3716 = vadd.f32 %v3714, %v3715
      %v3717 = vrot.slane %v3716, 4
      %v3718 = vadd.f32 %v3716, %v3717
      %v3719 = vrot.slane %v3718, 2
      %v3720 = vadd.f32 %v3718, %v3719
      %v3721 = vrot.slane %v3720, 1
      %v3722 = vadd.f32 %v3720, %v3721
      %v3723 = vadd.f32 %v3403, %v3435
      %v3724 = vsel %vm1408, %v3467, 0.0
      %v3725 = vadd.f32 %v3723, %v3724
      %v3726 = vrot.slane %v3725, 4
      %v3727 = vadd.f32 %v3725, %v3726
      %v3728 = vrot.slane %v3727, 2
      %v3729 = vadd.f32 %v3727, %v3728
      %v3730 = vrot.slane %v3729, 1
      %v3731 = vadd.f32 %v3729, %v3730
      %v3732 = vadd.f32 %v3404, %v3436
      %v3733 = vsel %vm1408, %v3468, 0.0
      %v3734 = vadd.f32 %v3732, %v3733
      %v3735 = vrot.slane %v3734, 4
      %v3736 = vadd.f32 %v3734, %v3735
      %v3737 = vrot.slane %v3736, 2
      %v3738 = vadd.f32 %v3736, %v3737
      %v3739 = vrot.slane %v3738, 1
      %v3740 = vadd.f32 %v3738, %v3739
      %v3741 = vadd.f32 %v3405, %v3437
      %v3742 = vsel %vm1408, %v3469, 0.0
      %v3743 = vadd.f32 %v3741, %v3742
      %v3744 = vrot.slane %v3743, 4
      %v3745 = vadd.f32 %v3743, %v3744
      %v3746 = vrot.slane %v3745, 2
      %v3747 = vadd.f32 %v3745, %v3746
      %v3748 = vrot.slane %v3747, 1
      %v3749 = vadd.f32 %v3747, %v3748
      %v3750 = vadd.f32 %v3406, %v3438
      %v3751 = vsel %vm1408, %v3470, 0.0
      %v3752 = vadd.f32 %v3750, %v3751
      %v3753 = vrot.slane %v3752, 4
      %v3754 = vadd.f32 %v3752, %v3753
      %v3755 = vrot.slane %v3754, 2
      %v3756 = vadd.f32 %v3754, %v3755
      %v3757 = vrot.slane %v3756, 1
      %v3758 = vadd.f32 %v3756, %v3757
      %v3759 = vsub.f32 %v2944, %v3080
      %v3760 = vsub.f32 %v2945, %v3089
      %v3761 = vsub.f32 %v2946, %v3098
      %v3762 = vsub.f32 %v2947, %v3107
      %v3763 = vsub.f32 %v2948, %v3116
      %v3764 = vsub.f32 %v2949, %v3125
      %v3765 = vsub.f32 %v2950, %v3134
      %v3766 = vsub.f32 %v2951, %v3143
      %v3767 = vsub.f32 %v2952, %v3152
      %v3768 = vsub.f32 %v2953, %v3161
      %v3769 = vsub.f32 %v2954, %v3170
      %v3770 = vsub.f32 %v2955, %v3179
      %v3771 = vsub.f32 %v2956, %v3188
      %v3772 = vsub.f32 %v2957, %v3197
      %v3773 = vsub.f32 %v2958, %v3206
      %v3774 = vsub.f32 %v2959, %v3215
      %v3775 = vsub.f32 %v2960, %v3224
      %v3776 = vsub.f32 %v2961, %v3233
      %v3777 = vsub.f32 %v2962, %v3242
      %v3778 = vsub.f32 %v2963, %v3251
      %v3779 = vsub.f32 %v2964, %v3260
      %v3780 = vsub.f32 %v2965, %v3269
      %v3781 = vsub.f32 %v2966, %v3278
      %v3782 = vsub.f32 %v2967, %v3287
      %v3783 = vsub.f32 %v2968, %v3296
      %v3784 = vsub.f32 %v2969, %v3305
      %v3785 = vsub.f32 %v2970, %v3314
      %v3786 = vsub.f32 %v2971, %v3323
      %v3787 = vsub.f32 %v2972, %v3332
      %v3788 = vsub.f32 %v2973, %v3341
      %v3789 = vsub.f32 %v2974, %v3350
      %v3790 = vsub.f32 %v2975, %v3359
      %v3791 = vmul.f32 %v3759, %v3479
      %v3792 = vmul.f32 %v3760, %v3488
      %v3793 = vmul.f32 %v3761, %v3497
      %v3794 = vmul.f32 %v3762, %v3506
      %v3795 = vmul.f32 %v3763, %v3515
      %v3796 = vmul.f32 %v3764, %v3524
      %v3797 = vmul.f32 %v3765, %v3533
      %v3798 = vmul.f32 %v3766, %v3542
      %v3799 = vmul.f32 %v3767, %v3551
      %v3800 = vmul.f32 %v3768, %v3560
      %v3801 = vmul.f32 %v3769, %v3569
      %v3802 = vmul.f32 %v3770, %v3578
      %v3803 = vmul.f32 %v3771, %v3587
      %v3804 = vmul.f32 %v3772, %v3596
      %v3805 = vmul.f32 %v3773, %v3605
      %v3806 = vmul.f32 %v3774, %v3614
      %v3807 = vmul.f32 %v3775, %v3623
      %v3808 = vmul.f32 %v3776, %v3632
      %v3809 = vmul.f32 %v3777, %v3641
      %v3810 = vmul.f32 %v3778, %v3650
      %v3811 = vmul.f32 %v3779, %v3659
      %v3812 = vmul.f32 %v3780, %v3668
      %v3813 = vmul.f32 %v3781, %v3677
      %v3814 = vmul.f32 %v3782, %v3686
      %v3815 = vmul.f32 %v3783, %v3695
      %v3816 = vmul.f32 %v3784, %v3704
      %v3817 = vmul.f32 %v3785, %v3713
      %v3818 = vmul.f32 %v3786, %v3722
      %v3819 = vmul.f32 %v3787, %v3731
      %v3820 = vmul.f32 %v3788, %v3740
      %v3821 = vmul.f32 %v3789, %v3749
      %v3822 = vmul.f32 %v3790, %v3758
      %v3823 = vadd.f32 %v3791, %v3792
      %v3824 = vadd.f32 %v3823, %v3793
      %v3825 = vadd.f32 %v3824, %v3794
      %v3826 = vadd.f32 %v3825, %v3795
      %v3827 = vadd.f32 %v3826, %v3796
      %v3828 = vadd.f32 %v3827, %v3797
      %v3829 = vadd.f32 %v3828, %v3798
      %v3830 = vadd.f32 %v3829, %v3799
      %v3831 = vadd.f32 %v3830, %v3800
      %v3832 = vadd.f32 %v3831, %v3801
      %v3833 = vadd.f32 %v3832, %v3802
      %v3834 = vadd.f32 %v3833, %v3803
      %v3835 = vadd.f32 %v3834, %v3804
      %v3836 = vadd.f32 %v3835, %v3805
      %v3837 = vadd.f32 %v3836, %v3806
      %v3838 = vadd.f32 %v3837, %v3807
      %v3839 = vadd.f32 %v3838, %v3808
      %v3840 = vadd.f32 %v3839, %v3809
      %v3841 = vadd.f32 %v3840, %v3810
      %v3842 = vadd.f32 %v3841, %v3811
      %v3843 = vadd.f32 %v3842, %v3812
      %v3844 = vadd.f32 %v3843, %v3813
      %v3845 = vadd.f32 %v3844, %v3814
      %v3846 = vadd.f32 %v3845, %v3815
      %v3847 = vadd.f32 %v3846, %v3816
      %v3848 = vadd.f32 %v3847, %v3817
      %v3849 = vadd.f32 %v3848, %v3818
      %v3850 = vadd.f32 %v3849, %v3819
      %v3851 = vadd.f32 %v3850, %v3820
      %v3852 = vadd.f32 %v3851, %v3821
      %v3853 = vadd.f32 %v3852, %v3822
      %3854 = vadd.xlane.f32.xlu0 %v3853
      %v3855 = vpop.xlane.xlu0 %3854
      %v3856 = vadd.f32 %v3479, %v3488
      %v3857 = vadd.f32 %v3856, %v3497
      %v3858 = vadd.f32 %v3857, %v3506
      %v3859 = vadd.f32 %v3858, %v3515
      %v3860 = vadd.f32 %v3859, %v3524
      %v3861 = vadd.f32 %v3860, %v3533
      %v3862 = vadd.f32 %v3861, %v3542
      %v3863 = vadd.f32 %v3862, %v3551
      %v3864 = vadd.f32 %v3863, %v3560
      %v3865 = vadd.f32 %v3864, %v3569
      %v3866 = vadd.f32 %v3865, %v3578
      %v3867 = vadd.f32 %v3866, %v3587
      %v3868 = vadd.f32 %v3867, %v3596
      %v3869 = vadd.f32 %v3868, %v3605
      %v3870 = vadd.f32 %v3869, %v3614
      %v3871 = vadd.f32 %v3870, %v3623
      %v3872 = vadd.f32 %v3871, %v3632
      %v3873 = vadd.f32 %v3872, %v3641
      %v3874 = vadd.f32 %v3873, %v3650
      %v3875 = vadd.f32 %v3874, %v3659
      %v3876 = vadd.f32 %v3875, %v3668
      %v3877 = vadd.f32 %v3876, %v3677
      %v3878 = vadd.f32 %v3877, %v3686
      %v3879 = vadd.f32 %v3878, %v3695
      %v3880 = vadd.f32 %v3879, %v3704
      %v3881 = vadd.f32 %v3880, %v3713
      %v3882 = vadd.f32 %v3881, %v3722
      %v3883 = vadd.f32 %v3882, %v3731
      %v3884 = vadd.f32 %v3883, %v3740
      %v3885 = vadd.f32 %v3884, %v3749
      %v3886 = vadd.f32 %v3885, %v3758
      %3887 = vadd.xlane.f32.xlu0 %v3886
      %v3888 = vpop.xlane.xlu0 %3887
      %v3889 = vld [vmem:[%s297] sm:$0x1]
      %vm3890 = vcmask 7168
      %v3891 = vsel %vm3890, %v3855, %v3888
      %v3892 = vadd.f32 %v3889, %v3891
      %vm3893 = vcmask 8192
      %3894 = vst.msk [vmem:[%s297] sm:$0x1] %vm3893, %v3892
      %v3895 = vld [vmem:[%s292] sm:$0xff]
      %v3896 = vld [vmem:[%s292 + $0x8] sm:$0xff]
      %v3897 = vld [vmem:[%s292 + $0x10] sm:$0x1f]
      %v3898 = vmul.f32 %v2784, %v1311
      %v3899 = vmul.f32 %v2785, %v1312
      %v3900 = vmul.f32 %v2786, %v1313
      %v3901 = vmul.f32 %v2787, %v1314
      %v3902 = vmul.f32 %v2788, %v1315
      %v3903 = vmul.f32 %v2789, %v1316
      %v3904 = vmul.f32 %v2790, %v1317
      %v3905 = vmul.f32 %v2791, %v1318
      %v3906 = vmul.f32 %v2792, %v1319
      %v3907 = vmul.f32 %v2793, %v1320
      %v3908 = vmul.f32 %v2794, %v1321
      %v3909 = vmul.f32 %v2795, %v1322
      %v3910 = vmul.f32 %v2796, %v1323
      %v3911 = vmul.f32 %v2797, %v1324
      %v3912 = vmul.f32 %v2798, %v1325
      %v3913 = vmul.f32 %v2799, %v1326
      %v3914 = vmul.f32 %v2800, %v1327
      %v3915 = vmul.f32 %v2801, %v1328
      %v3916 = vmul.f32 %v2802, %v1329
      %v3917 = vmul.f32 %v2803, %v1330
      %v3918 = vmul.f32 %v2804, %v1331
      %v3919 = vmul.f32 %v2805, %v1332
      %v3920 = vmul.f32 %v2806, %v1333
      %v3921 = vmul.f32 %v2807, %v1334
      %v3922 = vmul.f32 %v2808, %v1335
      %v3923 = vmul.f32 %v2809, %v1336
      %v3924 = vmul.f32 %v2810, %v1337
      %v3925 = vmul.f32 %v2811, %v1338
      %v3926 = vmul.f32 %v2812, %v1339
      %v3927 = vmul.f32 %v2813, %v1340
      %v3928 = vmul.f32 %v2814, %v1341
      %v3929 = vmul.f32 %v2815, %v1342
      %v3930 = vmul.f32 %v2816, %v1343
      %v3931 = vmul.f32 %v2817, %v1344
      %v3932 = vmul.f32 %v2818, %v1345
      %v3933 = vmul.f32 %v2819, %v1346
      %v3934 = vmul.f32 %v2820, %v1347
      %v3935 = vmul.f32 %v2821, %v1348
      %v3936 = vmul.f32 %v2822, %v1349
      %v3937 = vmul.f32 %v2823, %v1350
      %v3938 = vmul.f32 %v2824, %v1351
      %v3939 = vmul.f32 %v2825, %v1352
      %v3940 = vmul.f32 %v2826, %v1353
      %v3941 = vmul.f32 %v2827, %v1354
      %v3942 = vmul.f32 %v2828, %v1355
      %v3943 = vmul.f32 %v2829, %v1356
      %v3944 = vmul.f32 %v2830, %v1357
      %v3945 = vmul.f32 %v2831, %v1358
      %v3946 = vmul.f32 %v2832, %v1359
      %v3947 = vmul.f32 %v2833, %v1360
      %v3948 = vmul.f32 %v2834, %v1361
      %v3949 = vmul.f32 %v2835, %v1362
      %v3950 = vmul.f32 %v2836, %v1363
      %v3951 = vmul.f32 %v2837, %v1364
      %v3952 = vmul.f32 %v2838, %v1365
      %v3953 = vmul.f32 %v2839, %v1366
      %v3954 = vmul.f32 %v2840, %v1367
      %v3955 = vmul.f32 %v2841, %v1368
      %v3956 = vmul.f32 %v2842, %v1369
      %v3957 = vmul.f32 %v2843, %v1370
      %v3958 = vmul.f32 %v2844, %v1371
      %v3959 = vmul.f32 %v2845, %v1372
      %v3960 = vmul.f32 %v2846, %v1373
      %v3961 = vmul.f32 %v2847, %v1374
      %v3962 = vmul.f32 %v2848, %v1375
      %v3963 = vmul.f32 %v2849, %v1376
      %v3964 = vmul.f32 %v2850, %v1377
      %v3965 = vmul.f32 %v2851, %v1378
      %v3966 = vmul.f32 %v2852, %v1379
      %v3967 = vmul.f32 %v2853, %v1380
      %v3968 = vmul.f32 %v2854, %v1381
      %v3969 = vmul.f32 %v2855, %v1382
      %v3970 = vmul.f32 %v2856, %v1383
      %v3971 = vmul.f32 %v2857, %v1384
      %v3972 = vmul.f32 %v2858, %v1385
      %v3973 = vmul.f32 %v2859, %v1386
      %v3974 = vmul.f32 %v2860, %v1387
      %v3975 = vmul.f32 %v2861, %v1388
      %v3976 = vmul.f32 %v2862, %v1389
      %v3977 = vmul.f32 %v2863, %v1390
      %v3978 = vmul.f32 %v2864, %v1391
      %v3979 = vmul.f32 %v2865, %v1392
      %v3980 = vmul.f32 %v2866, %v1393
      %v3981 = vmul.f32 %v2867, %v1394
      %v3982 = vmul.f32 %v2868, %v1395
      %v3983 = vmul.f32 %v2869, %v1396
      %v3984 = vmul.f32 %v2870, %v1397
      %v3985 = vmul.f32 %v2871, %v1398
      %v3986 = vmul.f32 %v2872, %v1399
      %v3987 = vmul.f32 %v2873, %v1400
      %v3988 = vmul.f32 %v2874, %v1401
      %v3989 = vmul.f32 %v2875, %v1402
      %v3990 = vmul.f32 %v2876, %v1403
      %v3991 = vmul.f32 %v2877, %v1404
      %v3992 = vmul.f32 %v2878, %v1405
      %v3993 = vmul.f32 %v2879, %v1406
      %v3994 = vadd.f32 %v3898, %v3899
      %v3995 = vadd.f32 %v3994, %v3900
      %v3996 = vadd.f32 %v3995, %v3901
      %v3997 = vadd.f32 %v3996, %v3902
      %v3998 = vadd.f32 %v3997, %v3903
      %v3999 = vadd.f32 %v3998, %v3904
      %v4000 = vadd.f32 %v3999, %v3905
      %v4001 = vadd.f32 %v4000, %v3906
      %v4002 = vadd.f32 %v4001, %v3907
      %v4003 = vadd.f32 %v4002, %v3908
      %v4004 = vadd.f32 %v4003, %v3909
      %v4005 = vadd.f32 %v4004, %v3910
      %v4006 = vadd.f32 %v4005, %v3911
      %v4007 = vadd.f32 %v4006, %v3912
      %v4008 = vadd.f32 %v4007, %v3913
      %v4009 = vadd.f32 %v4008, %v3914
      %v4010 = vadd.f32 %v4009, %v3915
      %v4011 = vadd.f32 %v4010, %v3916
      %v4012 = vadd.f32 %v4011, %v3917
      %v4013 = vadd.f32 %v4012, %v3918
      %v4014 = vadd.f32 %v4013, %v3919
      %v4015 = vadd.f32 %v4014, %v3920
      %v4016 = vadd.f32 %v4015, %v3921
      %v4017 = vadd.f32 %v4016, %v3922
      %v4018 = vadd.f32 %v4017, %v3923
      %v4019 = vadd.f32 %v4018, %v3924
      %v4020 = vadd.f32 %v4019, %v3925
      %v4021 = vadd.f32 %v4020, %v3926
      %v4022 = vadd.f32 %v4021, %v3927
      %v4023 = vadd.f32 %v4022, %v3928
      %v4024 = vadd.f32 %v4023, %v3929
      %4025 = vadd.xlane.f32.xlu0 %v4024
      %v4026 = vpop.xlane.xlu0 %4025
      %v4027 = vadd.f32 %v3930, %v3931
      %v4028 = vadd.f32 %v4027, %v3932
      %v4029 = vadd.f32 %v4028, %v3933
      %v4030 = vadd.f32 %v4029, %v3934
      %v4031 = vadd.f32 %v4030, %v3935
      %v4032 = vadd.f32 %v4031, %v3936
      %v4033 = vadd.f32 %v4032, %v3937
      %v4034 = vadd.f32 %v4033, %v3938
      %v4035 = vadd.f32 %v4034, %v3939
      %v4036 = vadd.f32 %v4035, %v3940
      %v4037 = vadd.f32 %v4036, %v3941
      %v4038 = vadd.f32 %v4037, %v3942
      %v4039 = vadd.f32 %v4038, %v3943
      %v4040 = vadd.f32 %v4039, %v3944
      %v4041 = vadd.f32 %v4040, %v3945
      %v4042 = vadd.f32 %v4041, %v3946
      %v4043 = vadd.f32 %v4042, %v3947
      %v4044 = vadd.f32 %v4043, %v3948
      %v4045 = vadd.f32 %v4044, %v3949
      %v4046 = vadd.f32 %v4045, %v3950
      %v4047 = vadd.f32 %v4046, %v3951
      %v4048 = vadd.f32 %v4047, %v3952
      %v4049 = vadd.f32 %v4048, %v3953
      %v4050 = vadd.f32 %v4049, %v3954
      %v4051 = vadd.f32 %v4050, %v3955
      %v4052 = vadd.f32 %v4051, %v3956
      %v4053 = vadd.f32 %v4052, %v3957
      %v4054 = vadd.f32 %v4053, %v3958
      %v4055 = vadd.f32 %v4054, %v3959
      %v4056 = vadd.f32 %v4055, %v3960
      %v4057 = vadd.f32 %v4056, %v3961
      %4058 = vadd.xlane.f32.xlu0 %v4057
      %v4059 = vpop.xlane.xlu0 %4058
      %v4060 = vsel %vm1408, %v3962, 0.0
      %v4061 = vsel %vm1408, %v3963, 0.0
      %v4062 = vadd.f32 %v4060, %v4061
      %v4063 = vsel %vm1408, %v3964, 0.0
      %v4064 = vadd.f32 %v4062, %v4063
      %v4065 = vsel %vm1408, %v3965, 0.0
      %v4066 = vadd.f32 %v4064, %v4065
      %v4067 = vsel %vm1408, %v3966, 0.0
      %v4068 = vadd.f32 %v4066, %v4067
      %v4069 = vsel %vm1408, %v3967, 0.0
      %v4070 = vadd.f32 %v4068, %v4069
      %v4071 = vsel %vm1408, %v3968, 0.0
      %v4072 = vadd.f32 %v4070, %v4071
      %v4073 = vsel %vm1408, %v3969, 0.0
      %v4074 = vadd.f32 %v4072, %v4073
      %v4075 = vsel %vm1408, %v3970, 0.0
      %v4076 = vadd.f32 %v4074, %v4075
      %v4077 = vsel %vm1408, %v3971, 0.0
      %v4078 = vadd.f32 %v4076, %v4077
      %v4079 = vsel %vm1408, %v3972, 0.0
      %v4080 = vadd.f32 %v4078, %v4079
      %v4081 = vsel %vm1408, %v3973, 0.0
      %v4082 = vadd.f32 %v4080, %v4081
      %v4083 = vsel %vm1408, %v3974, 0.0
      %v4084 = vadd.f32 %v4082, %v4083
      %v4085 = vsel %vm1408, %v3975, 0.0
      %v4086 = vadd.f32 %v4084, %v4085
      %v4087 = vsel %vm1408, %v3976, 0.0
      %v4088 = vadd.f32 %v4086, %v4087
      %v4089 = vsel %vm1408, %v3977, 0.0
      %v4090 = vadd.f32 %v4088, %v4089
      %v4091 = vsel %vm1408, %v3978, 0.0
      %v4092 = vadd.f32 %v4090, %v4091
      %v4093 = vsel %vm1408, %v3979, 0.0
      %v4094 = vadd.f32 %v4092, %v4093
      %v4095 = vsel %vm1408, %v3980, 0.0
      %v4096 = vadd.f32 %v4094, %v4095
      %v4097 = vsel %vm1408, %v3981, 0.0
      %v4098 = vadd.f32 %v4096, %v4097
      %v4099 = vsel %vm1408, %v3982, 0.0
      %v4100 = vadd.f32 %v4098, %v4099
      %v4101 = vsel %vm1408, %v3983, 0.0
      %v4102 = vadd.f32 %v4100, %v4101
      %v4103 = vsel %vm1408, %v3984, 0.0
      %v4104 = vadd.f32 %v4102, %v4103
      %v4105 = vsel %vm1408, %v3985, 0.0
      %v4106 = vadd.f32 %v4104, %v4105
      %v4107 = vsel %vm1408, %v3986, 0.0
      %v4108 = vadd.f32 %v4106, %v4107
      %v4109 = vsel %vm1408, %v3987, 0.0
      %v4110 = vadd.f32 %v4108, %v4109
      %v4111 = vsel %vm1408, %v3988, 0.0
      %v4112 = vadd.f32 %v4110, %v4111
      %v4113 = vsel %vm1408, %v3989, 0.0
      %v4114 = vadd.f32 %v4112, %v4113
      %v4115 = vsel %vm1408, %v3990, 0.0
      %v4116 = vadd.f32 %v4114, %v4115
      %v4117 = vsel %vm1408, %v3991, 0.0
      %v4118 = vadd.f32 %v4116, %v4117
      %v4119 = vsel %vm1408, %v3992, 0.0
      %v4120 = vadd.f32 %v4118, %v4119
      %v4121 = vsel %vm1408, %v3993, 0.0
      %v4122 = vadd.f32 %v4120, %v4121
      %4123 = vadd.xlane.f32.xlu0 %v4122
      %v4124 = vpop.xlane.xlu0 %4123
      %v4125 = vadd.f32 %v3895, %v4026
      %v4126 = vadd.f32 %v3896, %v4059
      %v4127 = vadd.f32 %v3897, %v4124
      %4128 = vst.msk [vmem:[%s292] sm:$0xff] %vm3890, %v4125
      %4129 = vst.msk [vmem:[%s292 + $0x8] sm:$0xff] %vm3890, %v4126
      %vm4130 = vcmask 4096
      %4131 = vst.msk [vmem:[%s292 + $0x10] sm:$0x1f] %vm4130, %v4127
      %s4132 = scalar_lea.vmem %s292, 24
      %v4133 = vld [vmem:[%s4132] sm:$0xff]
      %v4134 = vld [vmem:[%s4132 + $0x8] sm:$0xff]
      %v4135 = vld [vmem:[%s4132 + $0x10] sm:$0x1f]
      %v4136 = vadd.f32 %v2784, %v2785
      %v4137 = vadd.f32 %v4136, %v2786
      %v4138 = vadd.f32 %v4137, %v2787
      %v4139 = vadd.f32 %v4138, %v2788
      %v4140 = vadd.f32 %v4139, %v2789
      %v4141 = vadd.f32 %v4140, %v2790
      %v4142 = vadd.f32 %v4141, %v2791
      %v4143 = vadd.f32 %v4142, %v2792
      %v4144 = vadd.f32 %v4143, %v2793
      %v4145 = vadd.f32 %v4144, %v2794
      %v4146 = vadd.f32 %v4145, %v2795
      %v4147 = vadd.f32 %v4146, %v2796
      %v4148 = vadd.f32 %v4147, %v2797
      %v4149 = vadd.f32 %v4148, %v2798
      %v4150 = vadd.f32 %v4149, %v2799
      %v4151 = vadd.f32 %v4150, %v2800
      %v4152 = vadd.f32 %v4151, %v2801
      %v4153 = vadd.f32 %v4152, %v2802
      %v4154 = vadd.f32 %v4153, %v2803
      %v4155 = vadd.f32 %v4154, %v2804
      %v4156 = vadd.f32 %v4155, %v2805
      %v4157 = vadd.f32 %v4156, %v2806
      %v4158 = vadd.f32 %v4157, %v2807
      %v4159 = vadd.f32 %v4158, %v2808
      %v4160 = vadd.f32 %v4159, %v2809
      %v4161 = vadd.f32 %v4160, %v2810
      %v4162 = vadd.f32 %v4161, %v2811
      %v4163 = vadd.f32 %v4162, %v2812
      %v4164 = vadd.f32 %v4163, %v2813
      %v4165 = vadd.f32 %v4164, %v2814
      %v4166 = vadd.f32 %v4165, %v2815
      %4167 = vadd.xlane.f32.xlu0 %v4166
      %v4168 = vpop.xlane.xlu0 %4167
      %v4169 = vadd.f32 %v2816, %v2817
      %v4170 = vadd.f32 %v4169, %v2818
      %v4171 = vadd.f32 %v4170, %v2819
      %v4172 = vadd.f32 %v4171, %v2820
      %v4173 = vadd.f32 %v4172, %v2821
      %v4174 = vadd.f32 %v4173, %v2822
      %v4175 = vadd.f32 %v4174, %v2823
      %v4176 = vadd.f32 %v4175, %v2824
      %v4177 = vadd.f32 %v4176, %v2825
      %v4178 = vadd.f32 %v4177, %v2826
      %v4179 = vadd.f32 %v4178, %v2827
      %v4180 = vadd.f32 %v4179, %v2828
      %v4181 = vadd.f32 %v4180, %v2829
      %v4182 = vadd.f32 %v4181, %v2830
      %v4183 = vadd.f32 %v4182, %v2831
      %v4184 = vadd.f32 %v4183, %v2832
      %v4185 = vadd.f32 %v4184, %v2833
      %v4186 = vadd.f32 %v4185, %v2834
      %v4187 = vadd.f32 %v4186, %v2835
      %v4188 = vadd.f32 %v4187, %v2836
      %v4189 = vadd.f32 %v4188, %v2837
      %v4190 = vadd.f32 %v4189, %v2838
      %v4191 = vadd.f32 %v4190, %v2839
      %v4192 = vadd.f32 %v4191, %v2840
      %v4193 = vadd.f32 %v4192, %v2841
      %v4194 = vadd.f32 %v4193, %v2842
      %v4195 = vadd.f32 %v4194, %v2843
      %v4196 = vadd.f32 %v4195, %v2844
      %v4197 = vadd.f32 %v4196, %v2845
      %v4198 = vadd.f32 %v4197, %v2846
      %v4199 = vadd.f32 %v4198, %v2847
      %4200 = vadd.xlane.f32.xlu0 %v4199
      %v4201 = vpop.xlane.xlu0 %4200
      %v4202 = vsel %vm1408, %v2848, 0.0
      %v4203 = vsel %vm1408, %v2849, 0.0
      %v4204 = vadd.f32 %v4202, %v4203
      %v4205 = vsel %vm1408, %v2850, 0.0
      %v4206 = vadd.f32 %v4204, %v4205
      %v4207 = vsel %vm1408, %v2851, 0.0
      %v4208 = vadd.f32 %v4206, %v4207
      %v4209 = vsel %vm1408, %v2852, 0.0
      %v4210 = vadd.f32 %v4208, %v4209
      %v4211 = vsel %vm1408, %v2853, 0.0
      %v4212 = vadd.f32 %v4210, %v4211
      %v4213 = vsel %vm1408, %v2854, 0.0
      %v4214 = vadd.f32 %v4212, %v4213
      %v4215 = vsel %vm1408, %v2855, 0.0
      %v4216 = vadd.f32 %v4214, %v4215
      %v4217 = vsel %vm1408, %v2856, 0.0
      %v4218 = vadd.f32 %v4216, %v4217
      %v4219 = vsel %vm1408, %v2857, 0.0
      %v4220 = vadd.f32 %v4218, %v4219
      %v4221 = vsel %vm1408, %v2858, 0.0
      %v4222 = vadd.f32 %v4220, %v4221
      %v4223 = vsel %vm1408, %v2859, 0.0
      %v4224 = vadd.f32 %v4222, %v4223
      %v4225 = vsel %vm1408, %v2860, 0.0
      %v4226 = vadd.f32 %v4224, %v4225
      %v4227 = vsel %vm1408, %v2861, 0.0
      %v4228 = vadd.f32 %v4226, %v4227
      %v4229 = vsel %vm1408, %v2862, 0.0
      %v4230 = vadd.f32 %v4228, %v4229
      %v4231 = vsel %vm1408, %v2863, 0.0
      %v4232 = vadd.f32 %v4230, %v4231
      %v4233 = vsel %vm1408, %v2864, 0.0
      %v4234 = vadd.f32 %v4232, %v4233
      %v4235 = vsel %vm1408, %v2865, 0.0
      %v4236 = vadd.f32 %v4234, %v4235
      %v4237 = vsel %vm1408, %v2866, 0.0
      %v4238 = vadd.f32 %v4236, %v4237
      %v4239 = vsel %vm1408, %v2867, 0.0
      %v4240 = vadd.f32 %v4238, %v4239
      %v4241 = vsel %vm1408, %v2868, 0.0
      %v4242 = vadd.f32 %v4240, %v4241
      %v4243 = vsel %vm1408, %v2869, 0.0
      %v4244 = vadd.f32 %v4242, %v4243
      %v4245 = vsel %vm1408, %v2870, 0.0
      %v4246 = vadd.f32 %v4244, %v4245
      %v4247 = vsel %vm1408, %v2871, 0.0
      %v4248 = vadd.f32 %v4246, %v4247
      %v4249 = vsel %vm1408, %v2872, 0.0
      %v4250 = vadd.f32 %v4248, %v4249
      %v4251 = vsel %vm1408, %v2873, 0.0
      %v4252 = vadd.f32 %v4250, %v4251
      %v4253 = vsel %vm1408, %v2874, 0.0
      %v4254 = vadd.f32 %v4252, %v4253
      %v4255 = vsel %vm1408, %v2875, 0.0
      %v4256 = vadd.f32 %v4254, %v4255
      %v4257 = vsel %vm1408, %v2876, 0.0
      %v4258 = vadd.f32 %v4256, %v4257
      %v4259 = vsel %vm1408, %v2877, 0.0
      %v4260 = vadd.f32 %v4258, %v4259
      %v4261 = vsel %vm1408, %v2878, 0.0
      %v4262 = vadd.f32 %v4260, %v4261
      %v4263 = vsel %vm1408, %v2879, 0.0
      %v4264 = vadd.f32 %v4262, %v4263
      %4265 = vadd.xlane.f32.xlu0 %v4264
      %v4266 = vpop.xlane.xlu0 %4265
      %v4267 = vadd.f32 %v4133, %v4168
      %v4268 = vadd.f32 %v4134, %v4201
      %v4269 = vadd.f32 %v4135, %v4266
      %4270 = vst.msk [vmem:[%s4132] sm:$0xff] %vm3890, %v4267
      %4271 = vst.msk [vmem:[%s4132 + $0x8] sm:$0xff] %vm3890, %v4268
      %4272 = vst.msk [vmem:[%s4132 + $0x10] sm:$0x1f] %vm4130, %v4269
      %s4273 = scalar_lea.vmem %s292, 48
      %v4274 = vld [vmem:[%s4273] sm:$0xff]
      %v4275 = vld [vmem:[%s4273 + $0x8] sm:$0xff]
      %v4276 = vld [vmem:[%s4273 + $0x10] sm:$0x1f]
      %v4277 = vadd.f32 %v1311, %v1312
      %v4278 = vadd.f32 %v4277, %v1313
      %v4279 = vadd.f32 %v4278, %v1314
      %v4280 = vadd.f32 %v4279, %v1315
      %v4281 = vadd.f32 %v4280, %v1316
      %v4282 = vadd.f32 %v4281, %v1317
      %v4283 = vadd.f32 %v4282, %v1318
      %v4284 = vadd.f32 %v4283, %v1319
      %v4285 = vadd.f32 %v4284, %v1320
      %v4286 = vadd.f32 %v4285, %v1321
      %v4287 = vadd.f32 %v4286, %v1322
      %v4288 = vadd.f32 %v4287, %v1323
      %v4289 = vadd.f32 %v4288, %v1324
      %v4290 = vadd.f32 %v4289, %v1325
      %v4291 = vadd.f32 %v4290, %v1326
      %v4292 = vadd.f32 %v4291, %v1327
      %v4293 = vadd.f32 %v4292, %v1328
      %v4294 = vadd.f32 %v4293, %v1329
      %v4295 = vadd.f32 %v4294, %v1330
      %v4296 = vadd.f32 %v4295, %v1331
      %v4297 = vadd.f32 %v4296, %v1332
      %v4298 = vadd.f32 %v4297, %v1333
      %v4299 = vadd.f32 %v4298, %v1334
      %v4300 = vadd.f32 %v4299, %v1335
      %v4301 = vadd.f32 %v4300, %v1336
      %v4302 = vadd.f32 %v4301, %v1337
      %v4303 = vadd.f32 %v4302, %v1338
      %v4304 = vadd.f32 %v4303, %v1339
      %v4305 = vadd.f32 %v4304, %v1340
      %v4306 = vadd.f32 %v4305, %v1341
      %v4307 = vadd.f32 %v4306, %v1342
      %4308 = vadd.xlane.f32.xlu0 %v4307
      %v4309 = vpop.xlane.xlu0 %4308
      %v4310 = vadd.f32 %v1343, %v1344
      %v4311 = vadd.f32 %v4310, %v1345
      %v4312 = vadd.f32 %v4311, %v1346
      %v4313 = vadd.f32 %v4312, %v1347
      %v4314 = vadd.f32 %v4313, %v1348
      %v4315 = vadd.f32 %v4314, %v1349
      %v4316 = vadd.f32 %v4315, %v1350
      %v4317 = vadd.f32 %v4316, %v1351
      %v4318 = vadd.f32 %v4317, %v1352
      %v4319 = vadd.f32 %v4318, %v1353
      %v4320 = vadd.f32 %v4319, %v1354
      %v4321 = vadd.f32 %v4320, %v1355
      %v4322 = vadd.f32 %v4321, %v1356
      %v4323 = vadd.f32 %v4322, %v1357
      %v4324 = vadd.f32 %v4323, %v1358
      %v4325 = vadd.f32 %v4324, %v1359
      %v4326 = vadd.f32 %v4325, %v1360
      %v4327 = vadd.f32 %v4326, %v1361
      %v4328 = vadd.f32 %v4327, %v1362
      %v4329 = vadd.f32 %v4328, %v1363
      %v4330 = vadd.f32 %v4329, %v1364
      %v4331 = vadd.f32 %v4330, %v1365
      %v4332 = vadd.f32 %v4331, %v1366
      %v4333 = vadd.f32 %v4332, %v1367
      %v4334 = vadd.f32 %v4333, %v1368
      %v4335 = vadd.f32 %v4334, %v1369
      %v4336 = vadd.f32 %v4335, %v1370
      %v4337 = vadd.f32 %v4336, %v1371
      %v4338 = vadd.f32 %v4337, %v1372
      %v4339 = vadd.f32 %v4338, %v1373
      %v4340 = vadd.f32 %v4339, %v1374
      %4341 = vadd.xlane.f32.xlu0 %v4340
      %v4342 = vpop.xlane.xlu0 %4341
      %v4343 = vsel %vm1408, %v1375, 0.0
      %v4344 = vsel %vm1408, %v1376, 0.0
      %v4345 = vadd.f32 %v4343, %v4344
      %v4346 = vsel %vm1408, %v1377, 0.0
      %v4347 = vadd.f32 %v4345, %v4346
      %v4348 = vsel %vm1408, %v1378, 0.0
      %v4349 = vadd.f32 %v4347, %v4348
      %v4350 = vsel %vm1408, %v1379, 0.0
      %v4351 = vadd.f32 %v4349, %v4350
      %v4352 = vsel %vm1408, %v1380, 0.0
      %v4353 = vadd.f32 %v4351, %v4352
      %v4354 = vsel %vm1408, %v1381, 0.0
      %v4355 = vadd.f32 %v4353, %v4354
      %v4356 = vsel %vm1408, %v1382, 0.0
      %v4357 = vadd.f32 %v4355, %v4356
      %v4358 = vsel %vm1408, %v1383, 0.0
      %v4359 = vadd.f32 %v4357, %v4358
      %v4360 = vsel %vm1408, %v1384, 0.0
      %v4361 = vadd.f32 %v4359, %v4360
      %v4362 = vsel %vm1408, %v1385, 0.0
      %v4363 = vadd.f32 %v4361, %v4362
      %v4364 = vsel %vm1408, %v1386, 0.0
      %v4365 = vadd.f32 %v4363, %v4364
      %v4366 = vsel %vm1408, %v1387, 0.0
      %v4367 = vadd.f32 %v4365, %v4366
      %v4368 = vsel %vm1408, %v1388, 0.0
      %v4369 = vadd.f32 %v4367, %v4368
      %v4370 = vsel %vm1408, %v1389, 0.0
      %v4371 = vadd.f32 %v4369, %v4370
      %v4372 = vsel %vm1408, %v1390, 0.0
      %v4373 = vadd.f32 %v4371, %v4372
      %v4374 = vsel %vm1408, %v1391, 0.0
      %v4375 = vadd.f32 %v4373, %v4374
      %v4376 = vsel %vm1408, %v1392, 0.0
      %v4377 = vadd.f32 %v4375, %v4376
      %v4378 = vsel %vm1408, %v1393, 0.0
      %v4379 = vadd.f32 %v4377, %v4378
      %v4380 = vsel %vm1408, %v1394, 0.0
      %v4381 = vadd.f32 %v4379, %v4380
      %v4382 = vsel %vm1408, %v1395, 0.0
      %v4383 = vadd.f32 %v4381, %v4382
      %v4384 = vsel %vm1408, %v1396, 0.0
      %v4385 = vadd.f32 %v4383, %v4384
      %v4386 = vsel %vm1408, %v1397, 0.0
      %v4387 = vadd.f32 %v4385, %v4386
      %v4388 = vsel %vm1408, %v1398, 0.0
      %v4389 = vadd.f32 %v4387, %v4388
      %v4390 = vsel %vm1408, %v1399, 0.0
      %v4391 = vadd.f32 %v4389, %v4390
      %v4392 = vsel %vm1408, %v1400, 0.0
      %v4393 = vadd.f32 %v4391, %v4392
      %v4394 = vsel %vm1408, %v1401, 0.0
      %v4395 = vadd.f32 %v4393, %v4394
      %v4396 = vsel %vm1408, %v1402, 0.0
      %v4397 = vadd.f32 %v4395, %v4396
      %v4398 = vsel %vm1408, %v1403, 0.0
      %v4399 = vadd.f32 %v4397, %v4398
      %v4400 = vsel %vm1408, %v1404, 0.0
      %v4401 = vadd.f32 %v4399, %v4400
      %v4402 = vsel %vm1408, %v1405, 0.0
      %v4403 = vadd.f32 %v4401, %v4402
      %v4404 = vsel %vm1408, %v1406, 0.0
      %v4405 = vadd.f32 %v4403, %v4404
      %4406 = vadd.xlane.f32.xlu0 %v4405
      %v4407 = vpop.xlane.xlu0 %4406
      %v4408 = vadd.f32 %v4274, %v4309
      %v4409 = vadd.f32 %v4275, %v4342
      %v4410 = vadd.f32 %v4276, %v4407
      %4411 = vst.msk [vmem:[%s4273] sm:$0xff] %vm3890, %v4408
      %4412 = vst.msk [vmem:[%s4273 + $0x8] sm:$0xff] %vm3890, %v4409
      %4413 = vst.msk [vmem:[%s4273 + $0x10] sm:$0x1f] %vm4130, %v4410
      %s4414 = sadd.s32 %s21, %s22
      %p4415 = scmp.lt.s32.totalorder %s4414, 1
      %s4416 = scalar_select %p4415, %s4414, 1
      %s4417 = smul.addr %s4416, 9
      %s4418 = smul.addr %s4417, 8
      %s4419 = scalar_lea.vmem %s3, %s4418
      %s4420 = sadd.s32 %s21, %s22
      %p4421 = scmp.lt.s32.totalorder %s4420, 1
      %s4422 = scalar_select %p4421, %s4420, 1
      %s4423 = scalar_lea.vmem %s4, %s4422
      // Predicated region
      $region37: #{segmentation_loss.1} parent=31 // pred_check
        %p4424 = pneg %p136
      $region38: #{segmentation_loss.1} parent=31 // pred_check_branch
        %4426 = sbr.rel (%p4424) target = $region40
      $region39: #{segmentation_loss.1} parent=31 // pred_region
        %s4427 = sadd.s32 %s21, %s22
      $region40: #{segmentation_loss.1} parent=31 // pred_fallthru
        _
      // Predicated region
      $region41: #{segmentation_loss.1} parent=31 // pred_check
        %p4428 = pneg %p164
      $region42: #{segmentation_loss.1} parent=31 // pred_check_branch
        %4430 = sbr.rel (%p4428) target = $region44
      $region43: #{segmentation_loss.1} parent=31 // pred_region
        %s4431 = sadd.s32 %s21, %s22
      $region44: #{segmentation_loss.1} parent=31 // pred_fallthru
        _
    $region32: #{segmentation_loss.1} parent=5 // pred_fallthru
      _
    %p4432 = scmp.le.s32.totalorder 2, %s11
    // Predicated region
    $region45: #{segmentation_loss.1} parent=5 // pred_check
      %p4433 = pneg %p4432
    $region46: #{segmentation_loss.1} parent=5 // pred_check_branch
      %4435 = sbr.rel (%p4433) target = $region48
    $region47: #{segmentation_loss.1} parent=5 // pred_region
      %s4436 = ssub.s32 %s11, 2
      // Predicated region
      $region49: #{segmentation_loss.1} parent=47 // pred_check
        %p4437 = pneg %p142
      $region50: #{segmentation_loss.1} parent=47 // pred_check_branch
        %4439 = sbr.rel (%p4437) target = $region52
      $region51: #{segmentation_loss.1} parent=47 // pred_region
        %s4440 = sadd.s32 %s24, %s25
        %p4441 = scmp.lt.s32.totalorder %s4440, 1
        %s4442 = scalar_select %p4441, %s4440, 1
        %s4443 = smul.addr %s4442, 9
        %s4444 = smul.addr %s4443, 8
        %s4445 = scalar_lea.vmem %s3, %s4444
      $region52: #{segmentation_loss.1} parent=47 // pred_fallthru
        _
      // Predicated region
      $region53: #{segmentation_loss.1} parent=47 // pred_check
        %p4446 = pneg %p170
      $region54: #{segmentation_loss.1} parent=47 // pred_check_branch
        %4448 = sbr.rel (%p4446) target = $region56
      $region55: #{segmentation_loss.1} parent=47 // pred_region
        %s4449 = sadd.s32 %s24, %s25
        %p4450 = scmp.lt.s32.totalorder %s4449, 1
        %s4451 = scalar_select %p4450, %s4449, 1
        %s4452 = scalar_lea.vmem %s4, %s4451
      $region56: #{segmentation_loss.1} parent=47 // pred_fallthru
        _
    $region48: #{segmentation_loss.1} parent=5 // pred_fallthru
      _
  $region6: #{segmentation_loss.1} parent=0 // loop_footer
    %s15 = sadd.s32 1, %s11
  $region7: #{segmentation_loss.1} parent=0 // loop_footer_branch
    %10 = sbr.rel target = $region3
  $region8: #{segmentation_loss.1} parent=0 // loop_exit
    _

</llo_original>
